<compile_context>
chip_gen: v5e
topology: v5e:2x2
jax: 0.10.0
libtpu: 0.0.40
codegen_flags: <defaults>
</compile_context>

<pallas_src>
import functools

import jax
import jax.numpy as jnp
import numpy as np
from jax import lax
from jax.experimental import pallas as pl
from jax.experimental.pallas import tpu as pltpu

K = 7                 # conv kernel size
PAD = (K - 1) // 2    # = 3


def _round_up(x, m):
    return ((x + m - 1) // m) * m


def _conv7x7_acc(q, weight_at, acc, h, hq, wq):
    """Accumulate a 7x7 'same' (zero-padded) conv of the map stored in q.

    q:   (Hq, Wq) value whose true H x W map sits at [0:H, 0:W]; rows >= H and
         cols >= W are zero.  Since Hq >= H + PAD and Wq >= W + PAD, a circular
         shift of q reproduces the zero-padded window for all output rows
         [0, H) / cols [0, W).
    acc: (H, Wq) f32 accumulator; only cols [0, W) are meaningful.
    """
    for ky in range(K):
        sr = (PAD - ky) % hq
        rblk = q if sr == 0 else pltpu.roll(q, shift=sr, axis=0)
        rblk = rblk[0:h, :]                               # offset-0 slice, (H, Wq)
        for kx in range(K):
            sc = (PAD - kx) % wq
            shifted = rblk if sc == 0 else pltpu.roll(rblk, shift=sc, axis=1)
            acc = acc + shifted * weight_at(ky, kx)
    return acc


def _spatial_gate_kernel(x_ref, w1_ref, b_ref, w2_ref, out_ref, comp_ref, *,
                         c_total):
    # x_ref:    (1, Tc, H, W) VMEM  one channel tile of one batch element
    # w1_ref:   (2*K*K,)      SMEM  conv1 weights, flattened [ci, ky, kx]
    # b_ref:    (2,)          SMEM  [bias1, bias2]
    # w2_ref:   (K*K,)        SMEM  conv2 weights, flattened [ky, kx]
    # out_ref:  (1, 1, H, W)  VMEM
    # comp_ref: (2, Hq, Wq)   VMEM scratch: running [max, sum] pooled maps at
    #           the [0:H, 0:W] corner; the zero tail emulates conv padding.
    tc = x_ref.shape[1]
    h, w = out_ref.shape[2], out_ref.shape[3]
    hq, wq = comp_ref.shape[1], comp_ref.shape[2]

    ct = pl.program_id(1)
    n_ct = pl.num_programs(1)

    # ---- ChannelPool over this channel tile (unpadded data) ----
    x0 = x_ref[0, 0]

    def pool_body(c, carry):
        cmax, csum = carry
        xc = x_ref[0, c]
        return jnp.maximum(cmax, xc), csum + xc

    tmax, tsum = lax.fori_loop(1, tc, pool_body, (x0, x0))

    @pl.when(ct == 0)
    def _():
        # Zero the whole scratch once per batch element; the circular-shift
        # conv below relies on rows [H:Hq) and cols [W:Wq) staying zero.
        comp_ref[...] = jnp.zeros_like(comp_ref)
        comp_ref[0, pl.ds(0, h), pl.ds(0, w)] = tmax
        comp_ref[1, pl.ds(0, h), pl.ds(0, w)] = tsum

    @pl.when(ct > 0)
    def _():
        comp_ref[0, pl.ds(0, h), pl.ds(0, w)] = jnp.maximum(
            comp_ref[0, pl.ds(0, h), pl.ds(0, w)], tmax)
        comp_ref[1, pl.ds(0, h), pl.ds(0, w)] = (
            comp_ref[1, pl.ds(0, h), pl.ds(0, w)] + tsum)

    # ---- Finalize on the last channel tile: conv1 -> ReLU -> conv2 -> sigmoid
    @pl.when(ct == n_ct - 1)
    def _():
        q_max = comp_ref[0]                                    # (Hq, Wq)
        q_mean = comp_ref[1] * jnp.float32(1.0 / c_total)      # sum -> mean

        acc = jnp.full((h, wq), b_ref[0], dtype=jnp.float32)
        acc = _conv7x7_acc(q_max, lambda ky, kx: w1_ref[ky * K + kx],
                           acc, h, hq, wq)
        acc = _conv7x7_acc(q_mean, lambda ky, kx: w1_ref[K * K + ky * K + kx],
                           acc, h, hq, wq)
        relu = jnp.maximum(acc, 0.0)                           # valid cols [0, W)

        # Re-use comp_ref[0] (tail rows/cols still zero) as the zero-extended
        # input of the second conv: single aligned offset-0 store.
        comp_ref[0, pl.ds(0, h), pl.ds(0, w)] = relu[:, 0:w]
        q_relu = comp_ref[0]

        acc2 = jnp.full((h, wq), b_ref[1], dtype=jnp.float32)
        acc2 = _conv7x7_acc(q_relu, lambda ky, kx: w2_ref[ky * K + kx],
                            acc2, h, hq, wq)
        out_ref[0, 0] = jax.nn.sigmoid(acc2[:, 0:w])   # masked store when W < 128


def spatial_gate(x, w1, b1, w2, b2, *, channel_tile_bytes=2 * 1024 * 1024):
    """x: (N, C, H, W) -> scale: (N, 1, H, W) float32 (SpatialGate.forward)."""
    N, C, H, W = x.shape

    # Channel tiling: largest divisor of C whose (1, Tc, H, W) f32 block stays
    # within the per-buffer budget (blocks are double-buffered by Pallas).
    per_ch = H * W * 4
    max_tc = max(1, channel_tile_bytes // per_ch)
    tc = 1
    for d in range(1, C + 1):
        if C % d == 0 and d <= max_tc:
            tc = d
    n_ct = C // tc

    # Scratch dims: enough zero tail for the 3-wide conv halo; lane-dense width.
    Hq = _round_up(H + PAD, 8)
    Wq = _round_up(W + PAD, 128)

    w1f = jnp.asarray(w1, jnp.float32).reshape(2 * K * K)
    w2f = jnp.asarray(w2, jnp.float32).reshape(K * K)
    b = jnp.stack([jnp.asarray(b1, jnp.float32).reshape(()),
                   jnp.asarray(b2, jnp.float32).reshape(())])

    kernel = functools.partial(_spatial_gate_kernel, c_total=C)

    return pl.pallas_call(
        kernel,
        out_shape=jax.ShapeDtypeStruct((N, 1, H, W), jnp.float32),
        grid=(N, n_ct),
        in_specs=[
            pl.BlockSpec((1, tc, H, W), lambda n, c: (n, c, 0, 0)),
            pl.BlockSpec(memory_space=pltpu.MemorySpace.SMEM),   # w1 (flat)
            pl.BlockSpec(memory_space=pltpu.MemorySpace.SMEM),   # biases
            pl.BlockSpec(memory_space=pltpu.MemorySpace.SMEM),   # w2 (flat)
        ],
        out_specs=pl.BlockSpec((1, 1, H, W), lambda n, c: (n, 0, 0, 0)),
        scratch_shapes=[pltpu.VMEM((2, Hq, Wq), jnp.float32)],
        compiler_params=pltpu.CompilerParams(
            dimension_semantics=("parallel", "arbitrary")),
    )(x.astype(jnp.float32), w1f, b, w2f)


def spatial_gate_reference(x, w1, b1, w2, b2):
    """Pure-JAX reference mirroring the PyTorch module."""
    cmax = jnp.max(x, axis=1, keepdims=True)
    cmean = jnp.mean(x, axis=1, keepdims=True)
    xc = jnp.concatenate([cmax, cmean], axis=1)                   # (N, 2, H, W)
    y = lax.conv_general_dilated(
        xc, w1.reshape(1, 2, K, K), (1, 1), [(PAD, PAD), (PAD, PAD)],
        dimension_numbers=("NCHW", "OIHW", "NCHW")) + b1
    y = jnp.maximum(y, 0.0)
    y = lax.conv_general_dilated(
        y, w2.reshape(1, 1, K, K), (1, 1), [(PAD, PAD), (PAD, PAD)],
        dimension_numbers=("NCHW", "OIHW", "NCHW")) + b2
    return jax.nn.sigmoid(y)


if __name__ == "__main__":
    N, C, H, W = 2, 4, 16, 16
    key = jax.random.PRNGKey(0)
    kx, kw1, kw2 = jax.random.split(key, 3)

    x = jax.random.normal(kx, (N, C, H, W), dtype=jnp.float32)
    # Deterministic synthetic parameters (Conv2d shapes (out, in, 7, 7), squeezed).
    w1 = 0.1 * jax.random.normal(kw1, (2, K, K), dtype=jnp.float32)
    b1 = jnp.float32(0.01)
    w2 = 0.1 * jax.random.normal(kw2, (K, K), dtype=jnp.float32)
    b2 = jnp.float32(-0.02)

    out = spatial_gate(x, w1, b1, w2, b2)
    out = jax.block_until_ready(out)

    ref = spatial_gate_reference(x, w1, b1, w2, b2)
    np.testing.assert_allclose(np.asarray(out), np.asarray(ref),
                               rtol=1e-4, atol=1e-5)

    print("KERNEL_OK")
</pallas_src>

<mosaic_0001>
module attributes {stable_mosaic.version = 11 : i64} {
  func.func @_spatial_gate_kernel(%arg0: i32, %arg1: i32, %arg2: memref<1x4x16x16xf32, #tpu.memory_space<vmem>>, %arg3: memref<98xf32, #tpu.memory_space<smem>>, %arg4: memref<2xf32, #tpu.memory_space<smem>>, %arg5: memref<49xf32, #tpu.memory_space<smem>>, %arg6: memref<1x1x16x16xf32, #tpu.memory_space<vmem>>, %arg7: memref<2x24x128xf32, #tpu.memory_space<vmem>>) attributes {dimension_semantics = [#tpu.dimension_semantics<parallel>, #tpu.dimension_semantics<arbitrary>], iteration_bounds = array<i64: 2, 1>, scalar_prefetch = 0 : i64, scratch_operands = 1 : i64, tpu.core_type = #tpu.core_type<tc>, window_params = [{transform_indices = @transform_0, window_bounds = array<i64: 1, 4, 16, 16>}, {transform_indices = @transform_1, window_bounds = array<i64: 98>}, {transform_indices = @transform_2, window_bounds = array<i64: 2>}, {transform_indices = @transform_3, window_bounds = array<i64: 49>}, {transform_indices = @transform_4, window_bounds = array<i64: 1, 1, 16, 16>}]} {
    %c0 = arith.constant 0 : index
    %c0_0 = arith.constant 0 : index
    %c0_1 = arith.constant 0 : index
    %c0_2 = arith.constant 0 : index
    %0 = vector.load %arg2[%c0, %c0_0, %c0_1, %c0_2] : memref<1x4x16x16xf32, #tpu.memory_space<vmem>>, vector<1x1x16x16xf32>
    %1 = vector.shape_cast %0 : vector<1x1x16x16xf32> to vector<16x16xf32>
    %c1_i32 = arith.constant 1 : i32
    %c3_i32 = arith.constant 3 : i32
    %2 = arith.addi %c1_i32, %c3_i32 : i32
    %c1_i32_3 = arith.constant 1 : i32
    %3:2 = scf.for %arg8 = %c1_i32 to %2 step %c1_i32_3 iter_args(%arg9 = %1, %arg10 = %1) -> (vector<16x16xf32>, vector<16x16xf32>)  : i32 {
      %c0_10 = arith.constant 0 : index
      %13 = arith.index_cast %arg8 : i32 to index
      %c0_11 = arith.constant 0 : index
      %c0_12 = arith.constant 0 : index
      %14 = vector.load %arg2[%c0_10, %13, %c0_11, %c0_12] : memref<1x4x16x16xf32, #tpu.memory_space<vmem>>, vector<1x1x16x16xf32>
      %15 = vector.shape_cast %14 : vector<1x1x16x16xf32> to vector<16x16xf32>
      %16 = arith.maximumf %arg9, %15 : vector<16x16xf32>
      %17 = arith.addf %arg10, %15 : vector<16x16xf32>
      scf.yield %16, %17 : vector<16x16xf32>, vector<16x16xf32>
    }
    %c3_i32_4 = arith.constant 3 : i32
    %c0_i32 = arith.constant 0 : i32
    %4 = arith.cmpi eq, %arg1, %c0_i32 : i32
    %5 = arith.extui %4 : i1 to i32
    %c0_i32_5 = arith.constant 0 : i32
    %6 = arith.cmpi ne, %5, %c0_i32_5 : i32
    scf.if %6 {
      %cst = arith.constant 0.000000e+00 : f32
      %13 = vector.broadcast %cst : f32 to vector<2x24x128xf32>
      %c0_10 = arith.constant 0 : index
      %c0_11 = arith.constant 0 : index
      %c0_12 = arith.constant 0 : index
      %14 = vector.load %arg7[%c0_10, %c0_11, %c0_12] : memref<2x24x128xf32, #tpu.memory_space<vmem>>, vector<2x24x128xf32>
      tpu.vector_store %arg7[%c0_10, %c0_11, %c0_12], %13 {strides = array<i32>} : memref<2x24x128xf32, #tpu.memory_space<vmem>>, vector<2x24x128xf32>,
      %c0_13 = arith.constant 0 : index
      %c0_14 = arith.constant 0 : index
      %c0_15 = arith.constant 0 : index
      %15 = vector.load %arg7[%c0_13, %c0_14, %c0_15] : memref<2x24x128xf32, #tpu.memory_space<vmem>>, vector<1x16x16xf32>
      %16 = vector.shape_cast %15 : vector<1x16x16xf32> to vector<16x16xf32>
      %17 = vector.shape_cast %3#0 : vector<16x16xf32> to vector<1x16x16xf32>
      tpu.vector_store %arg7[%c0_13, %c0_14, %c0_15], %17 {strides = array<i32>} : memref<2x24x128xf32, #tpu.memory_space<vmem>>, vector<1x16x16xf32>,
      %c1 = arith.constant 1 : index
      %c0_16 = arith.constant 0 : index
      %c0_17 = arith.constant 0 : index
      %18 = vector.load %arg7[%c1, %c0_16, %c0_17] : memref<2x24x128xf32, #tpu.memory_space<vmem>>, vector<1x16x16xf32>
      %19 = vector.shape_cast %18 : vector<1x16x16xf32> to vector<16x16xf32>
      %20 = vector.shape_cast %3#1 : vector<16x16xf32> to vector<1x16x16xf32>
      tpu.vector_store %arg7[%c1, %c0_16, %c0_17], %20 {strides = array<i32>} : memref<2x24x128xf32, #tpu.memory_space<vmem>>, vector<1x16x16xf32>,
    } else {
    }
    %c0_i32_6 = arith.constant 0 : i32
    %7 = arith.cmpi sgt, %arg1, %c0_i32_6 : i32
    %8 = arith.extui %7 : i1 to i32
    %c0_i32_7 = arith.constant 0 : i32
    %9 = arith.cmpi ne, %8, %c0_i32_7 : i32
    scf.if %9 {
      %c0_10 = arith.constant 0 : index
      %c0_11 = arith.constant 0 : index
      %c0_12 = arith.constant 0 : index
      %13 = vector.load %arg7[%c0_10, %c0_11, %c0_12] : memref<2x24x128xf32, #tpu.memory_space<vmem>>, vector<1x16x16xf32>
      %14 = vector.shape_cast %13 : vector<1x16x16xf32> to vector<16x16xf32>
      %15 = arith.maximumf %14, %3#0 : vector<16x16xf32>
      %c0_13 = arith.constant 0 : index
      %c0_14 = arith.constant 0 : index
      %c0_15 = arith.constant 0 : index
      %16 = vector.load %arg7[%c0_13, %c0_14, %c0_15] : memref<2x24x128xf32, #tpu.memory_space<vmem>>, vector<1x16x16xf32>
      %17 = vector.shape_cast %16 : vector<1x16x16xf32> to vector<16x16xf32>
      %18 = vector.shape_cast %15 : vector<16x16xf32> to vector<1x16x16xf32>
      tpu.vector_store %arg7[%c0_13, %c0_14, %c0_15], %18 {strides = array<i32>} : memref<2x24x128xf32, #tpu.memory_space<vmem>>, vector<1x16x16xf32>,
      %c1 = arith.constant 1 : index
      %c0_16 = arith.constant 0 : index
      %c0_17 = arith.constant 0 : index
      %19 = vector.load %arg7[%c1, %c0_16, %c0_17] : memref<2x24x128xf32, #tpu.memory_space<vmem>>, vector<1x16x16xf32>
      %20 = vector.shape_cast %19 : vector<1x16x16xf32> to vector<16x16xf32>
      %21 = arith.addf %20, %3#1 : vector<16x16xf32>
      %c1_18 = arith.constant 1 : index
      %c0_19 = arith.constant 0 : index
      %c0_20 = arith.constant 0 : index
      %22 = vector.load %arg7[%c1_18, %c0_19, %c0_20] : memref<2x24x128xf32, #tpu.memory_space<vmem>>, vector<1x16x16xf32>
      %23 = vector.shape_cast %22 : vector<1x16x16xf32> to vector<16x16xf32>
      %24 = vector.shape_cast %21 : vector<16x16xf32> to vector<1x16x16xf32>
      tpu.vector_store %arg7[%c1_18, %c0_19, %c0_20], %24 {strides = array<i32>} : memref<2x24x128xf32, #tpu.memory_space<vmem>>, vector<1x16x16xf32>,
    } else {
    }
    %c0_i32_8 = arith.constant 0 : i32
    %10 = arith.cmpi eq, %arg1, %c0_i32_8 : i32
    %11 = arith.extui %10 : i1 to i32
    %c0_i32_9 = arith.constant 0 : i32
    %12 = arith.cmpi ne, %11, %c0_i32_9 : i32
    scf.if %12 {
      %c0_10 = arith.constant 0 : index
      %c0_11 = arith.constant 0 : index
      %c0_12 = arith.constant 0 : index
      %13 = vector.load %arg7[%c0_10, %c0_11, %c0_12] : memref<2x24x128xf32, #tpu.memory_space<vmem>>, vector<1x24x128xf32>
      %14 = vector.shape_cast %13 : vector<1x24x128xf32> to vector<24x128xf32>
      %c1 = arith.constant 1 : index
      %c0_13 = arith.constant 0 : index
      %c0_14 = arith.constant 0 : index
      %15 = vector.load %arg7[%c1, %c0_13, %c0_14] : memref<2x24x128xf32, #tpu.memory_space<vmem>>, vector<1x24x128xf32>
      %16 = vector.shape_cast %15 : vector<1x24x128xf32> to vector<24x128xf32>
      %cst = arith.constant 2.500000e-01 : f32
      %17 = vector.broadcast %cst : f32 to vector<24x128xf32>
      %18 = arith.mulf %16, %17 : vector<24x128xf32>
      %c0_15 = arith.constant 0 : index
      %19 = memref.load %arg4[%c0_15] : memref<2xf32, #tpu.memory_space<smem>>
      %20 = vector.broadcast %19 : f32 to vector<16x128xf32>
      %c3_i32_16 = arith.constant 3 : i32
      %21 = tpu.dynamic_rotate %14 by %c3_i32_16 dim 0 : vector<24x128xf32>, i32 -> vector<24x128xf32>
      %22 = vector.extract_strided_slice %21 {offsets = [0, 0], sizes = [16, 128], strides = [1, 1]} : vector<24x128xf32> to vector<16x128xf32>
      %c3_i32_17 = arith.constant 3 : i32
      %23 = tpu.dynamic_rotate %22 by %c3_i32_17 dim 1 : vector<16x128xf32>, i32 -> vector<16x128xf32>
      %c0_18 = arith.constant 0 : index
      %24 = memref.load %arg3[%c0_18] : memref<98xf32, #tpu.memory_space<smem>>
      %25 = vector.broadcast %24 : f32 to vector<16x128xf32>
      %26 = arith.mulf %23, %25 : vector<16x128xf32>
      %27 = arith.addf %20, %26 : vector<16x128xf32>
      %c2_i32 = arith.constant 2 : i32
      %28 = tpu.dynamic_rotate %22 by %c2_i32 dim 1 : vector<16x128xf32>, i32 -> vector<16x128xf32>
      %c1_19 = arith.constant 1 : index
      %29 = memref.load %arg3[%c1_19] : memref<98xf32, #tpu.memory_space<smem>>
      %30 = vector.broadcast %29 : f32 to vector<16x128xf32>
      %31 = arith.mulf %28, %30 : vector<16x128xf32>
      %32 = arith.addf %27, %31 : vector<16x128xf32>
      %c1_i32_20 = arith.constant 1 : i32
      %33 = tpu.dynamic_rotate %22 by %c1_i32_20 dim 1 : vector<16x128xf32>, i32 -> vector<16x128xf32>
      %c2 = arith.constant 2 : index
      %34 = memref.load %arg3[%c2] : memref<98xf32, #tpu.memory_space<smem>>
      %35 = vector.broadcast %34 : f32 to vector<16x128xf32>
      %36 = arith.mulf %33, %35 : vector<16x128xf32>
      %37 = arith.addf %32, %36 : vector<16x128xf32>
      %c3 = arith.constant 3 : index
      %38 = memref.load %arg3[%c3] : memref<98xf32, #tpu.memory_space<smem>>
      %39 = vector.broadcast %38 : f32 to vector<16x128xf32>
      %40 = arith.mulf %22, %39 : vector<16x128xf32>
      %41 = arith.addf %37, %40 : vector<16x128xf32>
      %c127_i32 = arith.constant 127 : i32
      %42 = tpu.dynamic_rotate %22 by %c127_i32 dim 1 : vector<16x128xf32>, i32 -> vector<16x128xf32>
      %c4 = arith.constant 4 : index
      %43 = memref.load %arg3[%c4] : memref<98xf32, #tpu.memory_space<smem>>
      %44 = vector.broadcast %43 : f32 to vector<16x128xf32>
      %45 = arith.mulf %42, %44 : vector<16x128xf32>
      %46 = arith.addf %41, %45 : vector<16x128xf32>
      %c126_i32 = arith.constant 126 : i32
      %47 = tpu.dynamic_rotate %22 by %c126_i32 dim 1 : vector<16x128xf32>, i32 -> vector<16x128xf32>
      %c5 = arith.constant 5 : index
      %48 = memref.load %arg3[%c5] : memref<98xf32, #tpu.memory_space<smem>>
      %49 = vector.broadcast %48 : f32 to vector<16x128xf32>
      %50 = arith.mulf %47, %49 : vector<16x128xf32>
      %51 = arith.addf %46, %50 : vector<16x128xf32>
      %c125_i32 = arith.constant 125 : i32
      %52 = tpu.dynamic_rotate %22 by %c125_i32 dim 1 : vector<16x128xf32>, i32 -> vector<16x128xf32>
      %c6 = arith.constant 6 : index
      %53 = memref.load %arg3[%c6] : memref<98xf32, #tpu.memory_space<smem>>
      %54 = vector.broadcast %53 : f32 to vector<16x128xf32>
      %55 = arith.mulf %52, %54 : vector<16x128xf32>
      %56 = arith.addf %51, %55 : vector<16x128xf32>
      %c2_i32_21 = arith.constant 2 : i32
      %57 = tpu.dynamic_rotate %14 by %c2_i32_21 dim 0 : vector<24x128xf32>, i32 -> vector<24x128xf32>
      %58 = vector.extract_strided_slice %57 {offsets = [0, 0], sizes = [16, 128], strides = [1, 1]} : vector<24x128xf32> to vector<16x128xf32>
      %c3_i32_22 = arith.constant 3 : i32
      %59 = tpu.dynamic_rotate %58 by %c3_i32_22 dim 1 : vector<16x128xf32>, i32 -> vector<16x128xf32>
      %c7 = arith.constant 7 : index
      %60 = memref.load %arg3[%c7] : memref<98xf32, #tpu.memory_space<smem>>
      %61 = vector.broadcast %60 : f32 to vector<16x128xf32>
      %62 = arith.mulf %59, %61 : vector<16x128xf32>
      %63 = arith.addf %56, %62 : vector<16x128xf32>
      %c2_i32_23 = arith.constant 2 : i32
      %64 = tpu.dynamic_rotate %58 by %c2_i32_23 dim 1 : vector<16x128xf32>, i32 -> vector<16x128xf32>
      %c8 = arith.constant 8 : index
      %65 = memref.load %arg3[%c8] : memref<98xf32, #tpu.memory_space<smem>>
      %66 = vector.broadcast %65 : f32 to vector<16x128xf32>
      %67 = arith.mulf %64, %66 : vector<16x128xf32>
      %68 = arith.addf %63, %67 : vector<16x128xf32>
      %c1_i32_24 = arith.constant 1 : i32
      %69 = tpu.dynamic_rotate %58 by %c1_i32_24 dim 1 : vector<16x128xf32>, i32 -> vector<16x128xf32>
      %c9 = arith.constant 9 : index
      %70 = memref.load %arg3[%c9] : memref<98xf32, #tpu.memory_space<smem>>
      %71 = vector.broadcast %70 : f32 to vector<16x128xf32>
      %72 = arith.mulf %69, %71 : vector<16x128xf32>
      %73 = arith.addf %68, %72 : vector<16x128xf32>
      %c10 = arith.constant 10 : index
      %74 = memref.load %arg3[%c10] : memref<98xf32, #tpu.memory_space<smem>>
      %75 = vector.broadcast %74 : f32 to vector<16x128xf32>
      %76 = arith.mulf %58, %75 : vector<16x128xf32>
      %77 = arith.addf %73, %76 : vector<16x128xf32>
      %c127_i32_25 = arith.constant 127 : i32
      %78 = tpu.dynamic_rotate %58 by %c127_i32_25 dim 1 : vector<16x128xf32>, i32 -> vector<16x128xf32>
      %c11 = arith.constant 11 : index
      %79 = memref.load %arg3[%c11] : memref<98xf32, #tpu.memory_space<smem>>
      %80 = vector.broadcast %79 : f32 to vector<16x128xf32>
      %81 = arith.mulf %78, %80 : vector<16x128xf32>
      %82 = arith.addf %77, %81 : vector<16x128xf32>
      %c126_i32_26 = arith.constant 126 : i32
      %83 = tpu.dynamic_rotate %58 by %c126_i32_26 dim 1 : vector<16x128xf32>, i32 -> vector<16x128xf32>
      %c12 = arith.constant 12 : index
      %84 = memref.load %arg3[%c12] : memref<98xf32, #tpu.memory_space<smem>>
      %85 = vector.broadcast %84 : f32 to vector<16x128xf32>
      %86 = arith.mulf %83, %85 : vector<16x128xf32>
      %87 = arith.addf %82, %86 : vector<16x128xf32>
      %c125_i32_27 = arith.constant 125 : i32
      %88 = tpu.dynamic_rotate %58 by %c125_i32_27 dim 1 : vector<16x128xf32>, i32 -> vector<16x128xf32>
      %c13 = arith.constant 13 : index
      %89 = memref.load %arg3[%c13] : memref<98xf32, #tpu.memory_space<smem>>
      %90 = vector.broadcast %89 : f32 to vector<16x128xf32>
      %91 = arith.mulf %88, %90 : vector<16x128xf32>
      %92 = arith.addf %87, %91 : vector<16x128xf32>
      %c1_i32_28 = arith.constant 1 : i32
      %93 = tpu.dynamic_rotate %14 by %c1_i32_28 dim 0 : vector<24x128xf32>, i32 -> vector<24x128xf32>
      %94 = vector.extract_strided_slice %93 {offsets = [0, 0], sizes = [16, 128], strides = [1, 1]} : vector<24x128xf32> to vector<16x128xf32>
      %c3_i32_29 = arith.constant 3 : i32
      %95 = tpu.dynamic_rotate %94 by %c3_i32_29 dim 1 : vector<16x128xf32>, i32 -> vector<16x128xf32>
      %c14 = arith.constant 14 : index
      %96 = memref.load %arg3[%c14] : memref<98xf32, #tpu.memory_space<smem>>
      %97 = vector.broadcast %96 : f32 to vector<16x128xf32>
      %98 = arith.mulf %95, %97 : vector<16x128xf32>
      %99 = arith.addf %92, %98 : vector<16x128xf32>
      %c2_i32_30 = arith.constant 2 : i32
      %100 = tpu.dynamic_rotate %94 by %c2_i32_30 dim 1 : vector<16x128xf32>, i32 -> vector<16x128xf32>
      %c15 = arith.constant 15 : index
      %101 = memref.load %arg3[%c15] : memref<98xf32, #tpu.memory_space<smem>>
      %102 = vector.broadcast %101 : f32 to vector<16x128xf32>
      %103 = arith.mulf %100, %102 : vector<16x128xf32>
      %104 = arith.addf %99, %103 : vector<16x128xf32>
      %c1_i32_31 = arith.constant 1 : i32
      %105 = tpu.dynamic_rotate %94 by %c1_i32_31 dim 1 : vector<16x128xf32>, i32 -> vector<16x128xf32>
      %c16 = arith.constant 16 : index
      %106 = memref.load %arg3[%c16] : memref<98xf32, #tpu.memory_space<smem>>
      %107 = vector.broadcast %106 : f32 to vector<16x128xf32>
      %108 = arith.mulf %105, %107 : vector<16x128xf32>
      %109 = arith.addf %104, %108 : vector<16x128xf32>
      %c17 = arith.constant 17 : index
      %110 = memref.load %arg3[%c17] : memref<98xf32, #tpu.memory_space<smem>>
      %111 = vector.broadcast %110 : f32 to vector<16x128xf32>
      %112 = arith.mulf %94, %111 : vector<16x128xf32>
      %113 = arith.addf %109, %112 : vector<16x128xf32>
      %c127_i32_32 = arith.constant 127 : i32
      %114 = tpu.dynamic_rotate %94 by %c127_i32_32 dim 1 : vector<16x128xf32>, i32 -> vector<16x128xf32>
      %c18 = arith.constant 18 : index
      %115 = memref.load %arg3[%c18] : memref<98xf32, #tpu.memory_space<smem>>
      %116 = vector.broadcast %115 : f32 to vector<16x128xf32>
      %117 = arith.mulf %114, %116 : vector<16x128xf32>
      %118 = arith.addf %113, %117 : vector<16x128xf32>
      %c126_i32_33 = arith.constant 126 : i32
      %119 = tpu.dynamic_rotate %94 by %c126_i32_33 dim 1 : vector<16x128xf32>, i32 -> vector<16x128xf32>
      %c19 = arith.constant 19 : index
      %120 = memref.load %arg3[%c19] : memref<98xf32, #tpu.memory_space<smem>>
      %121 = vector.broadcast %120 : f32 to vector<16x128xf32>
      %122 = arith.mulf %119, %121 : vector<16x128xf32>
      %123 = arith.addf %118, %122 : vector<16x128xf32>
      %c125_i32_34 = arith.constant 125 : i32
      %124 = tpu.dynamic_rotate %94 by %c125_i32_34 dim 1 : vector<16x128xf32>, i32 -> vector<16x128xf32>
      %c20 = arith.constant 20 : index
      %125 = memref.load %arg3[%c20] : memref<98xf32, #tpu.memory_space<smem>>
      %126 = vector.broadcast %125 : f32 to vector<16x128xf32>
      %127 = arith.mulf %124, %126 : vector<16x128xf32>
      %128 = arith.addf %123, %127 : vector<16x128xf32>
      %129 = vector.extract_strided_slice %14 {offsets = [0, 0], sizes = [16, 128], strides = [1, 1]} : vector<24x128xf32> to vector<16x128xf32>
      %c3_i32_35 = arith.constant 3 : i32
      %130 = tpu.dynamic_rotate %129 by %c3_i32_35 dim 1 : vector<16x128xf32>, i32 -> vector<16x128xf32>
      %c21 = arith.constant 21 : index
      %131 = memref.load %arg3[%c21] : memref<98xf32, #tpu.memory_space<smem>>
      %132 = vector.broadcast %131 : f32 to vector<16x128xf32>
      %133 = arith.mulf %130, %132 : vector<16x128xf32>
      %134 = arith.addf %128, %133 : vector<16x128xf32>
      %c2_i32_36 = arith.constant 2 : i32
      %135 = tpu.dynamic_rotate %129 by %c2_i32_36 dim 1 : vector<16x128xf32>, i32 -> vector<16x128xf32>
      %c22 = arith.constant 22 : index
      %136 = memref.load %arg3[%c22] : memref<98xf32, #tpu.memory_space<smem>>
      %137 = vector.broadcast %136 : f32 to vector<16x128xf32>
      %138 = arith.mulf %135, %137 : vector<16x128xf32>
      %139 = arith.addf %134, %138 : vector<16x128xf32>
      %c1_i32_37 = arith.constant 1 : i32
      %140 = tpu.dynamic_rotate %129 by %c1_i32_37 dim 1 : vector<16x128xf32>, i32 -> vector<16x128xf32>
      %c23 = arith.constant 23 : index
      %141 = memref.load %arg3[%c23] : memref<98xf32, #tpu.memory_space<smem>>
      %142 = vector.broadcast %141 : f32 to vector<16x128xf32>
      %143 = arith.mulf %140, %142 : vector<16x128xf32>
      %144 = arith.addf %139, %143 : vector<16x128xf32>
      %c24 = arith.constant 24 : index
      %145 = memref.load %arg3[%c24] : memref<98xf32, #tpu.memory_space<smem>>
      %146 = vector.broadcast %145 : f32 to vector<16x128xf32>
      %147 = arith.mulf %129, %146 : vector<16x128xf32>
      %148 = arith.addf %144, %147 : vector<16x128xf32>
      %c127_i32_38 = arith.constant 127 : i32
      %149 = tpu.dynamic_rotate %129 by %c127_i32_38 dim 1 : vector<16x128xf32>, i32 -> vector<16x128xf32>
      %c25 = arith.constant 25 : index
      %150 = memref.load %arg3[%c25] : memref<98xf32, #tpu.memory_space<smem>>
      %151 = vector.broadcast %150 : f32 to vector<16x128xf32>
      %152 = arith.mulf %149, %151 : vector<16x128xf32>
      %153 = arith.addf %148, %152 : vector<16x128xf32>
      %c126_i32_39 = arith.constant 126 : i32
      %154 = tpu.dynamic_rotate %129 by %c126_i32_39 dim 1 : vector<16x128xf32>, i32 -> vector<16x128xf32>
      %c26 = arith.constant 26 : index
      %155 = memref.load %arg3[%c26] : memref<98xf32, #tpu.memory_space<smem>>
      %156 = vector.broadcast %155 : f32 to vector<16x128xf32>
      %157 = arith.mulf %154, %156 : vector<16x128xf32>
      %158 = arith.addf %153, %157 : vector<16x128xf32>
      %c125_i32_40 = arith.constant 125 : i32
      %159 = tpu.dynamic_rotate %129 by %c125_i32_40 dim 1 : vector<16x128xf32>, i32 -> vector<16x128xf32>
      %c27 = arith.constant 27 : index
      %160 = memref.load %arg3[%c27] : memref<98xf32, #tpu.memory_space<smem>>
      %161 = vector.broadcast %160 : f32 to vector<16x128xf32>
      %162 = arith.mulf %159, %161 : vector<16x128xf32>
      %163 = arith.addf %158, %162 : vector<16x128xf32>
      %c23_i32 = arith.constant 23 : i32
      %164 = tpu.dynamic_rotate %14 by %c23_i32 dim 0 : vector<24x128xf32>, i32 -> vector<24x128xf32>
      %165 = vector.extract_strided_slice %164 {offsets = [0, 0], sizes = [16, 128], strides = [1, 1]} : vector<24x128xf32> to vector<16x128xf32>
      %c3_i32_41 = arith.constant 3 : i32
      %166 = tpu.dynamic_rotate %165 by %c3_i32_41 dim 1 : vector<16x128xf32>, i32 -> vector<16x128xf32>
      %c28 = arith.constant 28 : index
      %167 = memref.load %arg3[%c28] : memref<98xf32, #tpu.memory_space<smem>>
      %168 = vector.broadcast %167 : f32 to vector<16x128xf32>
      %169 = arith.mulf %166, %168 : vector<16x128xf32>
      %170 = arith.addf %163, %169 : vector<16x128xf32>
      %c2_i32_42 = arith.constant 2 : i32
      %171 = tpu.dynamic_rotate %165 by %c2_i32_42 dim 1 : vector<16x128xf32>, i32 -> vector<16x128xf32>
      %c29 = arith.constant 29 : index
      %172 = memref.load %arg3[%c29] : memref<98xf32, #tpu.memory_space<smem>>
      %173 = vector.broadcast %172 : f32 to vector<16x128xf32>
      %174 = arith.mulf %171, %173 : vector<16x128xf32>
      %175 = arith.addf %170, %174 : vector<16x128xf32>
      %c1_i32_43 = arith.constant 1 : i32
      %176 = tpu.dynamic_rotate %165 by %c1_i32_43 dim 1 : vector<16x128xf32>, i32 -> vector<16x128xf32>
      %c30 = arith.constant 30 : index
      %177 = memref.load %arg3[%c30] : memref<98xf32, #tpu.memory_space<smem>>
      %178 = vector.broadcast %177 : f32 to vector<16x128xf32>
      %179 = arith.mulf %176, %178 : vector<16x128xf32>
      %180 = arith.addf %175, %179 : vector<16x128xf32>
      %c31 = arith.constant 31 : index
      %181 = memref.load %arg3[%c31] : memref<98xf32, #tpu.memory_space<smem>>
      %182 = vector.broadcast %181 : f32 to vector<16x128xf32>
      %183 = arith.mulf %165, %182 : vector<16x128xf32>
      %184 = arith.addf %180, %183 : vector<16x128xf32>
      %c127_i32_44 = arith.constant 127 : i32
      %185 = tpu.dynamic_rotate %165 by %c127_i32_44 dim 1 : vector<16x128xf32>, i32 -> vector<16x128xf32>
      %c32 = arith.constant 32 : index
      %186 = memref.load %arg3[%c32] : memref<98xf32, #tpu.memory_space<smem>>
      %187 = vector.broadcast %186 : f32 to vector<16x128xf32>
      %188 = arith.mulf %185, %187 : vector<16x128xf32>
      %189 = arith.addf %184, %188 : vector<16x128xf32>
      %c126_i32_45 = arith.constant 126 : i32
      %190 = tpu.dynamic_rotate %165 by %c126_i32_45 dim 1 : vector<16x128xf32>, i32 -> vector<16x128xf32>
      %c33 = arith.constant 33 : index
      %191 = memref.load %arg3[%c33] : memref<98xf32, #tpu.memory_space<smem>>
      %192 = vector.broadcast %191 : f32 to vector<16x128xf32>
      %193 = arith.mulf %190, %192 : vector<16x128xf32>
      %194 = arith.addf %189, %193 : vector<16x128xf32>
      %c125_i32_46 = arith.constant 125 : i32
      %195 = tpu.dynamic_rotate %165 by %c125_i32_46 dim 1 : vector<16x128xf32>, i32 -> vector<16x128xf32>
      %c34 = arith.constant 34 : index
      %196 = memref.load %arg3[%c34] : memref<98xf32, #tpu.memory_space<smem>>
      %197 = vector.broadcast %196 : f32 to vector<16x128xf32>
      %198 = arith.mulf %195, %197 : vector<16x128xf32>
      %199 = arith.addf %194, %198 : vector<16x128xf32>
      %c22_i32 = arith.constant 22 : i32
      %200 = tpu.dynamic_rotate %14 by %c22_i32 dim 0 : vector<24x128xf32>, i32 -> vector<24x128xf32>
      %201 = vector.extract_strided_slice %200 {offsets = [0, 0], sizes = [16, 128], strides = [1, 1]} : vector<24x128xf32> to vector<16x128xf32>
      %c3_i32_47 = arith.constant 3 : i32
      %202 = tpu.dynamic_rotate %201 by %c3_i32_47 dim 1 : vector<16x128xf32>, i32 -> vector<16x128xf32>
      %c35 = arith.constant 35 : index
      %203 = memref.load %arg3[%c35] : memref<98xf32, #tpu.memory_space<smem>>
      %204 = vector.broadcast %203 : f32 to vector<16x128xf32>
      %205 = arith.mulf %202, %204 : vector<16x128xf32>
      %206 = arith.addf %199, %205 : vector<16x128xf32>
      %c2_i32_48 = arith.constant 2 : i32
      %207 = tpu.dynamic_rotate %201 by %c2_i32_48 dim 1 : vector<16x128xf32>, i32 -> vector<16x128xf32>
      %c36 = arith.constant 36 : index
      %208 = memref.load %arg3[%c36] : memref<98xf32, #tpu.memory_space<smem>>
      %209 = vector.broadcast %208 : f32 to vector<16x128xf32>
      %210 = arith.mulf %207, %209 : vector<16x128xf32>
      %211 = arith.addf %206, %210 : vector<16x128xf32>
      %c1_i32_49 = arith.constant 1 : i32
      %212 = tpu.dynamic_rotate %201 by %c1_i32_49 dim 1 : vector<16x128xf32>, i32 -> vector<16x128xf32>
      %c37 = arith.constant 37 : index
      %213 = memref.load %arg3[%c37] : memref<98xf32, #tpu.memory_space<smem>>
      %214 = vector.broadcast %213 : f32 to vector<16x128xf32>
      %215 = arith.mulf %212, %214 : vector<16x128xf32>
      %216 = arith.addf %211, %215 : vector<16x128xf32>
      %c38 = arith.constant 38 : index
      %217 = memref.load %arg3[%c38] : memref<98xf32, #tpu.memory_space<smem>>
      %218 = vector.broadcast %217 : f32 to vector<16x128xf32>
      %219 = arith.mulf %201, %218 : vector<16x128xf32>
      %220 = arith.addf %216, %219 : vector<16x128xf32>
      %c127_i32_50 = arith.constant 127 : i32
      %221 = tpu.dynamic_rotate %201 by %c127_i32_50 dim 1 : vector<16x128xf32>, i32 -> vector<16x128xf32>
      %c39 = arith.constant 39 : index
      %222 = memref.load %arg3[%c39] : memref<98xf32, #tpu.memory_space<smem>>
      %223 = vector.broadcast %222 : f32 to vector<16x128xf32>
      %224 = arith.mulf %221, %223 : vector<16x128xf32>
      %225 = arith.addf %220, %224 : vector<16x128xf32>
      %c126_i32_51 = arith.constant 126 : i32
      %226 = tpu.dynamic_rotate %201 by %c126_i32_51 dim 1 : vector<16x128xf32>, i32 -> vector<16x128xf32>
      %c40 = arith.constant 40 : index
      %227 = memref.load %arg3[%c40] : memref<98xf32, #tpu.memory_space<smem>>
      %228 = vector.broadcast %227 : f32 to vector<16x128xf32>
      %229 = arith.mulf %226, %228 : vector<16x128xf32>
      %230 = arith.addf %225, %229 : vector<16x128xf32>
      %c125_i32_52 = arith.constant 125 : i32
      %231 = tpu.dynamic_rotate %201 by %c125_i32_52 dim 1 : vector<16x128xf32>, i32 -> vector<16x128xf32>
      %c41 = arith.constant 41 : index
      %232 = memref.load %arg3[%c41] : memref<98xf32, #tpu.memory_space<smem>>
      %233 = vector.broadcast %232 : f32 to vector<16x128xf32>
      %234 = arith.mulf %231, %233 : vector<16x128xf32>
      %235 = arith.addf %230, %234 : vector<16x128xf32>
      %c21_i32 = arith.constant 21 : i32
      %236 = tpu.dynamic_rotate %14 by %c21_i32 dim 0 : vector<24x128xf32>, i32 -> vector<24x128xf32>
      %237 = vector.extract_strided_slice %236 {offsets = [0, 0], sizes = [16, 128], strides = [1, 1]} : vector<24x128xf32> to vector<16x128xf32>
      %c3_i32_53 = arith.constant 3 : i32
      %238 = tpu.dynamic_rotate %237 by %c3_i32_53 dim 1 : vector<16x128xf32>, i32 -> vector<16x128xf32>
      %c42 = arith.constant 42 : index
      %239 = memref.load %arg3[%c42] : memref<98xf32, #tpu.memory_space<smem>>
      %240 = vector.broadcast %239 : f32 to vector<16x128xf32>
      %241 = arith.mulf %238, %240 : vector<16x128xf32>
      %242 = arith.addf %235, %241 : vector<16x128xf32>
      %c2_i32_54 = arith.constant 2 : i32
      %243 = tpu.dynamic_rotate %237 by %c2_i32_54 dim 1 : vector<16x128xf32>, i32 -> vector<16x128xf32>
      %c43 = arith.constant 43 : index
      %244 = memref.load %arg3[%c43] : memref<98xf32, #tpu.memory_space<smem>>
      %245 = vector.broadcast %244 : f32 to vector<16x128xf32>
      %246 = arith.mulf %243, %245 : vector<16x128xf32>
      %247 = arith.addf %242, %246 : vector<16x128xf32>
      %c1_i32_55 = arith.constant 1 : i32
      %248 = tpu.dynamic_rotate %237 by %c1_i32_55 dim 1 : vector<16x128xf32>, i32 -> vector<16x128xf32>
      %c44 = arith.constant 44 : index
      %249 = memref.load %arg3[%c44] : memref<98xf32, #tpu.memory_space<smem>>
      %250 = vector.broadcast %249 : f32 to vector<16x128xf32>
      %251 = arith.mulf %248, %250 : vector<16x128xf32>
      %252 = arith.addf %247, %251 : vector<16x128xf32>
      %c45 = arith.constant 45 : index
      %253 = memref.load %arg3[%c45] : memref<98xf32, #tpu.memory_space<smem>>
      %254 = vector.broadcast %253 : f32 to vector<16x128xf32>
      %255 = arith.mulf %237, %254 : vector<16x128xf32>
      %256 = arith.addf %252, %255 : vector<16x128xf32>
      %c127_i32_56 = arith.constant 127 : i32
      %257 = tpu.dynamic_rotate %237 by %c127_i32_56 dim 1 : vector<16x128xf32>, i32 -> vector<16x128xf32>
      %c46 = arith.constant 46 : index
      %258 = memref.load %arg3[%c46] : memref<98xf32, #tpu.memory_space<smem>>
      %259 = vector.broadcast %258 : f32 to vector<16x128xf32>
      %260 = arith.mulf %257, %259 : vector<16x128xf32>
      %261 = arith.addf %256, %260 : vector<16x128xf32>
      %c126_i32_57 = arith.constant 126 : i32
      %262 = tpu.dynamic_rotate %237 by %c126_i32_57 dim 1 : vector<16x128xf32>, i32 -> vector<16x128xf32>
      %c47 = arith.constant 47 : index
      %263 = memref.load %arg3[%c47] : memref<98xf32, #tpu.memory_space<smem>>
      %264 = vector.broadcast %263 : f32 to vector<16x128xf32>
      %265 = arith.mulf %262, %264 : vector<16x128xf32>
      %266 = arith.addf %261, %265 : vector<16x128xf32>
      %c125_i32_58 = arith.constant 125 : i32
      %267 = tpu.dynamic_rotate %237 by %c125_i32_58 dim 1 : vector<16x128xf32>, i32 -> vector<16x128xf32>
      %c48 = arith.constant 48 : index
      %268 = memref.load %arg3[%c48] : memref<98xf32, #tpu.memory_space<smem>>
      %269 = vector.broadcast %268 : f32 to vector<16x128xf32>
      %270 = arith.mulf %267, %269 : vector<16x128xf32>
      %271 = arith.addf %266, %270 : vector<16x128xf32>
      %c3_i32_59 = arith.constant 3 : i32
      %272 = tpu.dynamic_rotate %18 by %c3_i32_59 dim 0 : vector<24x128xf32>, i32 -> vector<24x128xf32>
      %273 = vector.extract_strided_slice %272 {offsets = [0, 0], sizes = [16, 128], strides = [1, 1]} : vector<24x128xf32> to vector<16x128xf32>
      %c3_i32_60 = arith.constant 3 : i32
      %274 = tpu.dynamic_rotate %273 by %c3_i32_60 dim 1 : vector<16x128xf32>, i32 -> vector<16x128xf32>
      %c49 = arith.constant 49 : index
      %275 = memref.load %arg3[%c49] : memref<98xf32, #tpu.memory_space<smem>>
      %276 = vector.broadcast %275 : f32 to vector<16x128xf32>
      %277 = arith.mulf %274, %276 : vector<16x128xf32>
      %278 = arith.addf %271, %277 : vector<16x128xf32>
      %c2_i32_61 = arith.constant 2 : i32
      %279 = tpu.dynamic_rotate %273 by %c2_i32_61 dim 1 : vector<16x128xf32>, i32 -> vector<16x128xf32>
      %c50 = arith.constant 50 : index
      %280 = memref.load %arg3[%c50] : memref<98xf32, #tpu.memory_space<smem>>
      %281 = vector.broadcast %280 : f32 to vector<16x128xf32>
      %282 = arith.mulf %279, %281 : vector<16x128xf32>
      %283 = arith.addf %278, %282 : vector<16x128xf32>
      %c1_i32_62 = arith.constant 1 : i32
      %284 = tpu.dynamic_rotate %273 by %c1_i32_62 dim 1 : vector<16x128xf32>, i32 -> vector<16x128xf32>
      %c51 = arith.constant 51 : index
      %285 = memref.load %arg3[%c51] : memref<98xf32, #tpu.memory_space<smem>>
      %286 = vector.broadcast %285 : f32 to vector<16x128xf32>
      %287 = arith.mulf %284, %286 : vector<16x128xf32>
      %288 = arith.addf %283, %287 : vector<16x128xf32>
      %c52 = arith.constant 52 : index
      %289 = memref.load %arg3[%c52] : memref<98xf32, #tpu.memory_space<smem>>
      %290 = vector.broadcast %289 : f32 to vector<16x128xf32>
      %291 = arith.mulf %273, %290 : vector<16x128xf32>
      %292 = arith.addf %288, %291 : vector<16x128xf32>
      %c127_i32_63 = arith.constant 127 : i32
      %293 = tpu.dynamic_rotate %273 by %c127_i32_63 dim 1 : vector<16x128xf32>, i32 -> vector<16x128xf32>
      %c53 = arith.constant 53 : index
      %294 = memref.load %arg3[%c53] : memref<98xf32, #tpu.memory_space<smem>>
      %295 = vector.broadcast %294 : f32 to vector<16x128xf32>
      %296 = arith.mulf %293, %295 : vector<16x128xf32>
      %297 = arith.addf %292, %296 : vector<16x128xf32>
      %c126_i32_64 = arith.constant 126 : i32
      %298 = tpu.dynamic_rotate %273 by %c126_i32_64 dim 1 : vector<16x128xf32>, i32 -> vector<16x128xf32>
      %c54 = arith.constant 54 : index
      %299 = memref.load %arg3[%c54] : memref<98xf32, #tpu.memory_space<smem>>
      %300 = vector.broadcast %299 : f32 to vector<16x128xf32>
      %301 = arith.mulf %298, %300 : vector<16x128xf32>
      %302 = arith.addf %297, %301 : vector<16x128xf32>
      %c125_i32_65 = arith.constant 125 : i32
      %303 = tpu.dynamic_rotate %273 by %c125_i32_65 dim 1 : vector<16x128xf32>, i32 -> vector<16x128xf32>
      %c55 = arith.constant 55 : index
      %304 = memref.load %arg3[%c55] : memref<98xf32, #tpu.memory_space<smem>>
      %305 = vector.broadcast %304 : f32 to vector<16x128xf32>
      %306 = arith.mulf %303, %305 : vector<16x128xf32>
      %307 = arith.addf %302, %306 : vector<16x128xf32>
      %c2_i32_66 = arith.constant 2 : i32
      %308 = tpu.dynamic_rotate %18 by %c2_i32_66 dim 0 : vector<24x128xf32>, i32 -> vector<24x128xf32>
      %309 = vector.extract_strided_slice %308 {offsets = [0, 0], sizes = [16, 128], strides = [1, 1]} : vector<24x128xf32> to vector<16x128xf32>
      %c3_i32_67 = arith.constant 3 : i32
      %310 = tpu.dynamic_rotate %309 by %c3_i32_67 dim 1 : vector<16x128xf32>, i32 -> vector<16x128xf32>
      %c56 = arith.constant 56 : index
      %311 = memref.load %arg3[%c56] : memref<98xf32, #tpu.memory_space<smem>>
      %312 = vector.broadcast %311 : f32 to vector<16x128xf32>
      %313 = arith.mulf %310, %312 : vector<16x128xf32>
      %314 = arith.addf %307, %313 : vector<16x128xf32>
      %c2_i32_68 = arith.constant 2 : i32
      %315 = tpu.dynamic_rotate %309 by %c2_i32_68 dim 1 : vector<16x128xf32>, i32 -> vector<16x128xf32>
      %c57 = arith.constant 57 : index
      %316 = memref.load %arg3[%c57] : memref<98xf32, #tpu.memory_space<smem>>
      %317 = vector.broadcast %316 : f32 to vector<16x128xf32>
      %318 = arith.mulf %315, %317 : vector<16x128xf32>
      %319 = arith.addf %314, %318 : vector<16x128xf32>
      %c1_i32_69 = arith.constant 1 : i32
      %320 = tpu.dynamic_rotate %309 by %c1_i32_69 dim 1 : vector<16x128xf32>, i32 -> vector<16x128xf32>
      %c58 = arith.constant 58 : index
      %321 = memref.load %arg3[%c58] : memref<98xf32, #tpu.memory_space<smem>>
      %322 = vector.broadcast %321 : f32 to vector<16x128xf32>
      %323 = arith.mulf %320, %322 : vector<16x128xf32>
      %324 = arith.addf %319, %323 : vector<16x128xf32>
      %c59 = arith.constant 59 : index
      %325 = memref.load %arg3[%c59] : memref<98xf32, #tpu.memory_space<smem>>
      %326 = vector.broadcast %325 : f32 to vector<16x128xf32>
      %327 = arith.mulf %309, %326 : vector<16x128xf32>
      %328 = arith.addf %324, %327 : vector<16x128xf32>
      %c127_i32_70 = arith.constant 127 : i32
      %329 = tpu.dynamic_rotate %309 by %c127_i32_70 dim 1 : vector<16x128xf32>, i32 -> vector<16x128xf32>
      %c60 = arith.constant 60 : index
      %330 = memref.load %arg3[%c60] : memref<98xf32, #tpu.memory_space<smem>>
      %331 = vector.broadcast %330 : f32 to vector<16x128xf32>
      %332 = arith.mulf %329, %331 : vector<16x128xf32>
      %333 = arith.addf %328, %332 : vector<16x128xf32>
      %c126_i32_71 = arith.constant 126 : i32
      %334 = tpu.dynamic_rotate %309 by %c126_i32_71 dim 1 : vector<16x128xf32>, i32 -> vector<16x128xf32>
      %c61 = arith.constant 61 : index
      %335 = memref.load %arg3[%c61] : memref<98xf32, #tpu.memory_space<smem>>
      %336 = vector.broadcast %335 : f32 to vector<16x128xf32>
      %337 = arith.mulf %334, %336 : vector<16x128xf32>
      %338 = arith.addf %333, %337 : vector<16x128xf32>
      %c125_i32_72 = arith.constant 125 : i32
      %339 = tpu.dynamic_rotate %309 by %c125_i32_72 dim 1 : vector<16x128xf32>, i32 -> vector<16x128xf32>
      %c62 = arith.constant 62 : index
      %340 = memref.load %arg3[%c62] : memref<98xf32, #tpu.memory_space<smem>>
      %341 = vector.broadcast %340 : f32 to vector<16x128xf32>
      %342 = arith.mulf %339, %341 : vector<16x128xf32>
      %343 = arith.addf %338, %342 : vector<16x128xf32>
      %c1_i32_73 = arith.constant 1 : i32
      %344 = tpu.dynamic_rotate %18 by %c1_i32_73 dim 0 : vector<24x128xf32>, i32 -> vector<24x128xf32>
      %345 = vector.extract_strided_slice %344 {offsets = [0, 0], sizes = [16, 128], strides = [1, 1]} : vector<24x128xf32> to vector<16x128xf32>
      %c3_i32_74 = arith.constant 3 : i32
      %346 = tpu.dynamic_rotate %345 by %c3_i32_74 dim 1 : vector<16x128xf32>, i32 -> vector<16x128xf32>
      %c63 = arith.constant 63 : index
      %347 = memref.load %arg3[%c63] : memref<98xf32, #tpu.memory_space<smem>>
      %348 = vector.broadcast %347 : f32 to vector<16x128xf32>
      %349 = arith.mulf %346, %348 : vector<16x128xf32>
      %350 = arith.addf %343, %349 : vector<16x128xf32>
      %c2_i32_75 = arith.constant 2 : i32
      %351 = tpu.dynamic_rotate %345 by %c2_i32_75 dim 1 : vector<16x128xf32>, i32 -> vector<16x128xf32>
      %c64 = arith.constant 64 : index
      %352 = memref.load %arg3[%c64] : memref<98xf32, #tpu.memory_space<smem>>
      %353 = vector.broadcast %352 : f32 to vector<16x128xf32>
      %354 = arith.mulf %351, %353 : vector<16x128xf32>
      %355 = arith.addf %350, %354 : vector<16x128xf32>
      %c1_i32_76 = arith.constant 1 : i32
      %356 = tpu.dynamic_rotate %345 by %c1_i32_76 dim 1 : vector<16x128xf32>, i32 -> vector<16x128xf32>
      %c65 = arith.constant 65 : index
      %357 = memref.load %arg3[%c65] : memref<98xf32, #tpu.memory_space<smem>>
      %358 = vector.broadcast %357 : f32 to vector<16x128xf32>
      %359 = arith.mulf %356, %358 : vector<16x128xf32>
      %360 = arith.addf %355, %359 : vector<16x128xf32>
      %c66 = arith.constant 66 : index
      %361 = memref.load %arg3[%c66] : memref<98xf32, #tpu.memory_space<smem>>
      %362 = vector.broadcast %361 : f32 to vector<16x128xf32>
      %363 = arith.mulf %345, %362 : vector<16x128xf32>
      %364 = arith.addf %360, %363 : vector<16x128xf32>
      %c127_i32_77 = arith.constant 127 : i32
      %365 = tpu.dynamic_rotate %345 by %c127_i32_77 dim 1 : vector<16x128xf32>, i32 -> vector<16x128xf32>
      %c67 = arith.constant 67 : index
      %366 = memref.load %arg3[%c67] : memref<98xf32, #tpu.memory_space<smem>>
      %367 = vector.broadcast %366 : f32 to vector<16x128xf32>
      %368 = arith.mulf %365, %367 : vector<16x128xf32>
      %369 = arith.addf %364, %368 : vector<16x128xf32>
      %c126_i32_78 = arith.constant 126 : i32
      %370 = tpu.dynamic_rotate %345 by %c126_i32_78 dim 1 : vector<16x128xf32>, i32 -> vector<16x128xf32>
      %c68 = arith.constant 68 : index
      %371 = memref.load %arg3[%c68] : memref<98xf32, #tpu.memory_space<smem>>
      %372 = vector.broadcast %371 : f32 to vector<16x128xf32>
      %373 = arith.mulf %370, %372 : vector<16x128xf32>
      %374 = arith.addf %369, %373 : vector<16x128xf32>
      %c125_i32_79 = arith.constant 125 : i32
      %375 = tpu.dynamic_rotate %345 by %c125_i32_79 dim 1 : vector<16x128xf32>, i32 -> vector<16x128xf32>
      %c69 = arith.constant 69 : index
      %376 = memref.load %arg3[%c69] : memref<98xf32, #tpu.memory_space<smem>>
      %377 = vector.broadcast %376 : f32 to vector<16x128xf32>
      %378 = arith.mulf %375, %377 : vector<16x128xf32>
      %379 = arith.addf %374, %378 : vector<16x128xf32>
      %380 = vector.extract_strided_slice %18 {offsets = [0, 0], sizes = [16, 128], strides = [1, 1]} : vector<24x128xf32> to vector<16x128xf32>
      %c3_i32_80 = arith.constant 3 : i32
      %381 = tpu.dynamic_rotate %380 by %c3_i32_80 dim 1 : vector<16x128xf32>, i32 -> vector<16x128xf32>
      %c70 = arith.constant 70 : index
      %382 = memref.load %arg3[%c70] : memref<98xf32, #tpu.memory_space<smem>>
      %383 = vector.broadcast %382 : f32 to vector<16x128xf32>
      %384 = arith.mulf %381, %383 : vector<16x128xf32>
      %385 = arith.addf %379, %384 : vector<16x128xf32>
      %c2_i32_81 = arith.constant 2 : i32
      %386 = tpu.dynamic_rotate %380 by %c2_i32_81 dim 1 : vector<16x128xf32>, i32 -> vector<16x128xf32>
      %c71 = arith.constant 71 : index
      %387 = memref.load %arg3[%c71] : memref<98xf32, #tpu.memory_space<smem>>
      %388 = vector.broadcast %387 : f32 to vector<16x128xf32>
      %389 = arith.mulf %386, %388 : vector<16x128xf32>
      %390 = arith.addf %385, %389 : vector<16x128xf32>
      %c1_i32_82 = arith.constant 1 : i32
      %391 = tpu.dynamic_rotate %380 by %c1_i32_82 dim 1 : vector<16x128xf32>, i32 -> vector<16x128xf32>
      %c72 = arith.constant 72 : index
      %392 = memref.load %arg3[%c72] : memref<98xf32, #tpu.memory_space<smem>>
      %393 = vector.broadcast %392 : f32 to vector<16x128xf32>
      %394 = arith.mulf %391, %393 : vector<16x128xf32>
      %395 = arith.addf %390, %394 : vector<16x128xf32>
      %c73 = arith.constant 73 : index
      %396 = memref.load %arg3[%c73] : memref<98xf32, #tpu.memory_space<smem>>
      %397 = vector.broadcast %396 : f32 to vector<16x128xf32>
      %398 = arith.mulf %380, %397 : vector<16x128xf32>
      %399 = arith.addf %395, %398 : vector<16x128xf32>
      %c127_i32_83 = arith.constant 127 : i32
      %400 = tpu.dynamic_rotate %380 by %c127_i32_83 dim 1 : vector<16x128xf32>, i32 -> vector<16x128xf32>
      %c74 = arith.constant 74 : index
      %401 = memref.load %arg3[%c74] : memref<98xf32, #tpu.memory_space<smem>>
      %402 = vector.broadcast %401 : f32 to vector<16x128xf32>
      %403 = arith.mulf %400, %402 : vector<16x128xf32>
      %404 = arith.addf %399, %403 : vector<16x128xf32>
      %c126_i32_84 = arith.constant 126 : i32
      %405 = tpu.dynamic_rotate %380 by %c126_i32_84 dim 1 : vector<16x128xf32>, i32 -> vector<16x128xf32>
      %c75 = arith.constant 75 : index
      %406 = memref.load %arg3[%c75] : memref<98xf32, #tpu.memory_space<smem>>
      %407 = vector.broadcast %406 : f32 to vector<16x128xf32>
      %408 = arith.mulf %405, %407 : vector<16x128xf32>
      %409 = arith.addf %404, %408 : vector<16x128xf32>
      %c125_i32_85 = arith.constant 125 : i32
      %410 = tpu.dynamic_rotate %380 by %c125_i32_85 dim 1 : vector<16x128xf32>, i32 -> vector<16x128xf32>
      %c76 = arith.constant 76 : index
      %411 = memref.load %arg3[%c76] : memref<98xf32, #tpu.memory_space<smem>>
      %412 = vector.broadcast %411 : f32 to vector<16x128xf32>
      %413 = arith.mulf %410, %412 : vector<16x128xf32>
      %414 = arith.addf %409, %413 : vector<16x128xf32>
      %c23_i32_86 = arith.constant 23 : i32
      %415 = tpu.dynamic_rotate %18 by %c23_i32_86 dim 0 : vector<24x128xf32>, i32 -> vector<24x128xf32>
      %416 = vector.extract_strided_slice %415 {offsets = [0, 0], sizes = [16, 128], strides = [1, 1]} : vector<24x128xf32> to vector<16x128xf32>
      %c3_i32_87 = arith.constant 3 : i32
      %417 = tpu.dynamic_rotate %416 by %c3_i32_87 dim 1 : vector<16x128xf32>, i32 -> vector<16x128xf32>
      %c77 = arith.constant 77 : index
      %418 = memref.load %arg3[%c77] : memref<98xf32, #tpu.memory_space<smem>>
      %419 = vector.broadcast %418 : f32 to vector<16x128xf32>
      %420 = arith.mulf %417, %419 : vector<16x128xf32>
      %421 = arith.addf %414, %420 : vector<16x128xf32>
      %c2_i32_88 = arith.constant 2 : i32
      %422 = tpu.dynamic_rotate %416 by %c2_i32_88 dim 1 : vector<16x128xf32>, i32 -> vector<16x128xf32>
      %c78 = arith.constant 78 : index
      %423 = memref.load %arg3[%c78] : memref<98xf32, #tpu.memory_space<smem>>
      %424 = vector.broadcast %423 : f32 to vector<16x128xf32>
      %425 = arith.mulf %422, %424 : vector<16x128xf32>
      %426 = arith.addf %421, %425 : vector<16x128xf32>
      %c1_i32_89 = arith.constant 1 : i32
      %427 = tpu.dynamic_rotate %416 by %c1_i32_89 dim 1 : vector<16x128xf32>, i32 -> vector<16x128xf32>
      %c79 = arith.constant 79 : index
      %428 = memref.load %arg3[%c79] : memref<98xf32, #tpu.memory_space<smem>>
      %429 = vector.broadcast %428 : f32 to vector<16x128xf32>
      %430 = arith.mulf %427, %429 : vector<16x128xf32>
      %431 = arith.addf %426, %430 : vector<16x128xf32>
      %c80 = arith.constant 80 : index
      %432 = memref.load %arg3[%c80] : memref<98xf32, #tpu.memory_space<smem>>
      %433 = vector.broadcast %432 : f32 to vector<16x128xf32>
      %434 = arith.mulf %416, %433 : vector<16x128xf32>
      %435 = arith.addf %431, %434 : vector<16x128xf32>
      %c127_i32_90 = arith.constant 127 : i32
      %436 = tpu.dynamic_rotate %416 by %c127_i32_90 dim 1 : vector<16x128xf32>, i32 -> vector<16x128xf32>
      %c81 = arith.constant 81 : index
      %437 = memref.load %arg3[%c81] : memref<98xf32, #tpu.memory_space<smem>>
      %438 = vector.broadcast %437 : f32 to vector<16x128xf32>
      %439 = arith.mulf %436, %438 : vector<16x128xf32>
      %440 = arith.addf %435, %439 : vector<16x128xf32>
      %c126_i32_91 = arith.constant 126 : i32
      %441 = tpu.dynamic_rotate %416 by %c126_i32_91 dim 1 : vector<16x128xf32>, i32 -> vector<16x128xf32>
      %c82 = arith.constant 82 : index
      %442 = memref.load %arg3[%c82] : memref<98xf32, #tpu.memory_space<smem>>
      %443 = vector.broadcast %442 : f32 to vector<16x128xf32>
      %444 = arith.mulf %441, %443 : vector<16x128xf32>
      %445 = arith.addf %440, %444 : vector<16x128xf32>
      %c125_i32_92 = arith.constant 125 : i32
      %446 = tpu.dynamic_rotate %416 by %c125_i32_92 dim 1 : vector<16x128xf32>, i32 -> vector<16x128xf32>
      %c83 = arith.constant 83 : index
      %447 = memref.load %arg3[%c83] : memref<98xf32, #tpu.memory_space<smem>>
      %448 = vector.broadcast %447 : f32 to vector<16x128xf32>
      %449 = arith.mulf %446, %448 : vector<16x128xf32>
      %450 = arith.addf %445, %449 : vector<16x128xf32>
      %c22_i32_93 = arith.constant 22 : i32
      %451 = tpu.dynamic_rotate %18 by %c22_i32_93 dim 0 : vector<24x128xf32>, i32 -> vector<24x128xf32>
      %452 = vector.extract_strided_slice %451 {offsets = [0, 0], sizes = [16, 128], strides = [1, 1]} : vector<24x128xf32> to vector<16x128xf32>
      %c3_i32_94 = arith.constant 3 : i32
      %453 = tpu.dynamic_rotate %452 by %c3_i32_94 dim 1 : vector<16x128xf32>, i32 -> vector<16x128xf32>
      %c84 = arith.constant 84 : index
      %454 = memref.load %arg3[%c84] : memref<98xf32, #tpu.memory_space<smem>>
      %455 = vector.broadcast %454 : f32 to vector<16x128xf32>
      %456 = arith.mulf %453, %455 : vector<16x128xf32>
      %457 = arith.addf %450, %456 : vector<16x128xf32>
      %c2_i32_95 = arith.constant 2 : i32
      %458 = tpu.dynamic_rotate %452 by %c2_i32_95 dim 1 : vector<16x128xf32>, i32 -> vector<16x128xf32>
      %c85 = arith.constant 85 : index
      %459 = memref.load %arg3[%c85] : memref<98xf32, #tpu.memory_space<smem>>
      %460 = vector.broadcast %459 : f32 to vector<16x128xf32>
      %461 = arith.mulf %458, %460 : vector<16x128xf32>
      %462 = arith.addf %457, %461 : vector<16x128xf32>
      %c1_i32_96 = arith.constant 1 : i32
      %463 = tpu.dynamic_rotate %452 by %c1_i32_96 dim 1 : vector<16x128xf32>, i32 -> vector<16x128xf32>
      %c86 = arith.constant 86 : index
      %464 = memref.load %arg3[%c86] : memref<98xf32, #tpu.memory_space<smem>>
      %465 = vector.broadcast %464 : f32 to vector<16x128xf32>
      %466 = arith.mulf %463, %465 : vector<16x128xf32>
      %467 = arith.addf %462, %466 : vector<16x128xf32>
      %c87 = arith.constant 87 : index
      %468 = memref.load %arg3[%c87] : memref<98xf32, #tpu.memory_space<smem>>
      %469 = vector.broadcast %468 : f32 to vector<16x128xf32>
      %470 = arith.mulf %452, %469 : vector<16x128xf32>
      %471 = arith.addf %467, %470 : vector<16x128xf32>
      %c127_i32_97 = arith.constant 127 : i32
      %472 = tpu.dynamic_rotate %452 by %c127_i32_97 dim 1 : vector<16x128xf32>, i32 -> vector<16x128xf32>
      %c88 = arith.constant 88 : index
      %473 = memref.load %arg3[%c88] : memref<98xf32, #tpu.memory_space<smem>>
      %474 = vector.broadcast %473 : f32 to vector<16x128xf32>
      %475 = arith.mulf %472, %474 : vector<16x128xf32>
      %476 = arith.addf %471, %475 : vector<16x128xf32>
      %c126_i32_98 = arith.constant 126 : i32
      %477 = tpu.dynamic_rotate %452 by %c126_i32_98 dim 1 : vector<16x128xf32>, i32 -> vector<16x128xf32>
      %c89 = arith.constant 89 : index
      %478 = memref.load %arg3[%c89] : memref<98xf32, #tpu.memory_space<smem>>
      %479 = vector.broadcast %478 : f32 to vector<16x128xf32>
      %480 = arith.mulf %477, %479 : vector<16x128xf32>
      %481 = arith.addf %476, %480 : vector<16x128xf32>
      %c125_i32_99 = arith.constant 125 : i32
      %482 = tpu.dynamic_rotate %452 by %c125_i32_99 dim 1 : vector<16x128xf32>, i32 -> vector<16x128xf32>
      %c90 = arith.constant 90 : index
      %483 = memref.load %arg3[%c90] : memref<98xf32, #tpu.memory_space<smem>>
      %484 = vector.broadcast %483 : f32 to vector<16x128xf32>
      %485 = arith.mulf %482, %484 : vector<16x128xf32>
      %486 = arith.addf %481, %485 : vector<16x128xf32>
      %c21_i32_100 = arith.constant 21 : i32
      %487 = tpu.dynamic_rotate %18 by %c21_i32_100 dim 0 : vector<24x128xf32>, i32 -> vector<24x128xf32>
      %488 = vector.extract_strided_slice %487 {offsets = [0, 0], sizes = [16, 128], strides = [1, 1]} : vector<24x128xf32> to vector<16x128xf32>
      %c3_i32_101 = arith.constant 3 : i32
      %489 = tpu.dynamic_rotate %488 by %c3_i32_101 dim 1 : vector<16x128xf32>, i32 -> vector<16x128xf32>
      %c91 = arith.constant 91 : index
      %490 = memref.load %arg3[%c91] : memref<98xf32, #tpu.memory_space<smem>>
      %491 = vector.broadcast %490 : f32 to vector<16x128xf32>
      %492 = arith.mulf %489, %491 : vector<16x128xf32>
      %493 = arith.addf %486, %492 : vector<16x128xf32>
      %c2_i32_102 = arith.constant 2 : i32
      %494 = tpu.dynamic_rotate %488 by %c2_i32_102 dim 1 : vector<16x128xf32>, i32 -> vector<16x128xf32>
      %c92 = arith.constant 92 : index
      %495 = memref.load %arg3[%c92] : memref<98xf32, #tpu.memory_space<smem>>
      %496 = vector.broadcast %495 : f32 to vector<16x128xf32>
      %497 = arith.mulf %494, %496 : vector<16x128xf32>
      %498 = arith.addf %493, %497 : vector<16x128xf32>
      %c1_i32_103 = arith.constant 1 : i32
      %499 = tpu.dynamic_rotate %488 by %c1_i32_103 dim 1 : vector<16x128xf32>, i32 -> vector<16x128xf32>
      %c93 = arith.constant 93 : index
      %500 = memref.load %arg3[%c93] : memref<98xf32, #tpu.memory_space<smem>>
      %501 = vector.broadcast %500 : f32 to vector<16x128xf32>
      %502 = arith.mulf %499, %501 : vector<16x128xf32>
      %503 = arith.addf %498, %502 : vector<16x128xf32>
      %c94 = arith.constant 94 : index
      %504 = memref.load %arg3[%c94] : memref<98xf32, #tpu.memory_space<smem>>
      %505 = vector.broadcast %504 : f32 to vector<16x128xf32>
      %506 = arith.mulf %488, %505 : vector<16x128xf32>
      %507 = arith.addf %503, %506 : vector<16x128xf32>
      %c127_i32_104 = arith.constant 127 : i32
      %508 = tpu.dynamic_rotate %488 by %c127_i32_104 dim 1 : vector<16x128xf32>, i32 -> vector<16x128xf32>
      %c95 = arith.constant 95 : index
      %509 = memref.load %arg3[%c95] : memref<98xf32, #tpu.memory_space<smem>>
      %510 = vector.broadcast %509 : f32 to vector<16x128xf32>
      %511 = arith.mulf %508, %510 : vector<16x128xf32>
      %512 = arith.addf %507, %511 : vector<16x128xf32>
      %c126_i32_105 = arith.constant 126 : i32
      %513 = tpu.dynamic_rotate %488 by %c126_i32_105 dim 1 : vector<16x128xf32>, i32 -> vector<16x128xf32>
      %c96 = arith.constant 96 : index
      %514 = memref.load %arg3[%c96] : memref<98xf32, #tpu.memory_space<smem>>
      %515 = vector.broadcast %514 : f32 to vector<16x128xf32>
      %516 = arith.mulf %513, %515 : vector<16x128xf32>
      %517 = arith.addf %512, %516 : vector<16x128xf32>
      %c125_i32_106 = arith.constant 125 : i32
      %518 = tpu.dynamic_rotate %488 by %c125_i32_106 dim 1 : vector<16x128xf32>, i32 -> vector<16x128xf32>
      %c97 = arith.constant 97 : index
      %519 = memref.load %arg3[%c97] : memref<98xf32, #tpu.memory_space<smem>>
      %520 = vector.broadcast %519 : f32 to vector<16x128xf32>
      %521 = arith.mulf %518, %520 : vector<16x128xf32>
      %522 = arith.addf %517, %521 : vector<16x128xf32>
      %cst_107 = arith.constant 0.000000e+00 : f32
      %523 = vector.broadcast %cst_107 : f32 to vector<16x128xf32>
      %524 = arith.maximumf %522, %523 : vector<16x128xf32>
      %525 = vector.extract_strided_slice %524 {offsets = [0, 0], sizes = [16, 16], strides = [1, 1]} : vector<16x128xf32> to vector<16x16xf32>
      %c0_108 = arith.constant 0 : index
      %c0_109 = arith.constant 0 : index
      %c0_110 = arith.constant 0 : index
      %526 = vector.load %arg7[%c0_108, %c0_109, %c0_110] : memref<2x24x128xf32, #tpu.memory_space<vmem>>, vector<1x16x16xf32>
      %527 = vector.shape_cast %526 : vector<1x16x16xf32> to vector<16x16xf32>
      %528 = vector.shape_cast %525 : vector<16x16xf32> to vector<1x16x16xf32>
      tpu.vector_store %arg7[%c0_108, %c0_109, %c0_110], %528 {strides = array<i32>} : memref<2x24x128xf32, #tpu.memory_space<vmem>>, vector<1x16x16xf32>,
      %c0_111 = arith.constant 0 : index
      %c0_112 = arith.constant 0 : index
      %c0_113 = arith.constant 0 : index
      %529 = vector.load %arg7[%c0_111, %c0_112, %c0_113] : memref<2x24x128xf32, #tpu.memory_space<vmem>>, vector<1x24x128xf32>
      %530 = vector.shape_cast %529 : vector<1x24x128xf32> to vector<24x128xf32>
      %c1_114 = arith.constant 1 : index
      %531 = memref.load %arg4[%c1_114] : memref<2xf32, #tpu.memory_space<smem>>
      %532 = vector.broadcast %531 : f32 to vector<16x128xf32>
      %c3_i32_115 = arith.constant 3 : i32
      %533 = tpu.dynamic_rotate %530 by %c3_i32_115 dim 0 : vector<24x128xf32>, i32 -> vector<24x128xf32>
      %534 = vector.extract_strided_slice %533 {offsets = [0, 0], sizes = [16, 128], strides = [1, 1]} : vector<24x128xf32> to vector<16x128xf32>
      %c3_i32_116 = arith.constant 3 : i32
      %535 = tpu.dynamic_rotate %534 by %c3_i32_116 dim 1 : vector<16x128xf32>, i32 -> vector<16x128xf32>
      %c0_117 = arith.constant 0 : index
      %536 = memref.load %arg5[%c0_117] : memref<49xf32, #tpu.memory_space<smem>>
      %537 = vector.broadcast %536 : f32 to vector<16x128xf32>
      %538 = arith.mulf %535, %537 : vector<16x128xf32>
      %539 = arith.addf %532, %538 : vector<16x128xf32>
      %c2_i32_118 = arith.constant 2 : i32
      %540 = tpu.dynamic_rotate %534 by %c2_i32_118 dim 1 : vector<16x128xf32>, i32 -> vector<16x128xf32>
      %c1_119 = arith.constant 1 : index
      %541 = memref.load %arg5[%c1_119] : memref<49xf32, #tpu.memory_space<smem>>
      %542 = vector.broadcast %541 : f32 to vector<16x128xf32>
      %543 = arith.mulf %540, %542 : vector<16x128xf32>
      %544 = arith.addf %539, %543 : vector<16x128xf32>
      %c1_i32_120 = arith.constant 1 : i32
      %545 = tpu.dynamic_rotate %534 by %c1_i32_120 dim 1 : vector<16x128xf32>, i32 -> vector<16x128xf32>
      %c2_121 = arith.constant 2 : index
      %546 = memref.load %arg5[%c2_121] : memref<49xf32, #tpu.memory_space<smem>>
      %547 = vector.broadcast %546 : f32 to vector<16x128xf32>
      %548 = arith.mulf %545, %547 : vector<16x128xf32>
      %549 = arith.addf %544, %548 : vector<16x128xf32>
      %c3_122 = arith.constant 3 : index
      %550 = memref.load %arg5[%c3_122] : memref<49xf32, #tpu.memory_space<smem>>
      %551 = vector.broadcast %550 : f32 to vector<16x128xf32>
      %552 = arith.mulf %534, %551 : vector<16x128xf32>
      %553 = arith.addf %549, %552 : vector<16x128xf32>
      %c127_i32_123 = arith.constant 127 : i32
      %554 = tpu.dynamic_rotate %534 by %c127_i32_123 dim 1 : vector<16x128xf32>, i32 -> vector<16x128xf32>
      %c4_124 = arith.constant 4 : index
      %555 = memref.load %arg5[%c4_124] : memref<49xf32, #tpu.memory_space<smem>>
      %556 = vector.broadcast %555 : f32 to vector<16x128xf32>
      %557 = arith.mulf %554, %556 : vector<16x128xf32>
      %558 = arith.addf %553, %557 : vector<16x128xf32>
      %c126_i32_125 = arith.constant 126 : i32
      %559 = tpu.dynamic_rotate %534 by %c126_i32_125 dim 1 : vector<16x128xf32>, i32 -> vector<16x128xf32>
      %c5_126 = arith.constant 5 : index
      %560 = memref.load %arg5[%c5_126] : memref<49xf32, #tpu.memory_space<smem>>
      %561 = vector.broadcast %560 : f32 to vector<16x128xf32>
      %562 = arith.mulf %559, %561 : vector<16x128xf32>
      %563 = arith.addf %558, %562 : vector<16x128xf32>
      %c125_i32_127 = arith.constant 125 : i32
      %564 = tpu.dynamic_rotate %534 by %c125_i32_127 dim 1 : vector<16x128xf32>, i32 -> vector<16x128xf32>
      %c6_128 = arith.constant 6 : index
      %565 = memref.load %arg5[%c6_128] : memref<49xf32, #tpu.memory_space<smem>>
      %566 = vector.broadcast %565 : f32 to vector<16x128xf32>
      %567 = arith.mulf %564, %566 : vector<16x128xf32>
      %568 = arith.addf %563, %567 : vector<16x128xf32>
      %c2_i32_129 = arith.constant 2 : i32
      %569 = tpu.dynamic_rotate %530 by %c2_i32_129 dim 0 : vector<24x128xf32>, i32 -> vector<24x128xf32>
      %570 = vector.extract_strided_slice %569 {offsets = [0, 0], sizes = [16, 128], strides = [1, 1]} : vector<24x128xf32> to vector<16x128xf32>
      %c3_i32_130 = arith.constant 3 : i32
      %571 = tpu.dynamic_rotate %570 by %c3_i32_130 dim 1 : vector<16x128xf32>, i32 -> vector<16x128xf32>
      %c7_131 = arith.constant 7 : index
      %572 = memref.load %arg5[%c7_131] : memref<49xf32, #tpu.memory_space<smem>>
      %573 = vector.broadcast %572 : f32 to vector<16x128xf32>
      %574 = arith.mulf %571, %573 : vector<16x128xf32>
      %575 = arith.addf %568, %574 : vector<16x128xf32>
      %c2_i32_132 = arith.constant 2 : i32
      %576 = tpu.dynamic_rotate %570 by %c2_i32_132 dim 1 : vector<16x128xf32>, i32 -> vector<16x128xf32>
      %c8_133 = arith.constant 8 : index
      %577 = memref.load %arg5[%c8_133] : memref<49xf32, #tpu.memory_space<smem>>
      %578 = vector.broadcast %577 : f32 to vector<16x128xf32>
      %579 = arith.mulf %576, %578 : vector<16x128xf32>
      %580 = arith.addf %575, %579 : vector<16x128xf32>
      %c1_i32_134 = arith.constant 1 : i32
      %581 = tpu.dynamic_rotate %570 by %c1_i32_134 dim 1 : vector<16x128xf32>, i32 -> vector<16x128xf32>
      %c9_135 = arith.constant 9 : index
      %582 = memref.load %arg5[%c9_135] : memref<49xf32, #tpu.memory_space<smem>>
      %583 = vector.broadcast %582 : f32 to vector<16x128xf32>
      %584 = arith.mulf %581, %583 : vector<16x128xf32>
      %585 = arith.addf %580, %584 : vector<16x128xf32>
      %c10_136 = arith.constant 10 : index
      %586 = memref.load %arg5[%c10_136] : memref<49xf32, #tpu.memory_space<smem>>
      %587 = vector.broadcast %586 : f32 to vector<16x128xf32>
      %588 = arith.mulf %570, %587 : vector<16x128xf32>
      %589 = arith.addf %585, %588 : vector<16x128xf32>
      %c127_i32_137 = arith.constant 127 : i32
      %590 = tpu.dynamic_rotate %570 by %c127_i32_137 dim 1 : vector<16x128xf32>, i32 -> vector<16x128xf32>
      %c11_138 = arith.constant 11 : index
      %591 = memref.load %arg5[%c11_138] : memref<49xf32, #tpu.memory_space<smem>>
      %592 = vector.broadcast %591 : f32 to vector<16x128xf32>
      %593 = arith.mulf %590, %592 : vector<16x128xf32>
      %594 = arith.addf %589, %593 : vector<16x128xf32>
      %c126_i32_139 = arith.constant 126 : i32
      %595 = tpu.dynamic_rotate %570 by %c126_i32_139 dim 1 : vector<16x128xf32>, i32 -> vector<16x128xf32>
      %c12_140 = arith.constant 12 : index
      %596 = memref.load %arg5[%c12_140] : memref<49xf32, #tpu.memory_space<smem>>
      %597 = vector.broadcast %596 : f32 to vector<16x128xf32>
      %598 = arith.mulf %595, %597 : vector<16x128xf32>
      %599 = arith.addf %594, %598 : vector<16x128xf32>
      %c125_i32_141 = arith.constant 125 : i32
      %600 = tpu.dynamic_rotate %570 by %c125_i32_141 dim 1 : vector<16x128xf32>, i32 -> vector<16x128xf32>
      %c13_142 = arith.constant 13 : index
      %601 = memref.load %arg5[%c13_142] : memref<49xf32, #tpu.memory_space<smem>>
      %602 = vector.broadcast %601 : f32 to vector<16x128xf32>
      %603 = arith.mulf %600, %602 : vector<16x128xf32>
      %604 = arith.addf %599, %603 : vector<16x128xf32>
      %c1_i32_143 = arith.constant 1 : i32
      %605 = tpu.dynamic_rotate %530 by %c1_i32_143 dim 0 : vector<24x128xf32>, i32 -> vector<24x128xf32>
      %606 = vector.extract_strided_slice %605 {offsets = [0, 0], sizes = [16, 128], strides = [1, 1]} : vector<24x128xf32> to vector<16x128xf32>
      %c3_i32_144 = arith.constant 3 : i32
      %607 = tpu.dynamic_rotate %606 by %c3_i32_144 dim 1 : vector<16x128xf32>, i32 -> vector<16x128xf32>
      %c14_145 = arith.constant 14 : index
      %608 = memref.load %arg5[%c14_145] : memref<49xf32, #tpu.memory_space<smem>>
      %609 = vector.broadcast %608 : f32 to vector<16x128xf32>
      %610 = arith.mulf %607, %609 : vector<16x128xf32>
      %611 = arith.addf %604, %610 : vector<16x128xf32>
      %c2_i32_146 = arith.constant 2 : i32
      %612 = tpu.dynamic_rotate %606 by %c2_i32_146 dim 1 : vector<16x128xf32>, i32 -> vector<16x128xf32>
      %c15_147 = arith.constant 15 : index
      %613 = memref.load %arg5[%c15_147] : memref<49xf32, #tpu.memory_space<smem>>
      %614 = vector.broadcast %613 : f32 to vector<16x128xf32>
      %615 = arith.mulf %612, %614 : vector<16x128xf32>
      %616 = arith.addf %611, %615 : vector<16x128xf32>
      %c1_i32_148 = arith.constant 1 : i32
      %617 = tpu.dynamic_rotate %606 by %c1_i32_148 dim 1 : vector<16x128xf32>, i32 -> vector<16x128xf32>
      %c16_149 = arith.constant 16 : index
      %618 = memref.load %arg5[%c16_149] : memref<49xf32, #tpu.memory_space<smem>>
      %619 = vector.broadcast %618 : f32 to vector<16x128xf32>
      %620 = arith.mulf %617, %619 : vector<16x128xf32>
      %621 = arith.addf %616, %620 : vector<16x128xf32>
      %c17_150 = arith.constant 17 : index
      %622 = memref.load %arg5[%c17_150] : memref<49xf32, #tpu.memory_space<smem>>
      %623 = vector.broadcast %622 : f32 to vector<16x128xf32>
      %624 = arith.mulf %606, %623 : vector<16x128xf32>
      %625 = arith.addf %621, %624 : vector<16x128xf32>
      %c127_i32_151 = arith.constant 127 : i32
      %626 = tpu.dynamic_rotate %606 by %c127_i32_151 dim 1 : vector<16x128xf32>, i32 -> vector<16x128xf32>
      %c18_152 = arith.constant 18 : index
      %627 = memref.load %arg5[%c18_152] : memref<49xf32, #tpu.memory_space<smem>>
      %628 = vector.broadcast %627 : f32 to vector<16x128xf32>
      %629 = arith.mulf %626, %628 : vector<16x128xf32>
      %630 = arith.addf %625, %629 : vector<16x128xf32>
      %c126_i32_153 = arith.constant 126 : i32
      %631 = tpu.dynamic_rotate %606 by %c126_i32_153 dim 1 : vector<16x128xf32>, i32 -> vector<16x128xf32>
      %c19_154 = arith.constant 19 : index
      %632 = memref.load %arg5[%c19_154] : memref<49xf32, #tpu.memory_space<smem>>
      %633 = vector.broadcast %632 : f32 to vector<16x128xf32>
      %634 = arith.mulf %631, %633 : vector<16x128xf32>
      %635 = arith.addf %630, %634 : vector<16x128xf32>
      %c125_i32_155 = arith.constant 125 : i32
      %636 = tpu.dynamic_rotate %606 by %c125_i32_155 dim 1 : vector<16x128xf32>, i32 -> vector<16x128xf32>
      %c20_156 = arith.constant 20 : index
      %637 = memref.load %arg5[%c20_156] : memref<49xf32, #tpu.memory_space<smem>>
      %638 = vector.broadcast %637 : f32 to vector<16x128xf32>
      %639 = arith.mulf %636, %638 : vector<16x128xf32>
      %640 = arith.addf %635, %639 : vector<16x128xf32>
      %641 = vector.extract_strided_slice %530 {offsets = [0, 0], sizes = [16, 128], strides = [1, 1]} : vector<24x128xf32> to vector<16x128xf32>
      %c3_i32_157 = arith.constant 3 : i32
      %642 = tpu.dynamic_rotate %641 by %c3_i32_157 dim 1 : vector<16x128xf32>, i32 -> vector<16x128xf32>
      %c21_158 = arith.constant 21 : index
      %643 = memref.load %arg5[%c21_158] : memref<49xf32, #tpu.memory_space<smem>>
      %644 = vector.broadcast %643 : f32 to vector<16x128xf32>
      %645 = arith.mulf %642, %644 : vector<16x128xf32>
      %646 = arith.addf %640, %645 : vector<16x128xf32>
      %c2_i32_159 = arith.constant 2 : i32
      %647 = tpu.dynamic_rotate %641 by %c2_i32_159 dim 1 : vector<16x128xf32>, i32 -> vector<16x128xf32>
      %c22_160 = arith.constant 22 : index
      %648 = memref.load %arg5[%c22_160] : memref<49xf32, #tpu.memory_space<smem>>
      %649 = vector.broadcast %648 : f32 to vector<16x128xf32>
      %650 = arith.mulf %647, %649 : vector<16x128xf32>
      %651 = arith.addf %646, %650 : vector<16x128xf32>
      %c1_i32_161 = arith.constant 1 : i32
      %652 = tpu.dynamic_rotate %641 by %c1_i32_161 dim 1 : vector<16x128xf32>, i32 -> vector<16x128xf32>
      %c23_162 = arith.constant 23 : index
      %653 = memref.load %arg5[%c23_162] : memref<49xf32, #tpu.memory_space<smem>>
      %654 = vector.broadcast %653 : f32 to vector<16x128xf32>
      %655 = arith.mulf %652, %654 : vector<16x128xf32>
      %656 = arith.addf %651, %655 : vector<16x128xf32>
      %c24_163 = arith.constant 24 : index
      %657 = memref.load %arg5[%c24_163] : memref<49xf32, #tpu.memory_space<smem>>
      %658 = vector.broadcast %657 : f32 to vector<16x128xf32>
      %659 = arith.mulf %641, %658 : vector<16x128xf32>
      %660 = arith.addf %656, %659 : vector<16x128xf32>
      %c127_i32_164 = arith.constant 127 : i32
      %661 = tpu.dynamic_rotate %641 by %c127_i32_164 dim 1 : vector<16x128xf32>, i32 -> vector<16x128xf32>
      %c25_165 = arith.constant 25 : index
      %662 = memref.load %arg5[%c25_165] : memref<49xf32, #tpu.memory_space<smem>>
      %663 = vector.broadcast %662 : f32 to vector<16x128xf32>
      %664 = arith.mulf %661, %663 : vector<16x128xf32>
      %665 = arith.addf %660, %664 : vector<16x128xf32>
      %c126_i32_166 = arith.constant 126 : i32
      %666 = tpu.dynamic_rotate %641 by %c126_i32_166 dim 1 : vector<16x128xf32>, i32 -> vector<16x128xf32>
      %c26_167 = arith.constant 26 : index
      %667 = memref.load %arg5[%c26_167] : memref<49xf32, #tpu.memory_space<smem>>
      %668 = vector.broadcast %667 : f32 to vector<16x128xf32>
      %669 = arith.mulf %666, %668 : vector<16x128xf32>
      %670 = arith.addf %665, %669 : vector<16x128xf32>
      %c125_i32_168 = arith.constant 125 : i32
      %671 = tpu.dynamic_rotate %641 by %c125_i32_168 dim 1 : vector<16x128xf32>, i32 -> vector<16x128xf32>
      %c27_169 = arith.constant 27 : index
      %672 = memref.load %arg5[%c27_169] : memref<49xf32, #tpu.memory_space<smem>>
      %673 = vector.broadcast %672 : f32 to vector<16x128xf32>
      %674 = arith.mulf %671, %673 : vector<16x128xf32>
      %675 = arith.addf %670, %674 : vector<16x128xf32>
      %c23_i32_170 = arith.constant 23 : i32
      %676 = tpu.dynamic_rotate %530 by %c23_i32_170 dim 0 : vector<24x128xf32>, i32 -> vector<24x128xf32>
      %677 = vector.extract_strided_slice %676 {offsets = [0, 0], sizes = [16, 128], strides = [1, 1]} : vector<24x128xf32> to vector<16x128xf32>
      %c3_i32_171 = arith.constant 3 : i32
      %678 = tpu.dynamic_rotate %677 by %c3_i32_171 dim 1 : vector<16x128xf32>, i32 -> vector<16x128xf32>
      %c28_172 = arith.constant 28 : index
      %679 = memref.load %arg5[%c28_172] : memref<49xf32, #tpu.memory_space<smem>>
      %680 = vector.broadcast %679 : f32 to vector<16x128xf32>
      %681 = arith.mulf %678, %680 : vector<16x128xf32>
      %682 = arith.addf %675, %681 : vector<16x128xf32>
      %c2_i32_173 = arith.constant 2 : i32
      %683 = tpu.dynamic_rotate %677 by %c2_i32_173 dim 1 : vector<16x128xf32>, i32 -> vector<16x128xf32>
      %c29_174 = arith.constant 29 : index
      %684 = memref.load %arg5[%c29_174] : memref<49xf32, #tpu.memory_space<smem>>
      %685 = vector.broadcast %684 : f32 to vector<16x128xf32>
      %686 = arith.mulf %683, %685 : vector<16x128xf32>
      %687 = arith.addf %682, %686 : vector<16x128xf32>
      %c1_i32_175 = arith.constant 1 : i32
      %688 = tpu.dynamic_rotate %677 by %c1_i32_175 dim 1 : vector<16x128xf32>, i32 -> vector<16x128xf32>
      %c30_176 = arith.constant 30 : index
      %689 = memref.load %arg5[%c30_176] : memref<49xf32, #tpu.memory_space<smem>>
      %690 = vector.broadcast %689 : f32 to vector<16x128xf32>
      %691 = arith.mulf %688, %690 : vector<16x128xf32>
      %692 = arith.addf %687, %691 : vector<16x128xf32>
      %c31_177 = arith.constant 31 : index
      %693 = memref.load %arg5[%c31_177] : memref<49xf32, #tpu.memory_space<smem>>
      %694 = vector.broadcast %693 : f32 to vector<16x128xf32>
      %695 = arith.mulf %677, %694 : vector<16x128xf32>
      %696 = arith.addf %692, %695 : vector<16x128xf32>
      %c127_i32_178 = arith.constant 127 : i32
      %697 = tpu.dynamic_rotate %677 by %c127_i32_178 dim 1 : vector<16x128xf32>, i32 -> vector<16x128xf32>
      %c32_179 = arith.constant 32 : index
      %698 = memref.load %arg5[%c32_179] : memref<49xf32, #tpu.memory_space<smem>>
      %699 = vector.broadcast %698 : f32 to vector<16x128xf32>
      %700 = arith.mulf %697, %699 : vector<16x128xf32>
      %701 = arith.addf %696, %700 : vector<16x128xf32>
      %c126_i32_180 = arith.constant 126 : i32
      %702 = tpu.dynamic_rotate %677 by %c126_i32_180 dim 1 : vector<16x128xf32>, i32 -> vector<16x128xf32>
      %c33_181 = arith.constant 33 : index
      %703 = memref.load %arg5[%c33_181] : memref<49xf32, #tpu.memory_space<smem>>
      %704 = vector.broadcast %703 : f32 to vector<16x128xf32>
      %705 = arith.mulf %702, %704 : vector<16x128xf32>
      %706 = arith.addf %701, %705 : vector<16x128xf32>
      %c125_i32_182 = arith.constant 125 : i32
      %707 = tpu.dynamic_rotate %677 by %c125_i32_182 dim 1 : vector<16x128xf32>, i32 -> vector<16x128xf32>
      %c34_183 = arith.constant 34 : index
      %708 = memref.load %arg5[%c34_183] : memref<49xf32, #tpu.memory_space<smem>>
      %709 = vector.broadcast %708 : f32 to vector<16x128xf32>
      %710 = arith.mulf %707, %709 : vector<16x128xf32>
      %711 = arith.addf %706, %710 : vector<16x128xf32>
      %c22_i32_184 = arith.constant 22 : i32
      %712 = tpu.dynamic_rotate %530 by %c22_i32_184 dim 0 : vector<24x128xf32>, i32 -> vector<24x128xf32>
      %713 = vector.extract_strided_slice %712 {offsets = [0, 0], sizes = [16, 128], strides = [1, 1]} : vector<24x128xf32> to vector<16x128xf32>
      %c3_i32_185 = arith.constant 3 : i32
      %714 = tpu.dynamic_rotate %713 by %c3_i32_185 dim 1 : vector<16x128xf32>, i32 -> vector<16x128xf32>
      %c35_186 = arith.constant 35 : index
      %715 = memref.load %arg5[%c35_186] : memref<49xf32, #tpu.memory_space<smem>>
      %716 = vector.broadcast %715 : f32 to vector<16x128xf32>
      %717 = arith.mulf %714, %716 : vector<16x128xf32>
      %718 = arith.addf %711, %717 : vector<16x128xf32>
      %c2_i32_187 = arith.constant 2 : i32
      %719 = tpu.dynamic_rotate %713 by %c2_i32_187 dim 1 : vector<16x128xf32>, i32 -> vector<16x128xf32>
      %c36_188 = arith.constant 36 : index
      %720 = memref.load %arg5[%c36_188] : memref<49xf32, #tpu.memory_space<smem>>
      %721 = vector.broadcast %720 : f32 to vector<16x128xf32>
      %722 = arith.mulf %719, %721 : vector<16x128xf32>
      %723 = arith.addf %718, %722 : vector<16x128xf32>
      %c1_i32_189 = arith.constant 1 : i32
      %724 = tpu.dynamic_rotate %713 by %c1_i32_189 dim 1 : vector<16x128xf32>, i32 -> vector<16x128xf32>
      %c37_190 = arith.constant 37 : index
      %725 = memref.load %arg5[%c37_190] : memref<49xf32, #tpu.memory_space<smem>>
      %726 = vector.broadcast %725 : f32 to vector<16x128xf32>
      %727 = arith.mulf %724, %726 : vector<16x128xf32>
      %728 = arith.addf %723, %727 : vector<16x128xf32>
      %c38_191 = arith.constant 38 : index
      %729 = memref.load %arg5[%c38_191] : memref<49xf32, #tpu.memory_space<smem>>
      %730 = vector.broadcast %729 : f32 to vector<16x128xf32>
      %731 = arith.mulf %713, %730 : vector<16x128xf32>
      %732 = arith.addf %728, %731 : vector<16x128xf32>
      %c127_i32_192 = arith.constant 127 : i32
      %733 = tpu.dynamic_rotate %713 by %c127_i32_192 dim 1 : vector<16x128xf32>, i32 -> vector<16x128xf32>
      %c39_193 = arith.constant 39 : index
      %734 = memref.load %arg5[%c39_193] : memref<49xf32, #tpu.memory_space<smem>>
      %735 = vector.broadcast %734 : f32 to vector<16x128xf32>
      %736 = arith.mulf %733, %735 : vector<16x128xf32>
      %737 = arith.addf %732, %736 : vector<16x128xf32>
      %c126_i32_194 = arith.constant 126 : i32
      %738 = tpu.dynamic_rotate %713 by %c126_i32_194 dim 1 : vector<16x128xf32>, i32 -> vector<16x128xf32>
      %c40_195 = arith.constant 40 : index
      %739 = memref.load %arg5[%c40_195] : memref<49xf32, #tpu.memory_space<smem>>
      %740 = vector.broadcast %739 : f32 to vector<16x128xf32>
      %741 = arith.mulf %738, %740 : vector<16x128xf32>
      %742 = arith.addf %737, %741 : vector<16x128xf32>
      %c125_i32_196 = arith.constant 125 : i32
      %743 = tpu.dynamic_rotate %713 by %c125_i32_196 dim 1 : vector<16x128xf32>, i32 -> vector<16x128xf32>
      %c41_197 = arith.constant 41 : index
      %744 = memref.load %arg5[%c41_197] : memref<49xf32, #tpu.memory_space<smem>>
      %745 = vector.broadcast %744 : f32 to vector<16x128xf32>
      %746 = arith.mulf %743, %745 : vector<16x128xf32>
      %747 = arith.addf %742, %746 : vector<16x128xf32>
      %c21_i32_198 = arith.constant 21 : i32
      %748 = tpu.dynamic_rotate %530 by %c21_i32_198 dim 0 : vector<24x128xf32>, i32 -> vector<24x128xf32>
      %749 = vector.extract_strided_slice %748 {offsets = [0, 0], sizes = [16, 128], strides = [1, 1]} : vector<24x128xf32> to vector<16x128xf32>
      %c3_i32_199 = arith.constant 3 : i32
      %750 = tpu.dynamic_rotate %749 by %c3_i32_199 dim 1 : vector<16x128xf32>, i32 -> vector<16x128xf32>
      %c42_200 = arith.constant 42 : index
      %751 = memref.load %arg5[%c42_200] : memref<49xf32, #tpu.memory_space<smem>>
      %752 = vector.broadcast %751 : f32 to vector<16x128xf32>
      %753 = arith.mulf %750, %752 : vector<16x128xf32>
      %754 = arith.addf %747, %753 : vector<16x128xf32>
      %c2_i32_201 = arith.constant 2 : i32
      %755 = tpu.dynamic_rotate %749 by %c2_i32_201 dim 1 : vector<16x128xf32>, i32 -> vector<16x128xf32>
      %c43_202 = arith.constant 43 : index
      %756 = memref.load %arg5[%c43_202] : memref<49xf32, #tpu.memory_space<smem>>
      %757 = vector.broadcast %756 : f32 to vector<16x128xf32>
      %758 = arith.mulf %755, %757 : vector<16x128xf32>
      %759 = arith.addf %754, %758 : vector<16x128xf32>
      %c1_i32_203 = arith.constant 1 : i32
      %760 = tpu.dynamic_rotate %749 by %c1_i32_203 dim 1 : vector<16x128xf32>, i32 -> vector<16x128xf32>
      %c44_204 = arith.constant 44 : index
      %761 = memref.load %arg5[%c44_204] : memref<49xf32, #tpu.memory_space<smem>>
      %762 = vector.broadcast %761 : f32 to vector<16x128xf32>
      %763 = arith.mulf %760, %762 : vector<16x128xf32>
      %764 = arith.addf %759, %763 : vector<16x128xf32>
      %c45_205 = arith.constant 45 : index
      %765 = memref.load %arg5[%c45_205] : memref<49xf32, #tpu.memory_space<smem>>
      %766 = vector.broadcast %765 : f32 to vector<16x128xf32>
      %767 = arith.mulf %749, %766 : vector<16x128xf32>
      %768 = arith.addf %764, %767 : vector<16x128xf32>
      %c127_i32_206 = arith.constant 127 : i32
      %769 = tpu.dynamic_rotate %749 by %c127_i32_206 dim 1 : vector<16x128xf32>, i32 -> vector<16x128xf32>
      %c46_207 = arith.constant 46 : index
      %770 = memref.load %arg5[%c46_207] : memref<49xf32, #tpu.memory_space<smem>>
      %771 = vector.broadcast %770 : f32 to vector<16x128xf32>
      %772 = arith.mulf %769, %771 : vector<16x128xf32>
      %773 = arith.addf %768, %772 : vector<16x128xf32>
      %c126_i32_208 = arith.constant 126 : i32
      %774 = tpu.dynamic_rotate %749 by %c126_i32_208 dim 1 : vector<16x128xf32>, i32 -> vector<16x128xf32>
      %c47_209 = arith.constant 47 : index
      %775 = memref.load %arg5[%c47_209] : memref<49xf32, #tpu.memory_space<smem>>
      %776 = vector.broadcast %775 : f32 to vector<16x128xf32>
      %777 = arith.mulf %774, %776 : vector<16x128xf32>
      %778 = arith.addf %773, %777 : vector<16x128xf32>
      %c125_i32_210 = arith.constant 125 : i32
      %779 = tpu.dynamic_rotate %749 by %c125_i32_210 dim 1 : vector<16x128xf32>, i32 -> vector<16x128xf32>
      %c48_211 = arith.constant 48 : index
      %780 = memref.load %arg5[%c48_211] : memref<49xf32, #tpu.memory_space<smem>>
      %781 = vector.broadcast %780 : f32 to vector<16x128xf32>
      %782 = arith.mulf %779, %781 : vector<16x128xf32>
      %783 = arith.addf %778, %782 : vector<16x128xf32>
      %784 = vector.extract_strided_slice %783 {offsets = [0, 0], sizes = [16, 16], strides = [1, 1]} : vector<16x128xf32> to vector<16x16xf32>
      %785 = arith.negf %784 : vector<16x16xf32>
      %786 = math.exp %785 : vector<16x16xf32>
      %cst_212 = arith.constant 1.000000e+00 : f32
      %787 = vector.broadcast %cst_212 : f32 to vector<16x16xf32>
      %788 = arith.addf %787, %786 : vector<16x16xf32>
      %789 = arith.divf %787, %788 : vector<16x16xf32>
      %c0_213 = arith.constant 0 : index
      %c0_214 = arith.constant 0 : index
      %c0_215 = arith.constant 0 : index
      %c0_216 = arith.constant 0 : index
      %790 = vector.load %arg6[%c0_213, %c0_214, %c0_215, %c0_216] : memref<1x1x16x16xf32, #tpu.memory_space<vmem>>, vector<1x1x16x16xf32>
      %791 = vector.shape_cast %790 : vector<1x1x16x16xf32> to vector<16x16xf32>
      %792 = vector.shape_cast %789 : vector<16x16xf32> to vector<1x1x16x16xf32>
      tpu.vector_store %arg6[%c0_213, %c0_214, %c0_215, %c0_216], %792 {strides = array<i32>} : memref<1x1x16x16xf32, #tpu.memory_space<vmem>>, vector<1x1x16x16xf32>,
    } else {
    }
    return
  }
  func.func @transform_0(%arg0: i32, %arg1: i32) -> (i32, i32, i32, i32) {
    %c0_i32 = arith.constant 0 : i32
    %c0_i32_0 = arith.constant 0 : i32
    %c0_i32_1 = arith.constant 0 : i32
    return %arg0, %arg1, %c0_i32, %c0_i32_0 : i32, i32, i32, i32
  }
  func.func @transform_1(%arg0: i32, %arg1: i32) -> i32 {
    %c0_i32 = arith.constant 0 : i32
    %c0_i32_0 = arith.constant 0 : i32
    return %c0_i32 : i32
  }
  func.func @transform_2(%arg0: i32, %arg1: i32) -> i32 {
    %c0_i32 = arith.constant 0 : i32
    %c0_i32_0 = arith.constant 0 : i32
    return %c0_i32 : i32
  }
  func.func @transform_3(%arg0: i32, %arg1: i32) -> i32 {
    %c0_i32 = arith.constant 0 : i32
    %c0_i32_0 = arith.constant 0 : i32
    return %c0_i32 : i32
  }
  func.func @transform_4(%arg0: i32, %arg1: i32) -> (i32, i32, i32, i32) {
    %c0_i32 = arith.constant 0 : i32
    %c0_i32_0 = arith.constant 0 : i32
    %c0_i32_1 = arith.constant 0 : i32
    %c0_i32_2 = arith.constant 0 : i32
    return %arg0, %c0_i32, %c0_i32_0, %c0_i32_1 : i32, i32, i32, i32
  }
}

</mosaic_0001>

<llo_original>
// kernel: tpu_custom_call.1
$region0: #{tpu_custom_call.1}
  #allocation0 [shape = 'u32[]', space=smem, size = 0x4, offset = 0x4, fixed_abs, tag = 'smem constant byte address 0x4 - core index']
  #allocation1 [shape = 'u32[72,128]{1,0:T(1,128)}', space=vmem, size = 0x9000, scoped, tag = 'internal scratch']
  #allocation2 [shape = 'f32[2,24,128]{2,1,0:T(8,128)}', space=vmem, size = 0x6000, scoped, tag = 'scratch operand']
  %s0 = inlined_call_operand.hbm [shape: f32[2,4,16,16], index: 0, kind: input, shape index: {}]
  %s1 = inlined_call_operand.hbm [shape: f32[98], index: 1, kind: input, shape index: {}]
  %s2 = inlined_call_operand.vmem [shape: f32[2], index: 2, kind: input, shape index: {}]
  %s3 = inlined_call_operand.vmem [shape: f32[49], index: 3, kind: input, shape index: {}]
  %s4 = inlined_call_operand.hbm [shape: f32[2,1,16,16], index: 4, kind: output, shape index: {}]
  %s5 = sld [smem:[#allocation0]]
  $region84: #{tpu_custom_call.1} parent=0
    _
  %s7 = ssub.s32 1, %s5
  %s8 = scalar_select 0, %s7, %s5
  $region1: #{tpu_custom_call.1} parent=0
    #allocation3 [shape = 'u8[65536]{0}', space=vmem, size = 0x10000, scoped, tag = 'input window, operand 0']
    #allocation4 [shape = 's32[2]{0}', space=sflag, size = 0x8, scoped, tag = 'scoped memory for tpu_custom_call.1']
    #allocation5 [shape = 's32[2]{0}', space=sflag, size = 0x8, scoped, tag = 'scoped memory for tpu_custom_call.1']
    #allocation6 [shape = 's32[2]{0}', space=sflag, size = 0x8, scoped, tag = 'scoped memory for tpu_custom_call.1']
    #allocation7 [shape = 's32[2]{0}', space=sflag, size = 0x8, scoped, tag = 'scoped memory for tpu_custom_call.1']
    #allocation8 [shape = 'u8[512]{0}', space=smem, size = 0x200, scoped, tag = 'input window, operand 1, single buffered']
    #allocation9 [shape = 'u8[512]{0}', space=smem, size = 0x200, scoped, tag = 'input window, operand 2, single buffered']
    #allocation10 [shape = 'u8[512]{0}', space=smem, size = 0x200, scoped, tag = 'input window, operand 3, single buffered']
    #allocation11 [shape = 's32[1]{0}', space=sflag, size = 0x4, scoped, tag = 'scoped memory for tpu_custom_call.1']
    #allocation12 [shape = 'u8[16384]{0}', space=vmem, size = 0x4000, scoped, tag = 'output window, operand 0']
    %9 = vsyncpa [#allocation4], 0
    %s10 = scalar_lea.sflag [#allocation4], 1
    %11 = vsyncpa %s10, 0
    %12 = vsyncpa [#allocation6], 0
    %13 = vsyncpa [#allocation7], 0
    %14 = vsyncpa [#allocation11], 0
    %15 = vsyncpa [#allocation5], 0
    %s16 = scalar_lea.sflag [#allocation5], 1
    %17 = vsyncpa %s16, 0
    loop: start=0, step=1, limit=4
    $region2: #{tpu_custom_call.1} parent=1 // loop_pre_header
      _
    $region3: #{tpu_custom_call.1} parent=1 // loop_header
      %s19 = sphi 0, %s23
      %p20 = scmp.ge.s32.totalorder %s19, 4
      %s26 = sphi 0, %s38
      %s27 = sphi 0, %s34
      %s28 = sphi 0, %s26
      %s29 = sphi 0, %s27
      %s30 = sphi 0, %s28
      %s31 = sphi 0, %s29
      %s43 = sphi 0, %s45
      %s46 = sphi 0, %s43
      %s47 = sphi 0, %s46
      %s63 = sphi 0, %s47
      %s67 = sphi 0, %s67
      %s69 = sphi 0, %s67
      %s70 = sphi 0, %s69
      %s84 = sphi 0, %s70
      %s88 = sphi 0, %s88
      %s90 = sphi 0, %s88
      %s91 = sphi 0, %s90
      %s105 = sphi 0, %s91
      %s109 = sphi 0, %s109
      %s111 = sphi 0, %s109
      %s112 = sphi 0, %s111
      %s126 = sphi 0, %s112
      %s132 = sphi 0, %s134
      %s135 = sphi 0, %s132
      %s136 = sphi 0, %s135
      %s152 = sphi 0, %s136
    $region4: #{tpu_custom_call.1} parent=1 // loop_header_branch
      %22 = sbr.rel (%p20) target = $region8
    $region5: #{tpu_custom_call.1} parent=1 // loop_body
      %s24 = ssub.s32 %s19, 1
      %s25 = ssub.s32 %s19, 2
      %s32 = sadd.s32 1, %s27
      %p33 = scmp.ge.s32.totalorder %s32, 1
      %s34 = scalar_select %p33, 0, %s32
      %s35 = sadd.s32 1, %s26
      %s36 = scalar_select %p33, %s35, %s26
      %p37 = scmp.ge.s32.totalorder %s36, 2
      %s38 = scalar_select %p37, 0, %s36
      %s39 = ssub.s32 %s26, %s38
      %s40 = ssub.s32 %s27, %s34
      %s41 = sor.u32 %s39, %s40
      %p42 = scmp.eq.s32.totalorder %s41, 0
      %s44 = sadd.s32 %s43, 1
      %s45 = scalar_select %p42, %s43, %s44
      %p48 = pneg %p42
      %p49 = scmp.eq.s32.totalorder %s19, 1
      %p50 = por %p48, %p49
      %p51 = scmp.ne.s32.totalorder %s43, %s46
      %p52 = scmp.eq.s32.totalorder %s19, 0
      %p53 = por %p51, %p52
      %p54 = scmp.ne.s32.totalorder %s43, %s46
      %p55 = scmp.eq.s32.totalorder %s24, 1
      %p56 = por %p54, %p55
      %p57 = scmp.ne.s32.totalorder %s46, %s47
      %p58 = scmp.eq.s32.totalorder %s24, 0
      %p59 = por %p57, %p58
      %p60 = scmp.ne.s32.totalorder %s46, %s47
      %p61 = scmp.eq.s32.totalorder %s25, 1
      %p62 = por %p60, %p61
      %p64 = scmp.ne.s32.totalorder %s47, %s63
      %p65 = scmp.eq.s32.totalorder %s25, 0
      %p66 = por %p64, %p65
      %s68 = sadd.s32 %s67, 1
      %p71 = scmp.eq.s32.totalorder %s19, 1
      %p72 = scmp.ne.s32.totalorder %s67, %s69
      %p73 = scmp.eq.s32.totalorder %s19, 0
      %p74 = por %p72, %p73
      %p75 = scmp.ne.s32.totalorder %s67, %s69
      %p76 = scmp.eq.s32.totalorder %s24, 1
      %p77 = por %p75, %p76
      %p78 = scmp.ne.s32.totalorder %s69, %s70
      %p79 = scmp.eq.s32.totalorder %s24, 0
      %p80 = por %p78, %p79
      %p81 = scmp.ne.s32.totalorder %s69, %s70
      %p82 = scmp.eq.s32.totalorder %s25, 1
      %p83 = por %p81, %p82
      %p85 = scmp.ne.s32.totalorder %s70, %s84
      %p86 = scmp.eq.s32.totalorder %s25, 0
      %p87 = por %p85, %p86
      %s89 = sadd.s32 %s88, 1
      %p92 = scmp.eq.s32.totalorder %s19, 1
      %p93 = scmp.ne.s32.totalorder %s88, %s90
      %p94 = scmp.eq.s32.totalorder %s19, 0
      %p95 = por %p93, %p94
      %p96 = scmp.ne.s32.totalorder %s88, %s90
      %p97 = scmp.eq.s32.totalorder %s24, 1
      %p98 = por %p96, %p97
      %p99 = scmp.ne.s32.totalorder %s90, %s91
      %p100 = scmp.eq.s32.totalorder %s24, 0
      %p101 = por %p99, %p100
      %p102 = scmp.ne.s32.totalorder %s90, %s91
      %p103 = scmp.eq.s32.totalorder %s25, 1
      %p104 = por %p102, %p103
      %p106 = scmp.ne.s32.totalorder %s91, %s105
      %p107 = scmp.eq.s32.totalorder %s25, 0
      %p108 = por %p106, %p107
      %s110 = sadd.s32 %s109, 1
      %p113 = scmp.eq.s32.totalorder %s19, 1
      %p114 = scmp.ne.s32.totalorder %s109, %s111
      %p115 = scmp.eq.s32.totalorder %s19, 0
      %p116 = por %p114, %p115
      %p117 = scmp.ne.s32.totalorder %s109, %s111
      %p118 = scmp.eq.s32.totalorder %s24, 1
      %p119 = por %p117, %p118
      %p120 = scmp.ne.s32.totalorder %s111, %s112
      %p121 = scmp.eq.s32.totalorder %s24, 0
      %p122 = por %p120, %p121
      %p123 = scmp.ne.s32.totalorder %s111, %s112
      %p124 = scmp.eq.s32.totalorder %s25, 1
      %p125 = por %p123, %p124
      %p127 = scmp.ne.s32.totalorder %s112, %s126
      %p128 = scmp.eq.s32.totalorder %s25, 0
      %p129 = por %p127, %p128
      %s130 = ssub.s32 %s26, %s38
      %p131 = scmp.eq.s32.totalorder %s130, 0
      %s133 = sadd.s32 %s132, 1
      %s134 = scalar_select %p131, %s132, %s133
      %p137 = pneg %p131
      %p138 = scmp.eq.s32.totalorder %s19, 1
      %p139 = por %p137, %p138
      %p140 = scmp.ne.s32.totalorder %s132, %s135
      %p141 = scmp.eq.s32.totalorder %s19, 0
      %p142 = por %p140, %p141
      %p143 = scmp.ne.s32.totalorder %s132, %s135
      %p144 = scmp.eq.s32.totalorder %s24, 1
      %p145 = por %p143, %p144
      %p146 = scmp.ne.s32.totalorder %s135, %s136
      %p147 = scmp.eq.s32.totalorder %s24, 0
      %p148 = por %p146, %p147
      %p149 = scmp.ne.s32.totalorder %s135, %s136
      %p150 = scmp.eq.s32.totalorder %s25, 1
      %p151 = por %p149, %p150
      %p153 = scmp.ne.s32.totalorder %s136, %s152
      %p154 = scmp.eq.s32.totalorder %s25, 0
      %p155 = por %p153, %p154
      %p156 = scmp.le.s32.totalorder 1, %s19
      %p157 = scmp.lt.s32.totalorder %s19, 3
      %p158 = pnand %p156, %p157
      %p159 = pneg %p158
      // Predicated region
      $region9: #{tpu_custom_call.1} parent=5 // pred_check
        _
      $region10: #{tpu_custom_call.1} parent=5 // pred_check_branch
        %161 = sbr.rel (%p158) target = $region12
      $region11: #{tpu_custom_call.1} parent=5 // pred_region
        %s162 = ssub.s32 %s19, 1
        // Predicated region
        $region13: #{tpu_custom_call.1} parent=11 // pred_check
          %p163 = pneg %p80
        $region14: #{tpu_custom_call.1} parent=11 // pred_check_branch
          %165 = sbr.rel (%p163) target = $region16
        $region15: #{tpu_custom_call.1} parent=11 // pred_region
          %167 = vsyncadd [#allocation6], 0
          %s169 = sshll.u32 %s1, 4
          %s170 = int_to_ptr.hbm [resolvable:$true] %s169
          %172 = dma.hbm_to_smem %s170, 16, [#allocation8], [#allocation6]
        $region16: #{tpu_custom_call.1} parent=11 // pred_fallthru
          _
        // Predicated region
        $region17: #{tpu_custom_call.1} parent=11 // pred_check
          %p173 = pneg %p101
        $region18: #{tpu_custom_call.1} parent=11 // pred_check_branch
          %175 = sbr.rel (%p173) target = $region20
        $region19: #{tpu_custom_call.1} parent=11 // pred_region
          %177 = vsyncadd [#allocation7], 0
          %s179 = sshll.u32 %s2, 4
          %s180 = int_to_ptr.vmem [resolvable:$true] %s179
          %182 = dma.vmem_to_smem %s180, 16, [#allocation9], [#allocation7]
        $region20: #{tpu_custom_call.1} parent=11 // pred_fallthru
          _
        // Predicated region
        $region21: #{tpu_custom_call.1} parent=11 // pred_check
          %p183 = pneg %p122
        $region22: #{tpu_custom_call.1} parent=11 // pred_check_branch
          %185 = sbr.rel (%p183) target = $region24
        $region23: #{tpu_custom_call.1} parent=11 // pred_region
          %187 = vsyncadd [#allocation11], 0
          %s189 = sshll.u32 %s3, 4
          %s190 = int_to_ptr.vmem [resolvable:$true] %s189
          %192 = dma.vmem_to_smem %s190, 16, [#allocation10], [#allocation11]
        $region24: #{tpu_custom_call.1} parent=11 // pred_fallthru
          _
      $region12: #{tpu_custom_call.1} parent=5 // pred_fallthru
        _
      %p193 = scmp.lt.s32.totalorder %s19, 2
      // Predicated region
      $region25: #{tpu_custom_call.1} parent=5 // pred_check
        %p194 = pneg %p193
      $region26: #{tpu_custom_call.1} parent=5 // pred_check_branch
        %196 = sbr.rel (%p194) target = $region28
      $region27: #{tpu_custom_call.1} parent=5 // pred_region
        // Predicated region
        $region29: #{tpu_custom_call.1} parent=27 // pred_check
          %p197 = pneg %p53
        $region30: #{tpu_custom_call.1} parent=27 // pred_check_branch
          %199 = sbr.rel (%p197) target = $region32
        $region31: #{tpu_custom_call.1} parent=27 // pred_region
          %s200 = sand.u32 %s43, 1
          %s201 = scalar_lea.sflag [#allocation4], %s200
          %s202 = sand.u32 %s43, 1
          %s203 = smul.addr %s202, 64
          %s204 = scalar_lea.vmem [#allocation3], %s203
          %s205 = smul.u32 4, %s27
          %207 = vsyncadd %s201, 0
          %s208 = smul.addr %s205, 2
          %s209 = smul.addr %s26, 8
          %s210 = sadd.s32 %s208, %s209
          %s211 = smul.addr %s210, 8
          %s212 = scalar_lea.hbm %s0, %s211
          %s213 = sshll.u32 %s212, 4
          %s214 = int_to_ptr.hbm [resolvable:$true] %s213
          %s215 = sshll.u32 %s204, 4
          %s216 = int_to_ptr.vmem [resolvable:$true] %s215
          %221 = dma.hbm_to_vmem [thread:$0]  %s214, 1024, %s216, %s201, 128, 128, 8
        $region32: #{tpu_custom_call.1} parent=27 // pred_fallthru
          _
      $region28: #{tpu_custom_call.1} parent=5 // pred_fallthru
        _
      %p222 = scmp.le.s32.totalorder 1, %s19
      %p223 = scmp.lt.s32.totalorder %s19, 3
      %p224 = pnand %p222, %p223
      %p225 = pneg %p224
      // Predicated region
      $region33: #{tpu_custom_call.1} parent=5 // pred_check
        _
      $region34: #{tpu_custom_call.1} parent=5 // pred_check_branch
        %227 = sbr.rel (%p224) target = $region36
      $region35: #{tpu_custom_call.1} parent=5 // pred_region
        %s228 = ssub.s32 %s19, 1
        %s229 = sand.u32 %s46, 1
        %s230 = scalar_lea.sflag [#allocation4], %s229
        %s231 = sand.u32 %s46, 1
        %s232 = smul.addr %s231, 64
        %s233 = scalar_lea.vmem [#allocation3], %s232
        // Predicated region
        $region37: #{tpu_custom_call.1} parent=35 // pred_check
          %p234 = pneg %p59
        $region38: #{tpu_custom_call.1} parent=35 // pred_check_branch
          %236 = sbr.rel (%p234) target = $region40
        $region39: #{tpu_custom_call.1} parent=35 // pred_region
          %238 = dma.done %s230, 1024
        $region40: #{tpu_custom_call.1} parent=35 // pred_fallthru
          _
        // Predicated region
        $region41: #{tpu_custom_call.1} parent=35 // pred_check
          %p239 = pneg %p80
        $region42: #{tpu_custom_call.1} parent=35 // pred_check_branch
          %241 = sbr.rel (%p239) target = $region44
        $region43: #{tpu_custom_call.1} parent=35 // pred_region
          %243 = dma.done [#allocation6], 16
        $region44: #{tpu_custom_call.1} parent=35 // pred_fallthru
          _
        // Predicated region
        $region45: #{tpu_custom_call.1} parent=35 // pred_check
          %p244 = pneg %p101
        $region46: #{tpu_custom_call.1} parent=35 // pred_check_branch
          %246 = sbr.rel (%p244) target = $region48
        $region47: #{tpu_custom_call.1} parent=35 // pred_region
          %248 = dma.done [#allocation7], 16
        $region48: #{tpu_custom_call.1} parent=35 // pred_fallthru
          _
        // Predicated region
        $region49: #{tpu_custom_call.1} parent=35 // pred_check
          %p249 = pneg %p122
        $region50: #{tpu_custom_call.1} parent=35 // pred_check_branch
          %251 = sbr.rel (%p249) target = $region52
        $region51: #{tpu_custom_call.1} parent=35 // pred_region
          %253 = dma.done [#allocation11], 16
        $region52: #{tpu_custom_call.1} parent=35 // pred_fallthru
          _
        %254 = sfence
        %s255 = sand.u32 %s46, 1
        %s256 = scalar_lea.sflag [#allocation4], %s255
        %s257 = sand.u32 %s46, 1
        %s258 = smul.addr %s257, 64
        %s259 = scalar_lea.vmem [#allocation3], %s258
        %p260 = pneg %p59
        %p261 = pneg %p56
        %p262 = pneg %p80
        %p263 = pneg %p77
        %p264 = pneg %p101
        %p265 = pneg %p98
        %p266 = pneg %p122
        %p267 = pneg %p119
        %p268 = pneg %p148
        %p269 = pneg %p145
        %s270 = sand.u32 %s135, 1
        %s271 = scalar_lea.sflag [#allocation5], %s270
        %s272 = sand.u32 %s135, 1
        %s273 = smul.addr %s272, 16
        %s274 = scalar_lea.vmem [#allocation12], %s273
        %s275 = smul.u32 4, %s29
        %v276 = vld [vmem:[%s233] sm:$0xff]
        %v277 = vld [vmem:[%s233 + $0x8] sm:$0xff]
        loop: start=1, step=1, limit=4
        $region53: #{tpu_custom_call.1} parent=35 // loop_pre_header
          _
        $region54: #{tpu_custom_call.1} parent=35 // loop_header
          %s279 = sphi 1, %s283
          %p280 = scmp.ge.s32.totalorder %s279, 4
          %v284 = vphi %v276, %v292
          %v285 = vphi %v277, %v293
          %v286 = vphi %v276, %v294
          %v287 = vphi %v277, %v295
        $region55: #{tpu_custom_call.1} parent=35 // loop_header_branch
          %282 = sbr.rel (%p280) target = $region59
        $region56: #{tpu_custom_call.1} parent=35 // loop_body
          %s288 = smul.u32 %s279, 16
          %s289 = scalar_lea.vmem %s233, %s288 [#allocation3]
          %v290 = vld [vmem:[%s289] sm:$0xff]
          %v291 = vld [vmem:[%s289 + $0x8] sm:$0xff]
          %v292 = vmax.f32 %v284, %v290
          %v293 = vmax.f32 %v285, %v291
          %v294 = vadd.f32 %v286, %v290
          %v295 = vadd.f32 %v287, %v291
        $region57: #{tpu_custom_call.1} parent=35 // loop_footer
          %s283 = sadd.s32 1, %s279
        $region58: #{tpu_custom_call.1} parent=35 // loop_footer_branch
          %278 = sbr.rel target = $region54
        $region59: #{tpu_custom_call.1} parent=35 // loop_exit
          _
        %p296 = scmp.eq.s32.totalorder %s29, 0
        // Predicated region
        $region60: #{tpu_custom_call.1} parent=35 // pred_check
          %p297 = pneg %p296
        $region61: #{tpu_custom_call.1} parent=35 // pred_check_branch
          %299 = sbr.rel (%p297) target = $region63
        $region62: #{tpu_custom_call.1} parent=35 // pred_region
          %300 = vst [vmem:[#allocation2] sm:$0xff] 0.0
          %301 = vst [vmem:[#allocation2 + $0x8] sm:$0xff] 0.0
          %302 = vst [vmem:[#allocation2 + $0x10] sm:$0xff] 0.0
          %303 = vst [vmem:[#allocation2 + $0x18] sm:$0xff] 0.0
          %304 = vst [vmem:[#allocation2 + $0x20] sm:$0xff] 0.0
          %305 = vst [vmem:[#allocation2 + $0x28] sm:$0xff] 0.0
          %vm306 = vcmask 130048
          %307 = vst.msk [vmem:[#allocation2] sm:$0xff] %vm306, %v284
          %308 = vst.msk [vmem:[#allocation2 + $0x8] sm:$0xff] %vm306, %v285
          %s309 = scalar_lea.vmem [#allocation2], 24
          %310 = vst.msk [vmem:[%s309] sm:$0xff] %vm306, %v286
          %311 = vst.msk [vmem:[%s309 + $0x8] sm:$0xff] %vm306, %v287
        $region63: #{tpu_custom_call.1} parent=35 // pred_fallthru
          _
        %p312 = scmp.gt.s32.totalorder %s29, 0
        // Predicated region
        $region64: #{tpu_custom_call.1} parent=35 // pred_check
          %p313 = pneg %p312
        $region65: #{tpu_custom_call.1} parent=35 // pred_check_branch
          %315 = sbr.rel (%p313) target = $region67
        $region66: #{tpu_custom_call.1} parent=35 // pred_region
          %v316 = vld [vmem:[#allocation2] sm:$0xff]
          %v317 = vld [vmem:[#allocation2 + $0x8] sm:$0xff]
          %v318 = vmax.f32 %v316, %v284
          %v319 = vmax.f32 %v317, %v285
          %vm320 = vcmask 130048
          %321 = vst.msk [vmem:[#allocation2] sm:$0xff] %vm320, %v318
          %322 = vst.msk [vmem:[#allocation2 + $0x8] sm:$0xff] %vm320, %v319
          %s323 = scalar_lea.vmem [#allocation2], 24
          %v324 = vld [vmem:[%s323] sm:$0xff]
          %v325 = vld [vmem:[%s323 + $0x8] sm:$0xff]
          %v326 = vadd.f32 %v324, %v286
          %v327 = vadd.f32 %v325, %v287
          %328 = vst.msk [vmem:[%s323] sm:$0xff] %vm320, %v326
          %329 = vst.msk [vmem:[%s323 + $0x8] sm:$0xff] %vm320, %v327
        $region67: #{tpu_custom_call.1} parent=35 // pred_fallthru
          _
        // Predicated region
        $region68: #{tpu_custom_call.1} parent=35 // pred_check
          %p330 = pneg %p296
        $region69: #{tpu_custom_call.1} parent=35 // pred_check_branch
          %332 = sbr.rel (%p330) target = $region71
        $region70: #{tpu_custom_call.1} parent=35 // pred_region
          %v333 = vld [vmem:[#allocation2] sm:$0xff]
          %v334 = vld [vmem:[#allocation2 + $0x8] sm:$0xff]
          %v335 = vld [vmem:[#allocation2 + $0x10] sm:$0xff]
          %s336 = scalar_lea.vmem [#allocation2], 24
          %v337 = vld [vmem:[%s336] sm:$0xff]
          %v338 = vld [vmem:[%s336 + $0x8] sm:$0xff]
          %v339 = vld [vmem:[%s336 + $0x10] sm:$0xff]
          %v340 = vmul.f32 %v337, 0.25
          %v341 = vmul.f32 %v338, 0.25
          %v342 = vmul.f32 %v339, 0.25
          %s343 = sld [smem:[#allocation9]]
          %v344 = vstv %s343
          %v345 = vrot.slane %v333, 5
          %v346 = vrot.slane %v334, 5
          %v347 = vrot.slane %v335, 5
          %v348 = vlaneseq
          %v349 = vshrl.u32 %v348, 7
          %vm350 = vcmp.lt.s32.totalorder %v349, 3
          %v351 = vsel %vm350, %v345, %v346
          %v352 = vsel %vm350, %v347, %v345
          %353 = vrot.lane.b32.xlu0 %v352, 3
          %v354 = vpop.permute.xlu0 %353
          %355 = vrot.lane.b32.xlu0 %v351, 3
          %v356 = vpop.permute.xlu0 %355
          %s357 = sld [smem:[#allocation8]]
          %v358 = vstv %s357
          %v359 = vmul.f32 %v354, %v358
          %v360 = vmul.f32 %v356, %v358
          %v361 = vadd.f32 %v344, %v359
          %v362 = vadd.f32 %v344, %v360
          %363 = vrot.lane.b32.xlu0 %v352, 2
          %v364 = vpop.permute.xlu0 %363
          %365 = vrot.lane.b32.xlu0 %v351, 2
          %v366 = vpop.permute.xlu0 %365
          %s367 = sld [smem:[#allocation8 + $0x1]]
          %v368 = vstv %s367
          %v369 = vmul.f32 %v364, %v368
          %v370 = vmul.f32 %v366, %v368
          %v371 = vadd.f32 %v361, %v369
          %v372 = vadd.f32 %v362, %v370
          %373 = vrot.lane.b32.xlu0 %v352, 1
          %v374 = vpop.permute.xlu0 %373
          %375 = vrot.lane.b32.xlu0 %v351, 1
          %v376 = vpop.permute.xlu0 %375
          %s377 = sld [smem:[#allocation8 + $0x2]]
          %v378 = vstv %s377
          %v379 = vmul.f32 %v374, %v378
          %v380 = vmul.f32 %v376, %v378
          %v381 = vadd.f32 %v371, %v379
          %v382 = vadd.f32 %v372, %v380
          %s383 = sld [smem:[#allocation8 + $0x3]]
          %v384 = vstv %s383
          %v385 = vmul.f32 %v352, %v384
          %v386 = vmul.f32 %v351, %v384
          %v387 = vadd.f32 %v381, %v385
          %v388 = vadd.f32 %v382, %v386
          %389 = vrot.lane.b32.xlu0 %v352, 127
          %v390 = vpop.permute.xlu0 %389
          %391 = vrot.lane.b32.xlu0 %v351, 127
          %v392 = vpop.permute.xlu0 %391
          %s393 = sld [smem:[#allocation8 + $0x4]]
          %v394 = vstv %s393
          %v395 = vmul.f32 %v390, %v394
          %v396 = vmul.f32 %v392, %v394
          %v397 = vadd.f32 %v387, %v395
          %v398 = vadd.f32 %v388, %v396
          %399 = vrot.lane.b32.xlu0 %v352, 126
          %v400 = vpop.permute.xlu0 %399
          %401 = vrot.lane.b32.xlu0 %v351, 126
          %v402 = vpop.permute.xlu0 %401
          %s403 = sld [smem:[#allocation8 + $0x5]]
          %v404 = vstv %s403
          %v405 = vmul.f32 %v400, %v404
          %v406 = vmul.f32 %v402, %v404
          %v407 = vadd.f32 %v397, %v405
          %v408 = vadd.f32 %v398, %v406
          %409 = vrot.lane.b32.xlu0 %v352, 125
          %v410 = vpop.permute.xlu0 %409
          %411 = vrot.lane.b32.xlu0 %v351, 125
          %v412 = vpop.permute.xlu0 %411
          %s413 = sld [smem:[#allocation8 + $0x6]]
          %v414 = vstv %s413
          %v415 = vmul.f32 %v410, %v414
          %v416 = vmul.f32 %v412, %v414
          %v417 = vadd.f32 %v407, %v415
          %v418 = vadd.f32 %v408, %v416
          %v419 = vrot.slane %v333, 6
          %v420 = vrot.slane %v334, 6
          %v421 = vrot.slane %v335, 6
          %vm422 = vcmp.lt.s32.totalorder %v349, 2
          %v423 = vsel %vm422, %v419, %v420
          %v424 = vsel %vm422, %v421, %v419
          %425 = vrot.lane.b32.xlu0 %v424, 3
          %v426 = vpop.permute.xlu0 %425
          %427 = vrot.lane.b32.xlu0 %v423, 3
          %v428 = vpop.permute.xlu0 %427
          %s429 = sld [smem:[#allocation8 + $0x7]]
          %v430 = vstv %s429
          %v431 = vmul.f32 %v426, %v430
          %v432 = vmul.f32 %v428, %v430
          %v433 = vadd.f32 %v417, %v431
          %v434 = vadd.f32 %v418, %v432
          %435 = vrot.lane.b32.xlu0 %v424, 2
          %v436 = vpop.permute.xlu0 %435
          %437 = vrot.lane.b32.xlu0 %v423, 2
          %v438 = vpop.permute.xlu0 %437
          %s439 = sld [smem:[#allocation8 + $0x8]]
          %v440 = vstv %s439
          %v441 = vmul.f32 %v436, %v440
          %v442 = vmul.f32 %v438, %v440
          %v443 = vadd.f32 %v433, %v441
          %v444 = vadd.f32 %v434, %v442
          %445 = vrot.lane.b32.xlu0 %v424, 1
          %v446 = vpop.permute.xlu0 %445
          %447 = vrot.lane.b32.xlu0 %v423, 1
          %v448 = vpop.permute.xlu0 %447
          %s449 = sld [smem:[#allocation8 + $0x9]]
          %v450 = vstv %s449
          %v451 = vmul.f32 %v446, %v450
          %v452 = vmul.f32 %v448, %v450
          %v453 = vadd.f32 %v443, %v451
          %v454 = vadd.f32 %v444, %v452
          %s455 = sld [smem:[#allocation8 + $0xa]]
          %v456 = vstv %s455
          %v457 = vmul.f32 %v424, %v456
          %v458 = vmul.f32 %v423, %v456
          %v459 = vadd.f32 %v453, %v457
          %v460 = vadd.f32 %v454, %v458
          %461 = vrot.lane.b32.xlu0 %v424, 127
          %v462 = vpop.permute.xlu0 %461
          %463 = vrot.lane.b32.xlu0 %v423, 127
          %v464 = vpop.permute.xlu0 %463
          %s465 = sld [smem:[#allocation8 + $0xb]]
          %v466 = vstv %s465
          %v467 = vmul.f32 %v462, %v466
          %v468 = vmul.f32 %v464, %v466
          %v469 = vadd.f32 %v459, %v467
          %v470 = vadd.f32 %v460, %v468
          %471 = vrot.lane.b32.xlu0 %v424, 126
          %v472 = vpop.permute.xlu0 %471
          %473 = vrot.lane.b32.xlu0 %v423, 126
          %v474 = vpop.permute.xlu0 %473
          %s475 = sld [smem:[#allocation8 + $0xc]]
          %v476 = vstv %s475
          %v477 = vmul.f32 %v472, %v476
          %v478 = vmul.f32 %v474, %v476
          %v479 = vadd.f32 %v469, %v477
          %v480 = vadd.f32 %v470, %v478
          %481 = vrot.lane.b32.xlu0 %v424, 125
          %v482 = vpop.permute.xlu0 %481
          %483 = vrot.lane.b32.xlu0 %v423, 125
          %v484 = vpop.permute.xlu0 %483
          %s485 = sld [smem:[#allocation8 + $0xd]]
          %v486 = vstv %s485
          %v487 = vmul.f32 %v482, %v486
          %v488 = vmul.f32 %v484, %v486
          %v489 = vadd.f32 %v479, %v487
          %v490 = vadd.f32 %v480, %v488
          %v491 = vrot.slane %v333, 7
          %v492 = vrot.slane %v334, 7
          %v493 = vrot.slane %v335, 7
          %vm494 = vcmp.lt.s32.totalorder %v349, 1
          %v495 = vsel %vm494, %v491, %v492
          %v496 = vsel %vm494, %v493, %v491
          %497 = vrot.lane.b32.xlu0 %v496, 3
          %v498 = vpop.permute.xlu0 %497
          %499 = vrot.lane.b32.xlu0 %v495, 3
          %v500 = vpop.permute.xlu0 %499
          %s501 = sld [smem:[#allocation8 + $0xe]]
          %v502 = vstv %s501
          %v503 = vmul.f32 %v498, %v502
          %v504 = vmul.f32 %v500, %v502
          %v505 = vadd.f32 %v489, %v503
          %v506 = vadd.f32 %v490, %v504
          %507 = vrot.lane.b32.xlu0 %v496, 2
          %v508 = vpop.permute.xlu0 %507
          %509 = vrot.lane.b32.xlu0 %v495, 2
          %v510 = vpop.permute.xlu0 %509
          %s511 = sld [smem:[#allocation8 + $0xf]]
          %v512 = vstv %s511
          %v513 = vmul.f32 %v508, %v512
          %v514 = vmul.f32 %v510, %v512
          %v515 = vadd.f32 %v505, %v513
          %v516 = vadd.f32 %v506, %v514
          %517 = vrot.lane.b32.xlu0 %v496, 1
          %v518 = vpop.permute.xlu0 %517
          %519 = vrot.lane.b32.xlu0 %v495, 1
          %v520 = vpop.permute.xlu0 %519
          %s521 = sld [smem:[#allocation8 + $0x10]]
          %v522 = vstv %s521
          %v523 = vmul.f32 %v518, %v522
          %v524 = vmul.f32 %v520, %v522
          %v525 = vadd.f32 %v515, %v523
          %v526 = vadd.f32 %v516, %v524
          %s527 = sld [smem:[#allocation8 + $0x11]]
          %v528 = vstv %s527
          %v529 = vmul.f32 %v496, %v528
          %v530 = vmul.f32 %v495, %v528
          %v531 = vadd.f32 %v525, %v529
          %v532 = vadd.f32 %v526, %v530
          %533 = vrot.lane.b32.xlu0 %v496, 127
          %v534 = vpop.permute.xlu0 %533
          %535 = vrot.lane.b32.xlu0 %v495, 127
          %v536 = vpop.permute.xlu0 %535
          %s537 = sld [smem:[#allocation8 + $0x12]]
          %v538 = vstv %s537
          %v539 = vmul.f32 %v534, %v538
          %v540 = vmul.f32 %v536, %v538
          %v541 = vadd.f32 %v531, %v539
          %v542 = vadd.f32 %v532, %v540
          %543 = vrot.lane.b32.xlu0 %v496, 126
          %v544 = vpop.permute.xlu0 %543
          %545 = vrot.lane.b32.xlu0 %v495, 126
          %v546 = vpop.permute.xlu0 %545
          %s547 = sld [smem:[#allocation8 + $0x13]]
          %v548 = vstv %s547
          %v549 = vmul.f32 %v544, %v548
          %v550 = vmul.f32 %v546, %v548
          %v551 = vadd.f32 %v541, %v549
          %v552 = vadd.f32 %v542, %v550
          %553 = vrot.lane.b32.xlu0 %v496, 125
          %v554 = vpop.permute.xlu0 %553
          %555 = vrot.lane.b32.xlu0 %v495, 125
          %v556 = vpop.permute.xlu0 %555
          %s557 = sld [smem:[#allocation8 + $0x14]]
          %v558 = vstv %s557
          %v559 = vmul.f32 %v554, %v558
          %v560 = vmul.f32 %v556, %v558
          %v561 = vadd.f32 %v551, %v559
          %v562 = vadd.f32 %v552, %v560
          %563 = vrot.lane.b32.xlu0 %v333, 3
          %v564 = vpop.permute.xlu0 %563
          %565 = vrot.lane.b32.xlu0 %v334, 3
          %v566 = vpop.permute.xlu0 %565
          %s567 = sld [smem:[#allocation8 + $0x15]]
          %v568 = vstv %s567
          %v569 = vmul.f32 %v564, %v568
          %v570 = vmul.f32 %v566, %v568
          %v571 = vadd.f32 %v561, %v569
          %v572 = vadd.f32 %v562, %v570
          %573 = vrot.lane.b32.xlu0 %v333, 2
          %v574 = vpop.permute.xlu0 %573
          %575 = vrot.lane.b32.xlu0 %v334, 2
          %v576 = vpop.permute.xlu0 %575
          %s577 = sld [smem:[#allocation8 + $0x16]]
          %v578 = vstv %s577
          %v579 = vmul.f32 %v574, %v578
          %v580 = vmul.f32 %v576, %v578
          %v581 = vadd.f32 %v571, %v579
          %v582 = vadd.f32 %v572, %v580
          %583 = vrot.lane.b32.xlu0 %v333, 1
          %v584 = vpop.permute.xlu0 %583
          %585 = vrot.lane.b32.xlu0 %v334, 1
          %v586 = vpop.permute.xlu0 %585
          %s587 = sld [smem:[#allocation8 + $0x17]]
          %v588 = vstv %s587
          %v589 = vmul.f32 %v584, %v588
          %v590 = vmul.f32 %v586, %v588
          %v591 = vadd.f32 %v581, %v589
          %v592 = vadd.f32 %v582, %v590
          %s593 = sld [smem:[#allocation8 + $0x18]]
          %v594 = vstv %s593
          %v595 = vmul.f32 %v333, %v594
          %v596 = vmul.f32 %v334, %v594
          %v597 = vadd.f32 %v591, %v595
          %v598 = vadd.f32 %v592, %v596
          %599 = vrot.lane.b32.xlu0 %v333, 127
          %v600 = vpop.permute.xlu0 %599
          %601 = vrot.lane.b32.xlu0 %v334, 127
          %v602 = vpop.permute.xlu0 %601
          %s603 = sld [smem:[#allocation8 + $0x19]]
          %v604 = vstv %s603
          %v605 = vmul.f32 %v600, %v604
          %v606 = vmul.f32 %v602, %v604
          %v607 = vadd.f32 %v597, %v605
          %v608 = vadd.f32 %v598, %v606
          %609 = vrot.lane.b32.xlu0 %v333, 126
          %v610 = vpop.permute.xlu0 %609
          %611 = vrot.lane.b32.xlu0 %v334, 126
          %v612 = vpop.permute.xlu0 %611
          %s613 = sld [smem:[#allocation8 + $0x1a]]
          %v614 = vstv %s613
          %v615 = vmul.f32 %v610, %v614
          %v616 = vmul.f32 %v612, %v614
          %v617 = vadd.f32 %v607, %v615
          %v618 = vadd.f32 %v608, %v616
          %619 = vrot.lane.b32.xlu0 %v333, 125
          %v620 = vpop.permute.xlu0 %619
          %621 = vrot.lane.b32.xlu0 %v334, 125
          %v622 = vpop.permute.xlu0 %621
          %s623 = sld [smem:[#allocation8 + $0x1b]]
          %v624 = vstv %s623
          %v625 = vmul.f32 %v620, %v624
          %v626 = vmul.f32 %v622, %v624
          %v627 = vadd.f32 %v617, %v625
          %v628 = vadd.f32 %v618, %v626
          %v629 = vrot.slane %v333, 1
          %v630 = vrot.slane %v334, 1
          %v631 = vrot.slane %v335, 1
          %vm632 = vcmp.lt.s32.totalorder %v349, 7
          %v633 = vsel %vm632, %v630, %v631
          %v634 = vsel %vm632, %v629, %v630
          %635 = vrot.lane.b32.xlu0 %v634, 3
          %v636 = vpop.permute.xlu0 %635
          %637 = vrot.lane.b32.xlu0 %v633, 3
          %v638 = vpop.permute.xlu0 %637
          %s639 = sld [smem:[#allocation8 + $0x1c]]
          %v640 = vstv %s639
          %v641 = vmul.f32 %v636, %v640
          %v642 = vmul.f32 %v638, %v640
          %v643 = vadd.f32 %v627, %v641
          %v644 = vadd.f32 %v628, %v642
          %645 = vrot.lane.b32.xlu0 %v634, 2
          %v646 = vpop.permute.xlu0 %645
          %647 = vrot.lane.b32.xlu0 %v633, 2
          %v648 = vpop.permute.xlu0 %647
          %s649 = sld [smem:[#allocation8 + $0x1d]]
          %v650 = vstv %s649
          %v651 = vmul.f32 %v646, %v650
          %v652 = vmul.f32 %v648, %v650
          %v653 = vadd.f32 %v643, %v651
          %v654 = vadd.f32 %v644, %v652
          %655 = vrot.lane.b32.xlu0 %v634, 1
          %v656 = vpop.permute.xlu0 %655
          %657 = vrot.lane.b32.xlu0 %v633, 1
          %v658 = vpop.permute.xlu0 %657
          %s659 = sld [smem:[#allocation8 + $0x1e]]
          %v660 = vstv %s659
          %v661 = vmul.f32 %v656, %v660
          %v662 = vmul.f32 %v658, %v660
          %v663 = vadd.f32 %v653, %v661
          %v664 = vadd.f32 %v654, %v662
          %s665 = sld [smem:[#allocation8 + $0x1f]]
          %v666 = vstv %s665
          %v667 = vmul.f32 %v634, %v666
          %v668 = vmul.f32 %v633, %v666
          %v669 = vadd.f32 %v663, %v667
          %v670 = vadd.f32 %v664, %v668
          %671 = vrot.lane.b32.xlu0 %v634, 127
          %v672 = vpop.permute.xlu0 %671
          %673 = vrot.lane.b32.xlu0 %v633, 127
          %v674 = vpop.permute.xlu0 %673
          %s675 = sld [smem:[#allocation8 + $0x20]]
          %v676 = vstv %s675
          %v677 = vmul.f32 %v672, %v676
          %v678 = vmul.f32 %v674, %v676
          %v679 = vadd.f32 %v669, %v677
          %v680 = vadd.f32 %v670, %v678
          %681 = vrot.lane.b32.xlu0 %v634, 126
          %v682 = vpop.permute.xlu0 %681
          %683 = vrot.lane.b32.xlu0 %v633, 126
          %v684 = vpop.permute.xlu0 %683
          %s685 = sld [smem:[#allocation8 + $0x21]]
          %v686 = vstv %s685
          %v687 = vmul.f32 %v682, %v686
          %v688 = vmul.f32 %v684, %v686
          %v689 = vadd.f32 %v679, %v687
          %v690 = vadd.f32 %v680, %v688
          %691 = vrot.lane.b32.xlu0 %v634, 125
          %v692 = vpop.permute.xlu0 %691
          %693 = vrot.lane.b32.xlu0 %v633, 125
          %v694 = vpop.permute.xlu0 %693
          %s695 = sld [smem:[#allocation8 + $0x22]]
          %v696 = vstv %s695
          %v697 = vmul.f32 %v692, %v696
          %v698 = vmul.f32 %v694, %v696
          %v699 = vadd.f32 %v689, %v697
          %v700 = vadd.f32 %v690, %v698
          %v701 = vrot.slane %v333, 2
          %v702 = vrot.slane %v334, 2
          %v703 = vrot.slane %v335, 2
          %vm704 = vcmp.lt.s32.totalorder %v349, 6
          %v705 = vsel %vm704, %v702, %v703
          %v706 = vsel %vm704, %v701, %v702
          %707 = vrot.lane.b32.xlu0 %v706, 3
          %v708 = vpop.permute.xlu0 %707
          %709 = vrot.lane.b32.xlu0 %v705, 3
          %v710 = vpop.permute.xlu0 %709
          %s711 = sld [smem:[#allocation8 + $0x23]]
          %v712 = vstv %s711
          %v713 = vmul.f32 %v708, %v712
          %v714 = vmul.f32 %v710, %v712
          %v715 = vadd.f32 %v699, %v713
          %v716 = vadd.f32 %v700, %v714
          %717 = vrot.lane.b32.xlu0 %v706, 2
          %v718 = vpop.permute.xlu0 %717
          %719 = vrot.lane.b32.xlu0 %v705, 2
          %v720 = vpop.permute.xlu0 %719
          %s721 = sld [smem:[#allocation8 + $0x24]]
          %v722 = vstv %s721
          %v723 = vmul.f32 %v718, %v722
          %v724 = vmul.f32 %v720, %v722
          %v725 = vadd.f32 %v715, %v723
          %v726 = vadd.f32 %v716, %v724
          %727 = vrot.lane.b32.xlu0 %v706, 1
          %v728 = vpop.permute.xlu0 %727
          %729 = vrot.lane.b32.xlu0 %v705, 1
          %v730 = vpop.permute.xlu0 %729
          %s731 = sld [smem:[#allocation8 + $0x25]]
          %v732 = vstv %s731
          %v733 = vmul.f32 %v728, %v732
          %v734 = vmul.f32 %v730, %v732
          %v735 = vadd.f32 %v725, %v733
          %v736 = vadd.f32 %v726, %v734
          %s737 = sld [smem:[#allocation8 + $0x26]]
          %v738 = vstv %s737
          %v739 = vmul.f32 %v706, %v738
          %v740 = vmul.f32 %v705, %v738
          %v741 = vadd.f32 %v735, %v739
          %v742 = vadd.f32 %v736, %v740
          %743 = vrot.lane.b32.xlu0 %v706, 127
          %v744 = vpop.permute.xlu0 %743
          %745 = vrot.lane.b32.xlu0 %v705, 127
          %v746 = vpop.permute.xlu0 %745
          %s747 = sld [smem:[#allocation8 + $0x27]]
          %v748 = vstv %s747
          %v749 = vmul.f32 %v744, %v748
          %v750 = vmul.f32 %v746, %v748
          %v751 = vadd.f32 %v741, %v749
          %v752 = vadd.f32 %v742, %v750
          %753 = vrot.lane.b32.xlu0 %v706, 126
          %v754 = vpop.permute.xlu0 %753
          %755 = vrot.lane.b32.xlu0 %v705, 126
          %v756 = vpop.permute.xlu0 %755
          %s757 = sld [smem:[#allocation8 + $0x28]]
          %v758 = vstv %s757
          %v759 = vmul.f32 %v754, %v758
          %v760 = vmul.f32 %v756, %v758
          %v761 = vadd.f32 %v751, %v759
          %v762 = vadd.f32 %v752, %v760
          %763 = vrot.lane.b32.xlu0 %v706, 125
          %v764 = vpop.permute.xlu0 %763
          %765 = vrot.lane.b32.xlu0 %v705, 125
          %v766 = vpop.permute.xlu0 %765
          %s767 = sld [smem:[#allocation8 + $0x29]]
          %v768 = vstv %s767
          %v769 = vmul.f32 %v764, %v768
          %v770 = vmul.f32 %v766, %v768
          %v771 = vadd.f32 %v761, %v769
          %v772 = vadd.f32 %v762, %v770
          %v773 = vrot.slane %v333, 3
          %v774 = vrot.slane %v334, 3
          %v775 = vrot.slane %v335, 3
          %vm776 = vcmp.lt.s32.totalorder %v349, 5
          %v777 = vsel %vm776, %v774, %v775
          %v778 = vsel %vm776, %v773, %v774
          %779 = vrot.lane.b32.xlu0 %v778, 3
          %v780 = vpop.permute.xlu0 %779
          %781 = vrot.lane.b32.xlu0 %v777, 3
          %v782 = vpop.permute.xlu0 %781
          %s783 = sld [smem:[#allocation8 + $0x2a]]
          %v784 = vstv %s783
          %v785 = vmul.f32 %v780, %v784
          %v786 = vmul.f32 %v782, %v784
          %v787 = vadd.f32 %v771, %v785
          %v788 = vadd.f32 %v772, %v786
          %789 = vrot.lane.b32.xlu0 %v778, 2
          %v790 = vpop.permute.xlu0 %789
          %791 = vrot.lane.b32.xlu0 %v777, 2
          %v792 = vpop.permute.xlu0 %791
          %s793 = sld [smem:[#allocation8 + $0x2b]]
          %v794 = vstv %s793
          %v795 = vmul.f32 %v790, %v794
          %v796 = vmul.f32 %v792, %v794
          %v797 = vadd.f32 %v787, %v795
          %v798 = vadd.f32 %v788, %v796
          %799 = vrot.lane.b32.xlu0 %v778, 1
          %v800 = vpop.permute.xlu0 %799
          %801 = vrot.lane.b32.xlu0 %v777, 1
          %v802 = vpop.permute.xlu0 %801
          %s803 = sld [smem:[#allocation8 + $0x2c]]
          %v804 = vstv %s803
          %v805 = vmul.f32 %v800, %v804
          %v806 = vmul.f32 %v802, %v804
          %v807 = vadd.f32 %v797, %v805
          %v808 = vadd.f32 %v798, %v806
          %s809 = sld [smem:[#allocation8 + $0x2d]]
          %v810 = vstv %s809
          %v811 = vmul.f32 %v778, %v810
          %v812 = vmul.f32 %v777, %v810
          %v813 = vadd.f32 %v807, %v811
          %v814 = vadd.f32 %v808, %v812
          %815 = vrot.lane.b32.xlu0 %v778, 127
          %v816 = vpop.permute.xlu0 %815
          %817 = vrot.lane.b32.xlu0 %v777, 127
          %v818 = vpop.permute.xlu0 %817
          %s819 = sld [smem:[#allocation8 + $0x2e]]
          %v820 = vstv %s819
          %v821 = vmul.f32 %v816, %v820
          %v822 = vmul.f32 %v818, %v820
          %v823 = vadd.f32 %v813, %v821
          %v824 = vadd.f32 %v814, %v822
          %825 = vrot.lane.b32.xlu0 %v778, 126
          %v826 = vpop.permute.xlu0 %825
          %827 = vrot.lane.b32.xlu0 %v777, 126
          %v828 = vpop.permute.xlu0 %827
          %s829 = sld [smem:[#allocation8 + $0x2f]]
          %v830 = vstv %s829
          %v831 = vmul.f32 %v826, %v830
          %v832 = vmul.f32 %v828, %v830
          %v833 = vadd.f32 %v823, %v831
          %v834 = vadd.f32 %v824, %v832
          %835 = vrot.lane.b32.xlu0 %v778, 125
          %v836 = vpop.permute.xlu0 %835
          %837 = vrot.lane.b32.xlu0 %v777, 125
          %v838 = vpop.permute.xlu0 %837
          %s839 = sld [smem:[#allocation8 + $0x30]]
          %v840 = vstv %s839
          %v841 = vmul.f32 %v836, %v840
          %v842 = vmul.f32 %v838, %v840
          %v843 = vadd.f32 %v833, %v841
          %v844 = vadd.f32 %v834, %v842
          %v845 = vrot.slane %v340, 5
          %v846 = vrot.slane %v341, 5
          %v847 = vrot.slane %v342, 5
          %v848 = vsel %vm350, %v845, %v846
          %v849 = vsel %vm350, %v847, %v845
          %850 = vrot.lane.b32.xlu0 %v849, 3
          %v851 = vpop.permute.xlu0 %850
          %852 = vrot.lane.b32.xlu0 %v848, 3
          %v853 = vpop.permute.xlu0 %852
          %s854 = sld [smem:[#allocation8 + $0x31]]
          %v855 = vstv %s854
          %v856 = vmul.f32 %v851, %v855
          %v857 = vmul.f32 %v853, %v855
          %v858 = vadd.f32 %v843, %v856
          %v859 = vadd.f32 %v844, %v857
          %860 = vrot.lane.b32.xlu0 %v849, 2
          %v861 = vpop.permute.xlu0 %860
          %862 = vrot.lane.b32.xlu0 %v848, 2
          %v863 = vpop.permute.xlu0 %862
          %s864 = sld [smem:[#allocation8 + $0x32]]
          %v865 = vstv %s864
          %v866 = vmul.f32 %v861, %v865
          %v867 = vmul.f32 %v863, %v865
          %v868 = vadd.f32 %v858, %v866
          %v869 = vadd.f32 %v859, %v867
          %870 = vrot.lane.b32.xlu0 %v849, 1
          %v871 = vpop.permute.xlu0 %870
          %872 = vrot.lane.b32.xlu0 %v848, 1
          %v873 = vpop.permute.xlu0 %872
          %s874 = sld [smem:[#allocation8 + $0x33]]
          %v875 = vstv %s874
          %v876 = vmul.f32 %v871, %v875
          %v877 = vmul.f32 %v873, %v875
          %v878 = vadd.f32 %v868, %v876
          %v879 = vadd.f32 %v869, %v877
          %s880 = sld [smem:[#allocation8 + $0x34]]
          %v881 = vstv %s880
          %v882 = vmul.f32 %v849, %v881
          %v883 = vmul.f32 %v848, %v881
          %v884 = vadd.f32 %v878, %v882
          %v885 = vadd.f32 %v879, %v883
          %886 = vrot.lane.b32.xlu0 %v849, 127
          %v887 = vpop.permute.xlu0 %886
          %888 = vrot.lane.b32.xlu0 %v848, 127
          %v889 = vpop.permute.xlu0 %888
          %s890 = sld [smem:[#allocation8 + $0x35]]
          %v891 = vstv %s890
          %v892 = vmul.f32 %v887, %v891
          %v893 = vmul.f32 %v889, %v891
          %v894 = vadd.f32 %v884, %v892
          %v895 = vadd.f32 %v885, %v893
          %896 = vrot.lane.b32.xlu0 %v849, 126
          %v897 = vpop.permute.xlu0 %896
          %898 = vrot.lane.b32.xlu0 %v848, 126
          %v899 = vpop.permute.xlu0 %898
          %s900 = sld [smem:[#allocation8 + $0x36]]
          %v901 = vstv %s900
          %v902 = vmul.f32 %v897, %v901
          %v903 = vmul.f32 %v899, %v901
          %v904 = vadd.f32 %v894, %v902
          %v905 = vadd.f32 %v895, %v903
          %906 = vrot.lane.b32.xlu0 %v849, 125
          %v907 = vpop.permute.xlu0 %906
          %908 = vrot.lane.b32.xlu0 %v848, 125
          %v909 = vpop.permute.xlu0 %908
          %s910 = sld [smem:[#allocation8 + $0x37]]
          %v911 = vstv %s910
          %v912 = vmul.f32 %v907, %v911
          %v913 = vmul.f32 %v909, %v911
          %v914 = vadd.f32 %v904, %v912
          %v915 = vadd.f32 %v905, %v913
          %v916 = vrot.slane %v340, 6
          %v917 = vrot.slane %v341, 6
          %v918 = vrot.slane %v342, 6
          %v919 = vsel %vm422, %v916, %v917
          %v920 = vsel %vm422, %v918, %v916
          %921 = vrot.lane.b32.xlu0 %v920, 3
          %v922 = vpop.permute.xlu0 %921
          %923 = vrot.lane.b32.xlu0 %v919, 3
          %v924 = vpop.permute.xlu0 %923
          %s925 = sld [smem:[#allocation8 + $0x38]]
          %v926 = vstv %s925
          %v927 = vmul.f32 %v922, %v926
          %v928 = vmul.f32 %v924, %v926
          %v929 = vadd.f32 %v914, %v927
          %v930 = vadd.f32 %v915, %v928
          %931 = vrot.lane.b32.xlu0 %v920, 2
          %v932 = vpop.permute.xlu0 %931
          %933 = vrot.lane.b32.xlu0 %v919, 2
          %v934 = vpop.permute.xlu0 %933
          %s935 = sld [smem:[#allocation8 + $0x39]]
          %v936 = vstv %s935
          %v937 = vmul.f32 %v932, %v936
          %v938 = vmul.f32 %v934, %v936
          %v939 = vadd.f32 %v929, %v937
          %v940 = vadd.f32 %v930, %v938
          %941 = vrot.lane.b32.xlu0 %v920, 1
          %v942 = vpop.permute.xlu0 %941
          %943 = vrot.lane.b32.xlu0 %v919, 1
          %v944 = vpop.permute.xlu0 %943
          %s945 = sld [smem:[#allocation8 + $0x3a]]
          %v946 = vstv %s945
          %v947 = vmul.f32 %v942, %v946
          %v948 = vmul.f32 %v944, %v946
          %v949 = vadd.f32 %v939, %v947
          %v950 = vadd.f32 %v940, %v948
          %s951 = sld [smem:[#allocation8 + $0x3b]]
          %v952 = vstv %s951
          %v953 = vmul.f32 %v920, %v952
          %v954 = vmul.f32 %v919, %v952
          %v955 = vadd.f32 %v949, %v953
          %v956 = vadd.f32 %v950, %v954
          %957 = vrot.lane.b32.xlu0 %v920, 127
          %v958 = vpop.permute.xlu0 %957
          %959 = vrot.lane.b32.xlu0 %v919, 127
          %v960 = vpop.permute.xlu0 %959
          %s961 = sld [smem:[#allocation8 + $0x3c]]
          %v962 = vstv %s961
          %v963 = vmul.f32 %v958, %v962
          %v964 = vmul.f32 %v960, %v962
          %v965 = vadd.f32 %v955, %v963
          %v966 = vadd.f32 %v956, %v964
          %967 = vrot.lane.b32.xlu0 %v920, 126
          %v968 = vpop.permute.xlu0 %967
          %969 = vrot.lane.b32.xlu0 %v919, 126
          %v970 = vpop.permute.xlu0 %969
          %s971 = sld [smem:[#allocation8 + $0x3d]]
          %v972 = vstv %s971
          %v973 = vmul.f32 %v968, %v972
          %v974 = vmul.f32 %v970, %v972
          %v975 = vadd.f32 %v965, %v973
          %v976 = vadd.f32 %v966, %v974
          %977 = vrot.lane.b32.xlu0 %v920, 125
          %v978 = vpop.permute.xlu0 %977
          %979 = vrot.lane.b32.xlu0 %v919, 125
          %v980 = vpop.permute.xlu0 %979
          %s981 = sld [smem:[#allocation8 + $0x3e]]
          %v982 = vstv %s981
          %v983 = vmul.f32 %v978, %v982
          %v984 = vmul.f32 %v980, %v982
          %v985 = vadd.f32 %v975, %v983
          %v986 = vadd.f32 %v976, %v984
          %v987 = vrot.slane %v340, 7
          %v988 = vrot.slane %v341, 7
          %v989 = vrot.slane %v342, 7
          %v990 = vsel %vm494, %v987, %v988
          %v991 = vsel %vm494, %v989, %v987
          %992 = vrot.lane.b32.xlu0 %v991, 3
          %v993 = vpop.permute.xlu0 %992
          %994 = vrot.lane.b32.xlu0 %v990, 3
          %v995 = vpop.permute.xlu0 %994
          %s996 = sld [smem:[#allocation8 + $0x3f]]
          %v997 = vstv %s996
          %v998 = vmul.f32 %v993, %v997
          %v999 = vmul.f32 %v995, %v997
          %v1000 = vadd.f32 %v985, %v998
          %v1001 = vadd.f32 %v986, %v999
          %1002 = vrot.lane.b32.xlu0 %v991, 2
          %v1003 = vpop.permute.xlu0 %1002
          %1004 = vrot.lane.b32.xlu0 %v990, 2
          %v1005 = vpop.permute.xlu0 %1004
          %s1006 = sld [smem:[#allocation8 + $0x40]]
          %v1007 = vstv %s1006
          %v1008 = vmul.f32 %v1003, %v1007
          %v1009 = vmul.f32 %v1005, %v1007
          %v1010 = vadd.f32 %v1000, %v1008
          %v1011 = vadd.f32 %v1001, %v1009
          %1012 = vrot.lane.b32.xlu0 %v991, 1
          %v1013 = vpop.permute.xlu0 %1012
          %1014 = vrot.lane.b32.xlu0 %v990, 1
          %v1015 = vpop.permute.xlu0 %1014
          %s1016 = sld [smem:[#allocation8 + $0x41]]
          %v1017 = vstv %s1016
          %v1018 = vmul.f32 %v1013, %v1017
          %v1019 = vmul.f32 %v1015, %v1017
          %v1020 = vadd.f32 %v1010, %v1018
          %v1021 = vadd.f32 %v1011, %v1019
          %s1022 = sld [smem:[#allocation8 + $0x42]]
          %v1023 = vstv %s1022
          %v1024 = vmul.f32 %v991, %v1023
          %v1025 = vmul.f32 %v990, %v1023
          %v1026 = vadd.f32 %v1020, %v1024
          %v1027 = vadd.f32 %v1021, %v1025
          %1028 = vrot.lane.b32.xlu0 %v991, 127
          %v1029 = vpop.permute.xlu0 %1028
          %1030 = vrot.lane.b32.xlu0 %v990, 127
          %v1031 = vpop.permute.xlu0 %1030
          %s1032 = sld [smem:[#allocation8 + $0x43]]
          %v1033 = vstv %s1032
          %v1034 = vmul.f32 %v1029, %v1033
          %v1035 = vmul.f32 %v1031, %v1033
          %v1036 = vadd.f32 %v1026, %v1034
          %v1037 = vadd.f32 %v1027, %v1035
          %1038 = vrot.lane.b32.xlu0 %v991, 126
          %v1039 = vpop.permute.xlu0 %1038
          %1040 = vrot.lane.b32.xlu0 %v990, 126
          %v1041 = vpop.permute.xlu0 %1040
          %s1042 = sld [smem:[#allocation8 + $0x44]]
          %v1043 = vstv %s1042
          %v1044 = vmul.f32 %v1039, %v1043
          %v1045 = vmul.f32 %v1041, %v1043
          %v1046 = vadd.f32 %v1036, %v1044
          %v1047 = vadd.f32 %v1037, %v1045
          %1048 = vrot.lane.b32.xlu0 %v991, 125
          %v1049 = vpop.permute.xlu0 %1048
          %1050 = vrot.lane.b32.xlu0 %v990, 125
          %v1051 = vpop.permute.xlu0 %1050
          %s1052 = sld [smem:[#allocation8 + $0x45]]
          %v1053 = vstv %s1052
          %v1054 = vmul.f32 %v1049, %v1053
          %v1055 = vmul.f32 %v1051, %v1053
          %v1056 = vadd.f32 %v1046, %v1054
          %v1057 = vadd.f32 %v1047, %v1055
          %1058 = vrot.lane.b32.xlu0 %v340, 3
          %v1059 = vpop.permute.xlu0 %1058
          %1060 = vrot.lane.b32.xlu0 %v341, 3
          %v1061 = vpop.permute.xlu0 %1060
          %s1062 = sld [smem:[#allocation8 + $0x46]]
          %v1063 = vstv %s1062
          %v1064 = vmul.f32 %v1059, %v1063
          %v1065 = vmul.f32 %v1061, %v1063
          %v1066 = vadd.f32 %v1056, %v1064
          %v1067 = vadd.f32 %v1057, %v1065
          %1068 = vrot.lane.b32.xlu0 %v340, 2
          %v1069 = vpop.permute.xlu0 %1068
          %1070 = vrot.lane.b32.xlu0 %v341, 2
          %v1071 = vpop.permute.xlu0 %1070
          %s1072 = sld [smem:[#allocation8 + $0x47]]
          %v1073 = vstv %s1072
          %v1074 = vmul.f32 %v1069, %v1073
          %v1075 = vmul.f32 %v1071, %v1073
          %v1076 = vadd.f32 %v1066, %v1074
          %v1077 = vadd.f32 %v1067, %v1075
          %1078 = vrot.lane.b32.xlu0 %v340, 1
          %v1079 = vpop.permute.xlu0 %1078
          %1080 = vrot.lane.b32.xlu0 %v341, 1
          %v1081 = vpop.permute.xlu0 %1080
          %s1082 = sld [smem:[#allocation8 + $0x48]]
          %v1083 = vstv %s1082
          %v1084 = vmul.f32 %v1079, %v1083
          %v1085 = vmul.f32 %v1081, %v1083
          %v1086 = vadd.f32 %v1076, %v1084
          %v1087 = vadd.f32 %v1077, %v1085
          %s1088 = sld [smem:[#allocation8 + $0x49]]
          %v1089 = vstv %s1088
          %v1090 = vmul.f32 %v340, %v1089
          %v1091 = vmul.f32 %v341, %v1089
          %v1092 = vadd.f32 %v1086, %v1090
          %v1093 = vadd.f32 %v1087, %v1091
          %1094 = vrot.lane.b32.xlu0 %v340, 127
          %v1095 = vpop.permute.xlu0 %1094
          %1096 = vrot.lane.b32.xlu0 %v341, 127
          %v1097 = vpop.permute.xlu0 %1096
          %s1098 = sld [smem:[#allocation8 + $0x4a]]
          %v1099 = vstv %s1098
          %v1100 = vmul.f32 %v1095, %v1099
          %v1101 = vmul.f32 %v1097, %v1099
          %v1102 = vadd.f32 %v1092, %v1100
          %v1103 = vadd.f32 %v1093, %v1101
          %1104 = vrot.lane.b32.xlu0 %v340, 126
          %v1105 = vpop.permute.xlu0 %1104
          %1106 = vrot.lane.b32.xlu0 %v341, 126
          %v1107 = vpop.permute.xlu0 %1106
          %s1108 = sld [smem:[#allocation8 + $0x4b]]
          %v1109 = vstv %s1108
          %v1110 = vmul.f32 %v1105, %v1109
          %v1111 = vmul.f32 %v1107, %v1109
          %v1112 = vadd.f32 %v1102, %v1110
          %v1113 = vadd.f32 %v1103, %v1111
          %1114 = vrot.lane.b32.xlu0 %v340, 125
          %v1115 = vpop.permute.xlu0 %1114
          %1116 = vrot.lane.b32.xlu0 %v341, 125
          %v1117 = vpop.permute.xlu0 %1116
          %s1118 = sld [smem:[#allocation8 + $0x4c]]
          %v1119 = vstv %s1118
          %v1120 = vmul.f32 %v1115, %v1119
          %v1121 = vmul.f32 %v1117, %v1119
          %v1122 = vadd.f32 %v1112, %v1120
          %v1123 = vadd.f32 %v1113, %v1121
          %v1124 = vrot.slane %v340, 1
          %v1125 = vrot.slane %v341, 1
          %v1126 = vrot.slane %v342, 1
          %v1127 = vsel %vm632, %v1125, %v1126
          %v1128 = vsel %vm632, %v1124, %v1125
          %1129 = vrot.lane.b32.xlu0 %v1128, 3
          %v1130 = vpop.permute.xlu0 %1129
          %1131 = vrot.lane.b32.xlu0 %v1127, 3
          %v1132 = vpop.permute.xlu0 %1131
          %s1133 = sld [smem:[#allocation8 + $0x4d]]
          %v1134 = vstv %s1133
          %v1135 = vmul.f32 %v1130, %v1134
          %v1136 = vmul.f32 %v1132, %v1134
          %v1137 = vadd.f32 %v1122, %v1135
          %v1138 = vadd.f32 %v1123, %v1136
          %1139 = vrot.lane.b32.xlu0 %v1128, 2
          %v1140 = vpop.permute.xlu0 %1139
          %1141 = vrot.lane.b32.xlu0 %v1127, 2
          %v1142 = vpop.permute.xlu0 %1141
          %s1143 = sld [smem:[#allocation8 + $0x4e]]
          %v1144 = vstv %s1143
          %v1145 = vmul.f32 %v1140, %v1144
          %v1146 = vmul.f32 %v1142, %v1144
          %v1147 = vadd.f32 %v1137, %v1145
          %v1148 = vadd.f32 %v1138, %v1146
          %1149 = vrot.lane.b32.xlu0 %v1128, 1
          %v1150 = vpop.permute.xlu0 %1149
          %1151 = vrot.lane.b32.xlu0 %v1127, 1
          %v1152 = vpop.permute.xlu0 %1151
          %s1153 = sld [smem:[#allocation8 + $0x4f]]
          %v1154 = vstv %s1153
          %v1155 = vmul.f32 %v1150, %v1154
          %v1156 = vmul.f32 %v1152, %v1154
          %v1157 = vadd.f32 %v1147, %v1155
          %v1158 = vadd.f32 %v1148, %v1156
          %s1159 = sld [smem:[#allocation8 + $0x50]]
          %v1160 = vstv %s1159
          %v1161 = vmul.f32 %v1128, %v1160
          %v1162 = vmul.f32 %v1127, %v1160
          %v1163 = vadd.f32 %v1157, %v1161
          %v1164 = vadd.f32 %v1158, %v1162
          %1165 = vrot.lane.b32.xlu0 %v1128, 127
          %v1166 = vpop.permute.xlu0 %1165
          %1167 = vrot.lane.b32.xlu0 %v1127, 127
          %v1168 = vpop.permute.xlu0 %1167
          %s1169 = sld [smem:[#allocation8 + $0x51]]
          %v1170 = vstv %s1169
          %v1171 = vmul.f32 %v1166, %v1170
          %v1172 = vmul.f32 %v1168, %v1170
          %v1173 = vadd.f32 %v1163, %v1171
          %v1174 = vadd.f32 %v1164, %v1172
          %1175 = vrot.lane.b32.xlu0 %v1128, 126
          %v1176 = vpop.permute.xlu0 %1175
          %1177 = vrot.lane.b32.xlu0 %v1127, 126
          %v1178 = vpop.permute.xlu0 %1177
          %s1179 = sld [smem:[#allocation8 + $0x52]]
          %v1180 = vstv %s1179
          %v1181 = vmul.f32 %v1176, %v1180
          %v1182 = vmul.f32 %v1178, %v1180
          %v1183 = vadd.f32 %v1173, %v1181
          %v1184 = vadd.f32 %v1174, %v1182
          %1185 = vrot.lane.b32.xlu0 %v1128, 125
          %v1186 = vpop.permute.xlu0 %1185
          %1187 = vrot.lane.b32.xlu0 %v1127, 125
          %v1188 = vpop.permute.xlu0 %1187
          %s1189 = sld [smem:[#allocation8 + $0x53]]
          %v1190 = vstv %s1189
          %v1191 = vmul.f32 %v1186, %v1190
          %v1192 = vmul.f32 %v1188, %v1190
          %v1193 = vadd.f32 %v1183, %v1191
          %v1194 = vadd.f32 %v1184, %v1192
          %v1195 = vrot.slane %v340, 2
          %v1196 = vrot.slane %v341, 2
          %v1197 = vrot.slane %v342, 2
          %v1198 = vsel %vm704, %v1196, %v1197
          %v1199 = vsel %vm704, %v1195, %v1196
          %1200 = vrot.lane.b32.xlu0 %v1199, 3
          %v1201 = vpop.permute.xlu0 %1200
          %1202 = vrot.lane.b32.xlu0 %v1198, 3
          %v1203 = vpop.permute.xlu0 %1202
          %s1204 = sld [smem:[#allocation8 + $0x54]]
          %v1205 = vstv %s1204
          %v1206 = vmul.f32 %v1201, %v1205
          %v1207 = vmul.f32 %v1203, %v1205
          %v1208 = vadd.f32 %v1193, %v1206
          %v1209 = vadd.f32 %v1194, %v1207
          %1210 = vrot.lane.b32.xlu0 %v1199, 2
          %v1211 = vpop.permute.xlu0 %1210
          %1212 = vrot.lane.b32.xlu0 %v1198, 2
          %v1213 = vpop.permute.xlu0 %1212
          %s1214 = sld [smem:[#allocation8 + $0x55]]
          %v1215 = vstv %s1214
          %v1216 = vmul.f32 %v1211, %v1215
          %v1217 = vmul.f32 %v1213, %v1215
          %v1218 = vadd.f32 %v1208, %v1216
          %v1219 = vadd.f32 %v1209, %v1217
          %1220 = vrot.lane.b32.xlu0 %v1199, 1
          %v1221 = vpop.permute.xlu0 %1220
          %1222 = vrot.lane.b32.xlu0 %v1198, 1
          %v1223 = vpop.permute.xlu0 %1222
          %s1224 = sld [smem:[#allocation8 + $0x56]]
          %v1225 = vstv %s1224
          %v1226 = vmul.f32 %v1221, %v1225
          %v1227 = vmul.f32 %v1223, %v1225
          %v1228 = vadd.f32 %v1218, %v1226
          %v1229 = vadd.f32 %v1219, %v1227
          %s1230 = sld [smem:[#allocation8 + $0x57]]
          %v1231 = vstv %s1230
          %v1232 = vmul.f32 %v1199, %v1231
          %v1233 = vmul.f32 %v1198, %v1231
          %v1234 = vadd.f32 %v1228, %v1232
          %v1235 = vadd.f32 %v1229, %v1233
          %1236 = vrot.lane.b32.xlu0 %v1199, 127
          %v1237 = vpop.permute.xlu0 %1236
          %1238 = vrot.lane.b32.xlu0 %v1198, 127
          %v1239 = vpop.permute.xlu0 %1238
          %s1240 = sld [smem:[#allocation8 + $0x58]]
          %v1241 = vstv %s1240
          %v1242 = vmul.f32 %v1237, %v1241
          %v1243 = vmul.f32 %v1239, %v1241
          %v1244 = vadd.f32 %v1234, %v1242
          %v1245 = vadd.f32 %v1235, %v1243
          %1246 = vrot.lane.b32.xlu0 %v1199, 126
          %v1247 = vpop.permute.xlu0 %1246
          %1248 = vrot.lane.b32.xlu0 %v1198, 126
          %v1249 = vpop.permute.xlu0 %1248
          %s1250 = sld [smem:[#allocation8 + $0x59]]
          %v1251 = vstv %s1250
          %v1252 = vmul.f32 %v1247, %v1251
          %v1253 = vmul.f32 %v1249, %v1251
          %v1254 = vadd.f32 %v1244, %v1252
          %v1255 = vadd.f32 %v1245, %v1253
          %1256 = vrot.lane.b32.xlu0 %v1199, 125
          %v1257 = vpop.permute.xlu0 %1256
          %1258 = vrot.lane.b32.xlu0 %v1198, 125
          %v1259 = vpop.permute.xlu0 %1258
          %s1260 = sld [smem:[#allocation8 + $0x5a]]
          %v1261 = vstv %s1260
          %v1262 = vmul.f32 %v1257, %v1261
          %v1263 = vmul.f32 %v1259, %v1261
          %v1264 = vadd.f32 %v1254, %v1262
          %v1265 = vadd.f32 %v1255, %v1263
          %v1266 = vrot.slane %v340, 3
          %v1267 = vrot.slane %v341, 3
          %v1268 = vrot.slane %v342, 3
          %v1269 = vsel %vm776, %v1267, %v1268
          %v1270 = vsel %vm776, %v1266, %v1267
          %1271 = vrot.lane.b32.xlu0 %v1270, 3
          %v1272 = vpop.permute.xlu0 %1271
          %1273 = vrot.lane.b32.xlu0 %v1269, 3
          %v1274 = vpop.permute.xlu0 %1273
          %s1275 = sld [smem:[#allocation8 + $0x5b]]
          %v1276 = vstv %s1275
          %v1277 = vmul.f32 %v1272, %v1276
          %v1278 = vmul.f32 %v1274, %v1276
          %v1279 = vadd.f32 %v1264, %v1277
          %v1280 = vadd.f32 %v1265, %v1278
          %1281 = vrot.lane.b32.xlu0 %v1270, 2
          %v1282 = vpop.permute.xlu0 %1281
          %1283 = vrot.lane.b32.xlu0 %v1269, 2
          %v1284 = vpop.permute.xlu0 %1283
          %s1285 = sld [smem:[#allocation8 + $0x5c]]
          %v1286 = vstv %s1285
          %v1287 = vmul.f32 %v1282, %v1286
          %v1288 = vmul.f32 %v1284, %v1286
          %v1289 = vadd.f32 %v1279, %v1287
          %v1290 = vadd.f32 %v1280, %v1288
          %1291 = vrot.lane.b32.xlu0 %v1270, 1
          %v1292 = vpop.permute.xlu0 %1291
          %1293 = vrot.lane.b32.xlu0 %v1269, 1
          %v1294 = vpop.permute.xlu0 %1293
          %s1295 = sld [smem:[#allocation8 + $0x5d]]
          %v1296 = vstv %s1295
          %v1297 = vmul.f32 %v1292, %v1296
          %v1298 = vmul.f32 %v1294, %v1296
          %v1299 = vadd.f32 %v1289, %v1297
          %v1300 = vadd.f32 %v1290, %v1298
          %s1301 = sld [smem:[#allocation8 + $0x5e]]
          %v1302 = vstv %s1301
          %v1303 = vmul.f32 %v1270, %v1302
          %v1304 = vmul.f32 %v1269, %v1302
          %v1305 = vadd.f32 %v1299, %v1303
          %v1306 = vadd.f32 %v1300, %v1304
          %1307 = vrot.lane.b32.xlu0 %v1270, 127
          %v1308 = vpop.permute.xlu0 %1307
          %1309 = vrot.lane.b32.xlu0 %v1269, 127
          %v1310 = vpop.permute.xlu0 %1309
          %s1311 = sld [smem:[#allocation8 + $0x5f]]
          %v1312 = vstv %s1311
          %v1313 = vmul.f32 %v1308, %v1312
          %v1314 = vmul.f32 %v1310, %v1312
          %v1315 = vadd.f32 %v1305, %v1313
          %v1316 = vadd.f32 %v1306, %v1314
          %1317 = vrot.lane.b32.xlu0 %v1270, 126
          %v1318 = vpop.permute.xlu0 %1317
          %1319 = vrot.lane.b32.xlu0 %v1269, 126
          %v1320 = vpop.permute.xlu0 %1319
          %s1321 = sld [smem:[#allocation8 + $0x60]]
          %v1322 = vstv %s1321
          %v1323 = vmul.f32 %v1318, %v1322
          %v1324 = vmul.f32 %v1320, %v1322
          %v1325 = vadd.f32 %v1315, %v1323
          %v1326 = vadd.f32 %v1316, %v1324
          %1327 = vrot.lane.b32.xlu0 %v1270, 125
          %v1328 = vpop.permute.xlu0 %1327
          %1329 = vrot.lane.b32.xlu0 %v1269, 125
          %v1330 = vpop.permute.xlu0 %1329
          %s1331 = sld [smem:[#allocation8 + $0x61]]
          %v1332 = vstv %s1331
          %v1333 = vmul.f32 %v1328, %v1332
          %v1334 = vmul.f32 %v1330, %v1332
          %v1335 = vadd.f32 %v1325, %v1333
          %v1336 = vadd.f32 %v1326, %v1334
          %v1337 = vmax.f32 %v1335, 0.0
          %v1338 = vmax.f32 %v1336, 0.0
          %vm1339 = vcmask 130048
          %1340 = vst.msk [vmem:[#allocation2] sm:$0xff] %vm1339, %v1337
          %1341 = vst.msk [vmem:[#allocation2 + $0x8] sm:$0xff] %vm1339, %v1338
          %v1342 = vld [vmem:[#allocation2] sm:$0xff]
          %v1343 = vld [vmem:[#allocation2 + $0x8] sm:$0xff]
          %v1344 = vld [vmem:[#allocation2 + $0x10] sm:$0xff]
          %s1345 = sld [smem:[#allocation9 + $0x1]]
          %v1346 = vstv %s1345
          %v1347 = vrot.slane %v1342, 5
          %v1348 = vrot.slane %v1343, 5
          %v1349 = vrot.slane %v1344, 5
          %v1350 = vsel %vm350, %v1347, %v1348
          %v1351 = vsel %vm350, %v1349, %v1347
          %1352 = vrot.lane.b32.xlu0 %v1351, 3
          %v1353 = vpop.permute.xlu0 %1352
          %1354 = vrot.lane.b32.xlu0 %v1350, 3
          %v1355 = vpop.permute.xlu0 %1354
          %s1356 = sld [smem:[#allocation10]]
          %v1357 = vstv %s1356
          %v1358 = vmul.f32 %v1353, %v1357
          %v1359 = vmul.f32 %v1355, %v1357
          %v1360 = vadd.f32 %v1346, %v1358
          %v1361 = vadd.f32 %v1346, %v1359
          %1362 = vrot.lane.b32.xlu0 %v1351, 2
          %v1363 = vpop.permute.xlu0 %1362
          %1364 = vrot.lane.b32.xlu0 %v1350, 2
          %v1365 = vpop.permute.xlu0 %1364
          %s1366 = sld [smem:[#allocation10 + $0x1]]
          %v1367 = vstv %s1366
          %v1368 = vmul.f32 %v1363, %v1367
          %v1369 = vmul.f32 %v1365, %v1367
          %v1370 = vadd.f32 %v1360, %v1368
          %v1371 = vadd.f32 %v1361, %v1369
          %1372 = vrot.lane.b32.xlu0 %v1351, 1
          %v1373 = vpop.permute.xlu0 %1372
          %1374 = vrot.lane.b32.xlu0 %v1350, 1
          %v1375 = vpop.permute.xlu0 %1374
          %s1376 = sld [smem:[#allocation10 + $0x2]]
          %v1377 = vstv %s1376
          %v1378 = vmul.f32 %v1373, %v1377
          %v1379 = vmul.f32 %v1375, %v1377
          %v1380 = vadd.f32 %v1370, %v1378
          %v1381 = vadd.f32 %v1371, %v1379
          %s1382 = sld [smem:[#allocation10 + $0x3]]
          %v1383 = vstv %s1382
          %v1384 = vmul.f32 %v1351, %v1383
          %v1385 = vmul.f32 %v1350, %v1383
          %v1386 = vadd.f32 %v1380, %v1384
          %v1387 = vadd.f32 %v1381, %v1385
          %1388 = vrot.lane.b32.xlu0 %v1351, 127
          %v1389 = vpop.permute.xlu0 %1388
          %1390 = vrot.lane.b32.xlu0 %v1350, 127
          %v1391 = vpop.permute.xlu0 %1390
          %s1392 = sld [smem:[#allocation10 + $0x4]]
          %v1393 = vstv %s1392
          %v1394 = vmul.f32 %v1389, %v1393
          %v1395 = vmul.f32 %v1391, %v1393
          %v1396 = vadd.f32 %v1386, %v1394
          %v1397 = vadd.f32 %v1387, %v1395
          %1398 = vrot.lane.b32.xlu0 %v1351, 126
          %v1399 = vpop.permute.xlu0 %1398
          %1400 = vrot.lane.b32.xlu0 %v1350, 126
          %v1401 = vpop.permute.xlu0 %1400
          %s1402 = sld [smem:[#allocation10 + $0x5]]
          %v1403 = vstv %s1402
          %v1404 = vmul.f32 %v1399, %v1403
          %v1405 = vmul.f32 %v1401, %v1403
          %v1406 = vadd.f32 %v1396, %v1404
          %v1407 = vadd.f32 %v1397, %v1405
          %1408 = vrot.lane.b32.xlu0 %v1351, 125
          %v1409 = vpop.permute.xlu0 %1408
          %1410 = vrot.lane.b32.xlu0 %v1350, 125
          %v1411 = vpop.permute.xlu0 %1410
          %s1412 = sld [smem:[#allocation10 + $0x6]]
          %v1413 = vstv %s1412
          %v1414 = vmul.f32 %v1409, %v1413
          %v1415 = vmul.f32 %v1411, %v1413
          %v1416 = vadd.f32 %v1406, %v1414
          %v1417 = vadd.f32 %v1407, %v1415
          %v1418 = vrot.slane %v1342, 6
          %v1419 = vrot.slane %v1343, 6
          %v1420 = vrot.slane %v1344, 6
          %v1421 = vsel %vm422, %v1418, %v1419
          %v1422 = vsel %vm422, %v1420, %v1418
          %1423 = vrot.lane.b32.xlu0 %v1422, 3
          %v1424 = vpop.permute.xlu0 %1423
          %1425 = vrot.lane.b32.xlu0 %v1421, 3
          %v1426 = vpop.permute.xlu0 %1425
          %s1427 = sld [smem:[#allocation10 + $0x7]]
          %v1428 = vstv %s1427
          %v1429 = vmul.f32 %v1424, %v1428
          %v1430 = vmul.f32 %v1426, %v1428
          %v1431 = vadd.f32 %v1416, %v1429
          %v1432 = vadd.f32 %v1417, %v1430
          %1433 = vrot.lane.b32.xlu0 %v1422, 2
          %v1434 = vpop.permute.xlu0 %1433
          %1435 = vrot.lane.b32.xlu0 %v1421, 2
          %v1436 = vpop.permute.xlu0 %1435
          %s1437 = sld [smem:[#allocation10 + $0x8]]
          %v1438 = vstv %s1437
          %v1439 = vmul.f32 %v1434, %v1438
          %v1440 = vmul.f32 %v1436, %v1438
          %v1441 = vadd.f32 %v1431, %v1439
          %v1442 = vadd.f32 %v1432, %v1440
          %1443 = vrot.lane.b32.xlu0 %v1422, 1
          %v1444 = vpop.permute.xlu0 %1443
          %1445 = vrot.lane.b32.xlu0 %v1421, 1
          %v1446 = vpop.permute.xlu0 %1445
          %s1447 = sld [smem:[#allocation10 + $0x9]]
          %v1448 = vstv %s1447
          %v1449 = vmul.f32 %v1444, %v1448
          %v1450 = vmul.f32 %v1446, %v1448
          %v1451 = vadd.f32 %v1441, %v1449
          %v1452 = vadd.f32 %v1442, %v1450
          %s1453 = sld [smem:[#allocation10 + $0xa]]
          %v1454 = vstv %s1453
          %v1455 = vmul.f32 %v1422, %v1454
          %v1456 = vmul.f32 %v1421, %v1454
          %v1457 = vadd.f32 %v1451, %v1455
          %v1458 = vadd.f32 %v1452, %v1456
          %1459 = vrot.lane.b32.xlu0 %v1422, 127
          %v1460 = vpop.permute.xlu0 %1459
          %1461 = vrot.lane.b32.xlu0 %v1421, 127
          %v1462 = vpop.permute.xlu0 %1461
          %s1463 = sld [smem:[#allocation10 + $0xb]]
          %v1464 = vstv %s1463
          %v1465 = vmul.f32 %v1460, %v1464
          %v1466 = vmul.f32 %v1462, %v1464
          %v1467 = vadd.f32 %v1457, %v1465
          %v1468 = vadd.f32 %v1458, %v1466
          %1469 = vrot.lane.b32.xlu0 %v1422, 126
          %v1470 = vpop.permute.xlu0 %1469
          %1471 = vrot.lane.b32.xlu0 %v1421, 126
          %v1472 = vpop.permute.xlu0 %1471
          %s1473 = sld [smem:[#allocation10 + $0xc]]
          %v1474 = vstv %s1473
          %v1475 = vmul.f32 %v1470, %v1474
          %v1476 = vmul.f32 %v1472, %v1474
          %v1477 = vadd.f32 %v1467, %v1475
          %v1478 = vadd.f32 %v1468, %v1476
          %1479 = vrot.lane.b32.xlu0 %v1422, 125
          %v1480 = vpop.permute.xlu0 %1479
          %1481 = vrot.lane.b32.xlu0 %v1421, 125
          %v1482 = vpop.permute.xlu0 %1481
          %s1483 = sld [smem:[#allocation10 + $0xd]]
          %v1484 = vstv %s1483
          %v1485 = vmul.f32 %v1480, %v1484
          %v1486 = vmul.f32 %v1482, %v1484
          %v1487 = vadd.f32 %v1477, %v1485
          %v1488 = vadd.f32 %v1478, %v1486
          %v1489 = vrot.slane %v1342, 7
          %v1490 = vrot.slane %v1343, 7
          %v1491 = vrot.slane %v1344, 7
          %v1492 = vsel %vm494, %v1489, %v1490
          %v1493 = vsel %vm494, %v1491, %v1489
          %1494 = vrot.lane.b32.xlu0 %v1493, 3
          %v1495 = vpop.permute.xlu0 %1494
          %1496 = vrot.lane.b32.xlu0 %v1492, 3
          %v1497 = vpop.permute.xlu0 %1496
          %s1498 = sld [smem:[#allocation10 + $0xe]]
          %v1499 = vstv %s1498
          %v1500 = vmul.f32 %v1495, %v1499
          %v1501 = vmul.f32 %v1497, %v1499
          %v1502 = vadd.f32 %v1487, %v1500
          %v1503 = vadd.f32 %v1488, %v1501
          %1504 = vrot.lane.b32.xlu0 %v1493, 2
          %v1505 = vpop.permute.xlu0 %1504
          %1506 = vrot.lane.b32.xlu0 %v1492, 2
          %v1507 = vpop.permute.xlu0 %1506
          %s1508 = sld [smem:[#allocation10 + $0xf]]
          %v1509 = vstv %s1508
          %v1510 = vmul.f32 %v1505, %v1509
          %v1511 = vmul.f32 %v1507, %v1509
          %v1512 = vadd.f32 %v1502, %v1510
          %v1513 = vadd.f32 %v1503, %v1511
          %1514 = vrot.lane.b32.xlu0 %v1493, 1
          %v1515 = vpop.permute.xlu0 %1514
          %1516 = vrot.lane.b32.xlu0 %v1492, 1
          %v1517 = vpop.permute.xlu0 %1516
          %s1518 = sld [smem:[#allocation10 + $0x10]]
          %v1519 = vstv %s1518
          %v1520 = vmul.f32 %v1515, %v1519
          %v1521 = vmul.f32 %v1517, %v1519
          %v1522 = vadd.f32 %v1512, %v1520
          %v1523 = vadd.f32 %v1513, %v1521
          %s1524 = sld [smem:[#allocation10 + $0x11]]
          %v1525 = vstv %s1524
          %v1526 = vmul.f32 %v1493, %v1525
          %v1527 = vmul.f32 %v1492, %v1525
          %v1528 = vadd.f32 %v1522, %v1526
          %v1529 = vadd.f32 %v1523, %v1527
          %1530 = vrot.lane.b32.xlu0 %v1493, 127
          %v1531 = vpop.permute.xlu0 %1530
          %1532 = vrot.lane.b32.xlu0 %v1492, 127
          %v1533 = vpop.permute.xlu0 %1532
          %s1534 = sld [smem:[#allocation10 + $0x12]]
          %v1535 = vstv %s1534
          %v1536 = vmul.f32 %v1531, %v1535
          %v1537 = vmul.f32 %v1533, %v1535
          %v1538 = vadd.f32 %v1528, %v1536
          %v1539 = vadd.f32 %v1529, %v1537
          %1540 = vrot.lane.b32.xlu0 %v1493, 126
          %v1541 = vpop.permute.xlu0 %1540
          %1542 = vrot.lane.b32.xlu0 %v1492, 126
          %v1543 = vpop.permute.xlu0 %1542
          %s1544 = sld [smem:[#allocation10 + $0x13]]
          %v1545 = vstv %s1544
          %v1546 = vmul.f32 %v1541, %v1545
          %v1547 = vmul.f32 %v1543, %v1545
          %v1548 = vadd.f32 %v1538, %v1546
          %v1549 = vadd.f32 %v1539, %v1547
          %1550 = vrot.lane.b32.xlu0 %v1493, 125
          %v1551 = vpop.permute.xlu0 %1550
          %1552 = vrot.lane.b32.xlu0 %v1492, 125
          %v1553 = vpop.permute.xlu0 %1552
          %s1554 = sld [smem:[#allocation10 + $0x14]]
          %v1555 = vstv %s1554
          %v1556 = vmul.f32 %v1551, %v1555
          %v1557 = vmul.f32 %v1553, %v1555
          %v1558 = vadd.f32 %v1548, %v1556
          %v1559 = vadd.f32 %v1549, %v1557
          %1560 = vrot.lane.b32.xlu0 %v1342, 3
          %v1561 = vpop.permute.xlu0 %1560
          %1562 = vrot.lane.b32.xlu0 %v1343, 3
          %v1563 = vpop.permute.xlu0 %1562
          %s1564 = sld [smem:[#allocation10 + $0x15]]
          %v1565 = vstv %s1564
          %v1566 = vmul.f32 %v1561, %v1565
          %v1567 = vmul.f32 %v1563, %v1565
          %v1568 = vadd.f32 %v1558, %v1566
          %v1569 = vadd.f32 %v1559, %v1567
          %1570 = vrot.lane.b32.xlu0 %v1342, 2
          %v1571 = vpop.permute.xlu0 %1570
          %1572 = vrot.lane.b32.xlu0 %v1343, 2
          %v1573 = vpop.permute.xlu0 %1572
          %s1574 = sld [smem:[#allocation10 + $0x16]]
          %v1575 = vstv %s1574
          %v1576 = vmul.f32 %v1571, %v1575
          %v1577 = vmul.f32 %v1573, %v1575
          %v1578 = vadd.f32 %v1568, %v1576
          %v1579 = vadd.f32 %v1569, %v1577
          %1580 = vrot.lane.b32.xlu0 %v1342, 1
          %v1581 = vpop.permute.xlu0 %1580
          %1582 = vrot.lane.b32.xlu0 %v1343, 1
          %v1583 = vpop.permute.xlu0 %1582
          %s1584 = sld [smem:[#allocation10 + $0x17]]
          %v1585 = vstv %s1584
          %v1586 = vmul.f32 %v1581, %v1585
          %v1587 = vmul.f32 %v1583, %v1585
          %v1588 = vadd.f32 %v1578, %v1586
          %v1589 = vadd.f32 %v1579, %v1587
          %s1590 = sld [smem:[#allocation10 + $0x18]]
          %v1591 = vstv %s1590
          %v1592 = vmul.f32 %v1342, %v1591
          %v1593 = vmul.f32 %v1343, %v1591
          %v1594 = vadd.f32 %v1588, %v1592
          %v1595 = vadd.f32 %v1589, %v1593
          %1596 = vrot.lane.b32.xlu0 %v1342, 127
          %v1597 = vpop.permute.xlu0 %1596
          %1598 = vrot.lane.b32.xlu0 %v1343, 127
          %v1599 = vpop.permute.xlu0 %1598
          %s1600 = sld [smem:[#allocation10 + $0x19]]
          %v1601 = vstv %s1600
          %v1602 = vmul.f32 %v1597, %v1601
          %v1603 = vmul.f32 %v1599, %v1601
          %v1604 = vadd.f32 %v1594, %v1602
          %v1605 = vadd.f32 %v1595, %v1603
          %1606 = vrot.lane.b32.xlu0 %v1342, 126
          %v1607 = vpop.permute.xlu0 %1606
          %1608 = vrot.lane.b32.xlu0 %v1343, 126
          %v1609 = vpop.permute.xlu0 %1608
          %s1610 = sld [smem:[#allocation10 + $0x1a]]
          %v1611 = vstv %s1610
          %v1612 = vmul.f32 %v1607, %v1611
          %v1613 = vmul.f32 %v1609, %v1611
          %v1614 = vadd.f32 %v1604, %v1612
          %v1615 = vadd.f32 %v1605, %v1613
          %1616 = vrot.lane.b32.xlu0 %v1342, 125
          %v1617 = vpop.permute.xlu0 %1616
          %1618 = vrot.lane.b32.xlu0 %v1343, 125
          %v1619 = vpop.permute.xlu0 %1618
          %s1620 = sld [smem:[#allocation10 + $0x1b]]
          %v1621 = vstv %s1620
          %v1622 = vmul.f32 %v1617, %v1621
          %v1623 = vmul.f32 %v1619, %v1621
          %v1624 = vadd.f32 %v1614, %v1622
          %v1625 = vadd.f32 %v1615, %v1623
          %v1626 = vrot.slane %v1342, 1
          %v1627 = vrot.slane %v1343, 1
          %v1628 = vrot.slane %v1344, 1
          %v1629 = vsel %vm632, %v1627, %v1628
          %v1630 = vsel %vm632, %v1626, %v1627
          %1631 = vrot.lane.b32.xlu0 %v1630, 3
          %v1632 = vpop.permute.xlu0 %1631
          %1633 = vrot.lane.b32.xlu0 %v1629, 3
          %v1634 = vpop.permute.xlu0 %1633
          %s1635 = sld [smem:[#allocation10 + $0x1c]]
          %v1636 = vstv %s1635
          %v1637 = vmul.f32 %v1632, %v1636
          %v1638 = vmul.f32 %v1634, %v1636
          %v1639 = vadd.f32 %v1624, %v1637
          %v1640 = vadd.f32 %v1625, %v1638
          %1641 = vrot.lane.b32.xlu0 %v1630, 2
          %v1642 = vpop.permute.xlu0 %1641
          %1643 = vrot.lane.b32.xlu0 %v1629, 2
          %v1644 = vpop.permute.xlu0 %1643
          %s1645 = sld [smem:[#allocation10 + $0x1d]]
          %v1646 = vstv %s1645
          %v1647 = vmul.f32 %v1642, %v1646
          %v1648 = vmul.f32 %v1644, %v1646
          %v1649 = vadd.f32 %v1639, %v1647
          %v1650 = vadd.f32 %v1640, %v1648
          %1651 = vrot.lane.b32.xlu0 %v1630, 1
          %v1652 = vpop.permute.xlu0 %1651
          %1653 = vrot.lane.b32.xlu0 %v1629, 1
          %v1654 = vpop.permute.xlu0 %1653
          %s1655 = sld [smem:[#allocation10 + $0x1e]]
          %v1656 = vstv %s1655
          %v1657 = vmul.f32 %v1652, %v1656
          %v1658 = vmul.f32 %v1654, %v1656
          %v1659 = vadd.f32 %v1649, %v1657
          %v1660 = vadd.f32 %v1650, %v1658
          %s1661 = sld [smem:[#allocation10 + $0x1f]]
          %v1662 = vstv %s1661
          %v1663 = vmul.f32 %v1630, %v1662
          %v1664 = vmul.f32 %v1629, %v1662
          %v1665 = vadd.f32 %v1659, %v1663
          %v1666 = vadd.f32 %v1660, %v1664
          %1667 = vrot.lane.b32.xlu0 %v1630, 127
          %v1668 = vpop.permute.xlu0 %1667
          %1669 = vrot.lane.b32.xlu0 %v1629, 127
          %v1670 = vpop.permute.xlu0 %1669
          %s1671 = sld [smem:[#allocation10 + $0x20]]
          %v1672 = vstv %s1671
          %v1673 = vmul.f32 %v1668, %v1672
          %v1674 = vmul.f32 %v1670, %v1672
          %v1675 = vadd.f32 %v1665, %v1673
          %v1676 = vadd.f32 %v1666, %v1674
          %1677 = vrot.lane.b32.xlu0 %v1630, 126
          %v1678 = vpop.permute.xlu0 %1677
          %1679 = vrot.lane.b32.xlu0 %v1629, 126
          %v1680 = vpop.permute.xlu0 %1679
          %s1681 = sld [smem:[#allocation10 + $0x21]]
          %v1682 = vstv %s1681
          %v1683 = vmul.f32 %v1678, %v1682
          %v1684 = vmul.f32 %v1680, %v1682
          %v1685 = vadd.f32 %v1675, %v1683
          %v1686 = vadd.f32 %v1676, %v1684
          %1687 = vrot.lane.b32.xlu0 %v1630, 125
          %v1688 = vpop.permute.xlu0 %1687
          %1689 = vrot.lane.b32.xlu0 %v1629, 125
          %v1690 = vpop.permute.xlu0 %1689
          %s1691 = sld [smem:[#allocation10 + $0x22]]
          %v1692 = vstv %s1691
          %v1693 = vmul.f32 %v1688, %v1692
          %v1694 = vmul.f32 %v1690, %v1692
          %v1695 = vadd.f32 %v1685, %v1693
          %v1696 = vadd.f32 %v1686, %v1694
          %v1697 = vrot.slane %v1342, 2
          %v1698 = vrot.slane %v1343, 2
          %v1699 = vrot.slane %v1344, 2
          %v1700 = vsel %vm704, %v1698, %v1699
          %v1701 = vsel %vm704, %v1697, %v1698
          %1702 = vrot.lane.b32.xlu0 %v1701, 3
          %v1703 = vpop.permute.xlu0 %1702
          %1704 = vrot.lane.b32.xlu0 %v1700, 3
          %v1705 = vpop.permute.xlu0 %1704
          %s1706 = sld [smem:[#allocation10 + $0x23]]
          %v1707 = vstv %s1706
          %v1708 = vmul.f32 %v1703, %v1707
          %v1709 = vmul.f32 %v1705, %v1707
          %v1710 = vadd.f32 %v1695, %v1708
          %v1711 = vadd.f32 %v1696, %v1709
          %1712 = vrot.lane.b32.xlu0 %v1701, 2
          %v1713 = vpop.permute.xlu0 %1712
          %1714 = vrot.lane.b32.xlu0 %v1700, 2
          %v1715 = vpop.permute.xlu0 %1714
          %s1716 = sld [smem:[#allocation10 + $0x24]]
          %v1717 = vstv %s1716
          %v1718 = vmul.f32 %v1713, %v1717
          %v1719 = vmul.f32 %v1715, %v1717
          %v1720 = vadd.f32 %v1710, %v1718
          %v1721 = vadd.f32 %v1711, %v1719
          %1722 = vrot.lane.b32.xlu0 %v1701, 1
          %v1723 = vpop.permute.xlu0 %1722
          %1724 = vrot.lane.b32.xlu0 %v1700, 1
          %v1725 = vpop.permute.xlu0 %1724
          %s1726 = sld [smem:[#allocation10 + $0x25]]
          %v1727 = vstv %s1726
          %v1728 = vmul.f32 %v1723, %v1727
          %v1729 = vmul.f32 %v1725, %v1727
          %v1730 = vadd.f32 %v1720, %v1728
          %v1731 = vadd.f32 %v1721, %v1729
          %s1732 = sld [smem:[#allocation10 + $0x26]]
          %v1733 = vstv %s1732
          %v1734 = vmul.f32 %v1701, %v1733
          %v1735 = vmul.f32 %v1700, %v1733
          %v1736 = vadd.f32 %v1730, %v1734
          %v1737 = vadd.f32 %v1731, %v1735
          %1738 = vrot.lane.b32.xlu0 %v1701, 127
          %v1739 = vpop.permute.xlu0 %1738
          %1740 = vrot.lane.b32.xlu0 %v1700, 127
          %v1741 = vpop.permute.xlu0 %1740
          %s1742 = sld [smem:[#allocation10 + $0x27]]
          %v1743 = vstv %s1742
          %v1744 = vmul.f32 %v1739, %v1743
          %v1745 = vmul.f32 %v1741, %v1743
          %v1746 = vadd.f32 %v1736, %v1744
          %v1747 = vadd.f32 %v1737, %v1745
          %1748 = vrot.lane.b32.xlu0 %v1701, 126
          %v1749 = vpop.permute.xlu0 %1748
          %1750 = vrot.lane.b32.xlu0 %v1700, 126
          %v1751 = vpop.permute.xlu0 %1750
          %s1752 = sld [smem:[#allocation10 + $0x28]]
          %v1753 = vstv %s1752
          %v1754 = vmul.f32 %v1749, %v1753
          %v1755 = vmul.f32 %v1751, %v1753
          %v1756 = vadd.f32 %v1746, %v1754
          %v1757 = vadd.f32 %v1747, %v1755
          %1758 = vrot.lane.b32.xlu0 %v1701, 125
          %v1759 = vpop.permute.xlu0 %1758
          %1760 = vrot.lane.b32.xlu0 %v1700, 125
          %v1761 = vpop.permute.xlu0 %1760
          %s1762 = sld [smem:[#allocation10 + $0x29]]
          %v1763 = vstv %s1762
          %v1764 = vmul.f32 %v1759, %v1763
          %v1765 = vmul.f32 %v1761, %v1763
          %v1766 = vadd.f32 %v1756, %v1764
          %v1767 = vadd.f32 %v1757, %v1765
          %v1768 = vrot.slane %v1342, 3
          %v1769 = vrot.slane %v1343, 3
          %v1770 = vrot.slane %v1344, 3
          %v1771 = vsel %vm776, %v1769, %v1770
          %v1772 = vsel %vm776, %v1768, %v1769
          %1773 = vrot.lane.b32.xlu0 %v1772, 3
          %v1774 = vpop.permute.xlu0 %1773
          %1775 = vrot.lane.b32.xlu0 %v1771, 3
          %v1776 = vpop.permute.xlu0 %1775
          %s1777 = sld [smem:[#allocation10 + $0x2a]]
          %v1778 = vstv %s1777
          %v1779 = vmul.f32 %v1774, %v1778
          %v1780 = vmul.f32 %v1776, %v1778
          %v1781 = vadd.f32 %v1766, %v1779
          %v1782 = vadd.f32 %v1767, %v1780
          %1783 = vrot.lane.b32.xlu0 %v1772, 2
          %v1784 = vpop.permute.xlu0 %1783
          %1785 = vrot.lane.b32.xlu0 %v1771, 2
          %v1786 = vpop.permute.xlu0 %1785
          %s1787 = sld [smem:[#allocation10 + $0x2b]]
          %v1788 = vstv %s1787
          %v1789 = vmul.f32 %v1784, %v1788
          %v1790 = vmul.f32 %v1786, %v1788
          %v1791 = vadd.f32 %v1781, %v1789
          %v1792 = vadd.f32 %v1782, %v1790
          %1793 = vrot.lane.b32.xlu0 %v1772, 1
          %v1794 = vpop.permute.xlu0 %1793
          %1795 = vrot.lane.b32.xlu0 %v1771, 1
          %v1796 = vpop.permute.xlu0 %1795
          %s1797 = sld [smem:[#allocation10 + $0x2c]]
          %v1798 = vstv %s1797
          %v1799 = vmul.f32 %v1794, %v1798
          %v1800 = vmul.f32 %v1796, %v1798
          %v1801 = vadd.f32 %v1791, %v1799
          %v1802 = vadd.f32 %v1792, %v1800
          %s1803 = sld [smem:[#allocation10 + $0x2d]]
          %v1804 = vstv %s1803
          %v1805 = vmul.f32 %v1772, %v1804
          %v1806 = vmul.f32 %v1771, %v1804
          %v1807 = vadd.f32 %v1801, %v1805
          %v1808 = vadd.f32 %v1802, %v1806
          %1809 = vrot.lane.b32.xlu0 %v1772, 127
          %v1810 = vpop.permute.xlu0 %1809
          %1811 = vrot.lane.b32.xlu0 %v1771, 127
          %v1812 = vpop.permute.xlu0 %1811
          %s1813 = sld [smem:[#allocation10 + $0x2e]]
          %v1814 = vstv %s1813
          %v1815 = vmul.f32 %v1810, %v1814
          %v1816 = vmul.f32 %v1812, %v1814
          %v1817 = vadd.f32 %v1807, %v1815
          %v1818 = vadd.f32 %v1808, %v1816
          %1819 = vrot.lane.b32.xlu0 %v1772, 126
          %v1820 = vpop.permute.xlu0 %1819
          %1821 = vrot.lane.b32.xlu0 %v1771, 126
          %v1822 = vpop.permute.xlu0 %1821
          %s1823 = sld [smem:[#allocation10 + $0x2f]]
          %v1824 = vstv %s1823
          %v1825 = vmul.f32 %v1820, %v1824
          %v1826 = vmul.f32 %v1822, %v1824
          %v1827 = vadd.f32 %v1817, %v1825
          %v1828 = vadd.f32 %v1818, %v1826
          %1829 = vrot.lane.b32.xlu0 %v1772, 125
          %v1830 = vpop.permute.xlu0 %1829
          %1831 = vrot.lane.b32.xlu0 %v1771, 125
          %v1832 = vpop.permute.xlu0 %1831
          %s1833 = sld [smem:[#allocation10 + $0x30]]
          %v1834 = vstv %s1833
          %v1835 = vmul.f32 %v1830, %v1834
          %v1836 = vmul.f32 %v1832, %v1834
          %v1837 = vadd.f32 %v1827, %v1835
          %v1838 = vadd.f32 %v1828, %v1836
          %v1839 = vxor.u32 %v1837, 2147483648
          %v1840 = vxor.u32 %v1838, 2147483648
          %v1841 = vmul.f32 %v1839, 1.442695
          %v1842 = vpow.pop %v1841
          %v1843 = vmul.f32 %v1840, 1.442695
          %v1844 = vpow.pop %v1843
          %v1845 = vadd.f32 %v1842, 1.0
          %v1846 = vadd.f32 %v1844, 1.0
          %v1847 = vrcp.pop %v1845
          %v1848 = vmul.f32 %v1845, %v1847
          %v1849 = vsub.f32 1.0, %v1848
          %v1850 = vmul.f32 %v1847, %v1849
          %v1851 = vadd.f32 %v1847, %v1850
          %vm1852 = vweird.f32 %v1845
          %vm1853 = vweird.f32 %v1847
          %vm1854 = vmor %vm1852, %vm1853
          %v1855 = vsel %vm1854, %v1847, %v1851
          %v1856 = vand.u32 2147483647, %v1845
          %vm1857 = vcmp.eq.f32.partialorder %v1856, 8.507059e+37
          %v1858 = vand.u32 %v1845, 2147483648
          %v1859 = vor.u32 1.1754944e-38, %v1858
          %v1860 = vsel %vm1857, %v1859, %v1855
          %v1861 = vmul.f32 1.0, %v1860
          %v1862 = vrcp.pop %v1846
          %v1863 = vmul.f32 %v1846, %v1862
          %v1864 = vsub.f32 1.0, %v1863
          %v1865 = vmul.f32 %v1862, %v1864
          %v1866 = vadd.f32 %v1862, %v1865
          %vm1867 = vweird.f32 %v1846
          %vm1868 = vweird.f32 %v1862
          %vm1869 = vmor %vm1867, %vm1868
          %v1870 = vsel %vm1869, %v1862, %v1866
          %v1871 = vand.u32 2147483647, %v1846
          %vm1872 = vcmp.eq.f32.partialorder %v1871, 8.507059e+37
          %v1873 = vand.u32 %v1846, 2147483648
          %v1874 = vor.u32 1.1754944e-38, %v1873
          %v1875 = vsel %vm1872, %v1874, %v1870
          %v1876 = vmul.f32 1.0, %v1875
          %1877 = vst.msk [vmem:[%s274] sm:$0xff] %vm1339, %v1861
          %1878 = vst.msk [vmem:[%s274 + $0x8] sm:$0xff] %vm1339, %v1876
        $region71: #{tpu_custom_call.1} parent=35 // pred_fallthru
          _
        %s1879 = sand.u32 %s135, 1
        %s1880 = scalar_lea.sflag [#allocation5], %s1879
        %s1881 = sand.u32 %s135, 1
        %s1882 = smul.addr %s1881, 16
        %s1883 = scalar_lea.vmem [#allocation12], %s1882
        // Predicated region
        $region72: #{tpu_custom_call.1} parent=35 // pred_check
          %p1884 = pneg %p145
        $region73: #{tpu_custom_call.1} parent=35 // pred_check_branch
          %1886 = sbr.rel (%p1884) target = $region75
        $region74: #{tpu_custom_call.1} parent=35 // pred_region
          %1888 = vsyncadd %s1880, 0
          %s1889 = smul.addr %s28, 2
          %s1890 = smul.addr %s1889, 8
          %s1891 = scalar_lea.hbm %s4, %s1890
          %s1892 = sshll.u32 %s1883, 4
          %s1893 = int_to_ptr.vmem [resolvable:$true] %s1892
          %s1894 = sshll.u32 %s1891, 4
          %s1895 = int_to_ptr.hbm [resolvable:$true] %s1894
          %1900 = dma.vmem_to_hbm [thread:$0]  %s1893, 256, %s1895, %s1880, 128, 128, 8
        $region75: #{tpu_custom_call.1} parent=35 // pred_fallthru
          _
      $region36: #{tpu_custom_call.1} parent=5 // pred_fallthru
        _
      %p1901 = scmp.le.s32.totalorder 2, %s19
      // Predicated region
      $region76: #{tpu_custom_call.1} parent=5 // pred_check
        %p1902 = pneg %p1901
      $region77: #{tpu_custom_call.1} parent=5 // pred_check_branch
        %1904 = sbr.rel (%p1902) target = $region79
      $region78: #{tpu_custom_call.1} parent=5 // pred_region
        %s1905 = ssub.s32 %s19, 2
        // Predicated region
        $region80: #{tpu_custom_call.1} parent=78 // pred_check
          %p1906 = pneg %p151
        $region81: #{tpu_custom_call.1} parent=78 // pred_check_branch
          %1908 = sbr.rel (%p1906) target = $region83
        $region82: #{tpu_custom_call.1} parent=78 // pred_region
          %s1909 = sand.u32 %s136, 1
          %s1910 = scalar_lea.sflag [#allocation5], %s1909
          %s1911 = sand.u32 %s136, 1
          %s1912 = smul.addr %s1911, 16
          %s1913 = scalar_lea.vmem [#allocation12], %s1912
          %1915 = dma.done %s1910, 256
        $region83: #{tpu_custom_call.1} parent=78 // pred_fallthru
          _
      $region79: #{tpu_custom_call.1} parent=5 // pred_fallthru
        _
    $region6: #{tpu_custom_call.1} parent=1 // loop_footer
      %s23 = sadd.s32 1, %s19
    $region7: #{tpu_custom_call.1} parent=1 // loop_footer_branch
      %18 = sbr.rel target = $region3
    $region8: #{tpu_custom_call.1} parent=1 // loop_exit
      _
    %1916 = vsyncpa [#allocation4], 1
    %s1917 = scalar_lea.sflag [#allocation4], 1
    %1918 = vsyncpa %s1917, 1
    %1919 = vsyncpa [#allocation5], 1
    %s1920 = scalar_lea.sflag [#allocation5], 1
    %1921 = vsyncpa %s1920, 1
    %1922 = vsyncpa [#allocation6], 1
    %s1923 = scalar_lea.sflag [#allocation6], 1
    %1924 = vsyncpa %s1923, 1
    %1925 = vsyncpa [#allocation7], 1
    %s1926 = scalar_lea.sflag [#allocation7], 1
    %1927 = vsyncpa %s1926, 1
    %1928 = vsyncpa [#allocation11], 1

</llo_original>
